<compile_context>
chip_gen: v5e
topology: v5e:2x2
jax: 0.10.0
libtpu: 0.0.40
codegen_flags: <defaults>
</compile_context>

<pallas_src>
import jax
import jax.numpy as jnp
from jax.experimental import pallas as pl
from jax.experimental.pallas import tpu as pltpu


# ---------------------------------------------------------------------------
# Kernel: one grid step = one batch element, everything channel-first.
# ---------------------------------------------------------------------------
def _fno_kernel(
    x_ref,                                        # (1, Cin_p, L)   bf16
    ff_ref, gi_ref,                               # (L, 2M), (2M, L)  bf16  fused [cos | -sin]
    w_l1_ref, b_l1_ref, w_l2_ref, b_l2_ref,       # lifting MLP (channel-first)
    wr_ref, wi_ref,                               # (nl, Hin, Hout, M)  f32  spectral weights
    w_skip_ref, b_skip_ref,                       # (nl, H, H) bf16, (nl, H, 1) f32
    w_p1_ref, b_p1_ref, w_p2_ref, b_p2_ref,       # projection MLP (channel-first, Cout padded)
    o_ref,                                        # (1, Cpad, L)   f32
):
    f32, bf16 = jnp.float32, jnp.bfloat16
    num_layers = w_skip_ref.shape[0]
    M = wr_ref.shape[3]

    # ---- lifting ChannelMLP (weights on the left, channels on sublanes, L on lanes) ----
    x = x_ref[0]                                                                    # (Cin_p, L)
    h = jnp.dot(w_l1_ref[...], x, preferred_element_type=f32) + b_l1_ref[...]       # (2H, L)
    h = jax.nn.gelu(h)
    h = jnp.dot(w_l2_ref[...], h.astype(bf16), preferred_element_type=f32) + b_l2_ref[...]  # (H, L)

    ff = ff_ref[...]                                                                # (L, 2M)
    gi = gi_ref[...]                                                                # (2M, L)

    for layer in range(num_layers):                       # static unroll over FNO blocks
        hb = h.astype(bf16)

        # Truncated forward real DFT over the spatial axis: ONE fused [cos | -sin] matmul.
        spec = jnp.dot(hb, ff, preferred_element_type=f32)                          # (H, 2M)
        xr = spec[:, :M]                                                            # Re(rfft)
        xi = spec[:, M:]                                                            # Im(rfft)

        # Per-retained-mode complex channel mixing, exact VPU contraction:
        #   yr[o,k] = sum_i wr[i,o,k]*xr[i,k] - wi[i,o,k]*xi[i,k]   (and yi analogously)
        wr = wr_ref[layer]                                                          # (Hin, Hout, M)
        wi = wi_ref[layer]
        xr_b = xr[:, None, :]                                                       # (Hin, 1, M)
        xi_b = xi[:, None, :]
        yr = jnp.sum(wr * xr_b - wi * xi_b, axis=0)                                 # (Hout, M)
        yi = jnp.sum(wi * xr_b + wr * xi_b, axis=0)                                 # (Hout, M)
        ystk = jnp.concatenate([yr, yi], axis=1).astype(bf16)                       # (H, 2M)

        # Truncated inverse real DFT: ONE fused matmul back to the spatial axis.
        y_spec = jnp.dot(ystk, gi, preferred_element_type=f32)                      # (H, L)

        # Pointwise (1x1 conv) skip path.
        y_skip = (jnp.dot(w_skip_ref[layer], hb, preferred_element_type=f32)
                  + b_skip_ref[layer])                                              # (H, L)

        h = y_spec + y_skip
        if layer < num_layers - 1:
            h = jax.nn.gelu(h)

    # ---- projection ChannelMLP: (H, L) -> (Cpad, L), lane-dense store over L ----
    p = jnp.dot(w_p1_ref[...], h.astype(bf16), preferred_element_type=f32) + b_p1_ref[...]
    p = jax.nn.gelu(p)
    out = jnp.dot(w_p2_ref[...], p.astype(bf16), preferred_element_type=f32) + b_p2_ref[...]
    o_ref[0] = out.astype(o_ref.dtype)


# ---------------------------------------------------------------------------
# Wrapper-side constant builders (tiny, plain XLA).
# ---------------------------------------------------------------------------
def _build_dft_operators(L, M):
    """Per-batch truncated real DFT / inverse DFT (torch.fft.rfft/irfft convention),
    cos/sin fused into single operators: ff (L, 2M) = [cos | -sin], gi (2M, L) = [icos ; isin]."""
    l = jnp.arange(L, dtype=jnp.float32)[:, None]
    k = jnp.arange(M, dtype=jnp.float32)[None, :]
    ang = 2.0 * jnp.pi * l * k / float(L)                                 # (L, M)
    ff = jnp.concatenate([jnp.cos(ang), -jnp.sin(ang)], axis=1)           # (L, 2M)

    kk = jnp.arange(M)
    coef = jnp.where(kk == 0, 1.0, 2.0)
    if L % 2 == 0:
        coef = jnp.where(kk == L // 2, 1.0, coef)                         # Nyquist (if retained)
    ang_t = ang.T                                                         # (M, L)
    gi = jnp.concatenate([(coef[:, None] / float(L)) * jnp.cos(ang_t),
                          -(coef[:, None] / float(L)) * jnp.sin(ang_t)], axis=0)   # (2M, L)
    return ff, gi


def _padded_nbytes(shape, dtype):
    """(8,128)-tile-padded VMEM footprint of an array of `shape`/`dtype`."""
    s = (1, 1) + tuple(int(d) for d in shape)
    lead = 1
    for d in s[:-2]:
        lead *= d
    sub = -(-s[-2] // 8) * 8
    lane = -(-s[-1] // 128) * 128
    return lead * sub * lane * jnp.dtype(dtype).itemsize


def fno_projected_forward(x, params):
    """x: (B, L, C_in) -> (B, L, C_out). Matches FNOProjected.forward (the two boundary
    transposes of the PyTorch wrapper are done here, outside the kernel)."""
    B, L, Cin = x.shape
    num_layers, M, H, _ = params["wr"].shape
    Cout = params["w_p2"].shape[1]
    assert M <= L // 2 + 1, "modes must be <= L//2 + 1"

    bf16, f32 = jnp.bfloat16, jnp.float32
    Cin_p = max(8, -(-Cin // 8) * 8)          # pad tiny channel dims to a full sublane tile
    Cpad = max(8, -(-Cout // 8) * 8)

    ff, gi = _build_dft_operators(L, M)
    ff = ff.astype(bf16)
    gi = gi.astype(bf16)

    # Channel-first operands.  MXU operands -> bf16 (f32 accumulation in-kernel);
    # biases and the VPU spectral-mixing weights stay f32.
    x_cf = jnp.swapaxes(x, 1, 2).astype(bf16)                                      # (B, Cin, L)
    x_cf = jnp.pad(x_cf, ((0, 0), (0, Cin_p - Cin), (0, 0)))                       # (B, Cin_p, L)
    w_l1 = jnp.zeros((2 * H, Cin_p), f32).at[:, :Cin].set(params["w_l1"].T).astype(bf16)
    b_l1 = params["b_l1"].T.astype(f32)                                            # (2H, 1)
    w_l2 = params["w_l2"].T.astype(bf16)                                           # (H, 2H)
    b_l2 = params["b_l2"].T.astype(f32)                                            # (H, 1)
    wr_t = jnp.transpose(params["wr"], (0, 2, 3, 1)).astype(f32)                   # (nl, Hin, Hout, M)
    wi_t = jnp.transpose(params["wi"], (0, 2, 3, 1)).astype(f32)
    w_skip = jnp.transpose(params["w_skip"], (0, 2, 1)).astype(bf16)               # (nl, Hout, Hin)
    b_skip = jnp.transpose(params["b_skip"], (0, 2, 1)).astype(f32)                # (nl, H, 1)
    w_p1 = params["w_p1"].T.astype(bf16)                                           # (2H, H)
    b_p1 = params["b_p1"].T.astype(f32)                                            # (2H, 1)
    w_p2 = jnp.zeros((Cpad, 2 * H), f32).at[:Cout].set(params["w_p2"].T).astype(bf16)
    b_p2 = jnp.zeros((Cpad, 1), f32).at[:Cout, 0].set(params["b_p2"][0])

    # Computed (not hard-coded) VMEM limit from the padded resident footprint.
    resident_ops = [
        ((1, Cin_p, L), bf16), ((L, 2 * M), bf16), ((2 * M, L), bf16),
        (w_l1.shape, bf16), (b_l1.shape, f32), (w_l2.shape, bf16), (b_l2.shape, f32),
        (wr_t.shape, f32), (wi_t.shape, f32), (w_skip.shape, bf16), (b_skip.shape, f32),
        (w_p1.shape, bf16), (b_p1.shape, f32), (w_p2.shape, bf16), (b_p2.shape, f32),
        ((1, Cpad, L), f32),
    ]
    resident = sum(_padded_nbytes(s, d) for s, d in resident_ops)
    vmem_limit = int(min(48 * 2 ** 20, max(16 * 2 ** 20, 4 * resident)))

    res2 = lambda b: (0, 0)
    res3 = lambda b: (0, 0, 0)
    res4 = lambda b: (0, 0, 0, 0)

    y_cf = pl.pallas_call(
        _fno_kernel,
        out_shape=jax.ShapeDtypeStruct((B, Cpad, L), f32),
        grid=(B,),
        in_specs=[
            pl.BlockSpec((1, Cin_p, L), lambda b: (b, 0, 0)),       # x  (batch-tiled, pipelined)
            pl.BlockSpec((L, 2 * M), res2),                         # ff (resident)
            pl.BlockSpec((2 * M, L), res2),                         # gi (resident)
            pl.BlockSpec((2 * H, Cin_p), res2),                     # w_l1
            pl.BlockSpec((2 * H, 1), res2),                         # b_l1
            pl.BlockSpec((H, 2 * H), res2),                         # w_l2
            pl.BlockSpec((H, 1), res2),                             # b_l2
            pl.BlockSpec((num_layers, H, H, M), res4),              # wr_t
            pl.BlockSpec((num_layers, H, H, M), res4),              # wi_t
            pl.BlockSpec((num_layers, H, H), res3),                 # w_skip
            pl.BlockSpec((num_layers, H, 1), res3),                 # b_skip
            pl.BlockSpec((2 * H, H), res2),                         # w_p1
            pl.BlockSpec((2 * H, 1), res2),                         # b_p1
            pl.BlockSpec((Cpad, 2 * H), res2),                      # w_p2
            pl.BlockSpec((Cpad, 1), res2),                          # b_p2
        ],
        out_specs=pl.BlockSpec((1, Cpad, L), lambda b: (b, 0, 0)),
        compiler_params=pltpu.CompilerParams(
            dimension_semantics=("parallel",),
            vmem_limit_bytes=vmem_limit,
        ),
    )(x_cf, ff, gi, w_l1, b_l1, w_l2, b_l2, wr_t, wi_t, w_skip, b_skip,
      w_p1, b_p1, w_p2, b_p2)

    # Back to the channels-last layout of FNOProjected.forward (drop the lane padding rows).
    return jnp.swapaxes(y_cf[:, :Cout, :], 1, 2)


# ---------------------------------------------------------------------------
# Deterministic parameter init (shapes implied by FNOProjected's constructor).
# ---------------------------------------------------------------------------
def init_params(key, hidden_size, num_layers, modes, in_ch, out_ch):
    H = hidden_size
    lift = 2 * H
    proj = 2 * H
    ks = list(jax.random.split(key, 8 + 4 * num_layers))
    idx = [0]

    def nk():
        k = ks[idx[0]]
        idx[0] += 1
        return k

    def uni(k, shape, fan_in):
        s = 1.0 / float(fan_in) ** 0.5
        return jax.random.uniform(k, shape, jnp.float32, -s, s)

    params = dict(
        w_l1=uni(nk(), (in_ch, lift), in_ch), b_l1=uni(nk(), (1, lift), in_ch),
        w_l2=uni(nk(), (lift, H), lift), b_l2=uni(nk(), (1, H), lift),
    )
    spec_scale = 1.0 / float(H)
    wr, wi, ws, bs = [], [], [], []
    for _ in range(num_layers):
        wr.append(spec_scale * jax.random.normal(nk(), (modes, H, H), jnp.float32))
        wi.append(spec_scale * jax.random.normal(nk(), (modes, H, H), jnp.float32))
        ws.append(uni(nk(), (H, H), H))
        bs.append(uni(nk(), (1, H), H))
    params.update(
        wr=jnp.stack(wr), wi=jnp.stack(wi),
        w_skip=jnp.stack(ws), b_skip=jnp.stack(bs),
        w_p1=uni(nk(), (H, proj), H), b_p1=uni(nk(), (1, proj), H),
        w_p2=uni(nk(), (proj, out_ch), proj), b_p2=uni(nk(), (1, out_ch), proj),
    )
    return params


# ---------------------------------------------------------------------------
# Pure-JAX / FFT reference (correctness check for the DFT-as-matmul kernel).
# ---------------------------------------------------------------------------
def fno_projected_reference(x, params):
    x = x.astype(jnp.float32)
    B, L, _ = x.shape
    num_layers, M, H, _ = params["wr"].shape
    hp = jax.lax.Precision.HIGHEST

    h = jax.nn.gelu(jnp.einsum('blc,cd->bld', x, params["w_l1"], precision=hp) + params["b_l1"])
    h = jnp.einsum('blc,cd->bld', h, params["w_l2"], precision=hp) + params["b_l2"]
    for layer in range(num_layers):
        w_c = (params["wr"][layer] + 1j * params["wi"][layer]).astype(jnp.complex64)
        hf = jnp.fft.rfft(h, axis=1)                                   # (B, L//2+1, H)
        yf_m = jnp.einsum('bki,kio->bko', hf[:, :M, :], w_c, precision=hp)
        yf = jnp.zeros((B, L // 2 + 1, H), jnp.complex64).at[:, :M, :].set(yf_m)
        y_spec = jnp.fft.irfft(yf, n=L, axis=1)
        y_skip = jnp.einsum('bli,io->blo', h, params["w_skip"][layer], precision=hp) \
            + params["b_skip"][layer]
        h = y_spec + y_skip
        if layer < num_layers - 1:
            h = jax.nn.gelu(h)
    p = jax.nn.gelu(jnp.einsum('bli,io->blo', h, params["w_p1"], precision=hp) + params["b_p1"])
    return jnp.einsum('bli,io->blo', p, params["w_p2"], precision=hp) + params["b_p2"]


if __name__ == "__main__":
    # Small shapes implied by FNOProjected: batch=2, seq/spatial=16, input_channel=4,
    # hidden_size=32, num_layers=2, modes=8, output_channel=4.
    batch, length = 2, 16
    in_ch, out_ch = 4, 4
    hidden, n_layers, modes = 32, 2, 8

    key = jax.random.PRNGKey(0)
    kx, kp = jax.random.split(key)
    x = jax.random.normal(kx, (batch, length, in_ch), jnp.float32)
    params = init_params(kp, hidden, n_layers, modes, in_ch, out_ch)

    # TODO(synk): neuralop FNO1d extras (positional grid embedding, domain padding,
    # per-block ChannelMLP variants) are not reproduced; canonical FNO1d path only.
    fwd = jax.jit(fno_projected_forward)
    y = jax.block_until_ready(fwd(x, params))

    y_ref = jax.block_until_ready(fno_projected_reference(x, params))
    assert y.shape == (batch, length, out_ch)
    max_err = float(jnp.max(jnp.abs(y - y_ref)))
    # Tolerance accounts for bf16 MXU operands (f32 accumulation) vs the f32 HIGHEST-precision
    # FFT reference.
    assert jnp.allclose(y, y_ref, rtol=3e-2, atol=3e-2), (
        "mismatch vs FFT reference, max_abs_err=%g" % max_err)
    print("KERNEL_OK")
</pallas_src>

<mosaic_0001>
module attributes {stable_mosaic.version = 11 : i64} {
  func.func @_fno_kernel(%arg0: i32, %arg1: memref<1x8x16xbf16, #tpu.memory_space<vmem>>, %arg2: memref<16x16xbf16, #tpu.memory_space<vmem>>, %arg3: memref<16x16xbf16, #tpu.memory_space<vmem>>, %arg4: memref<64x8xbf16, #tpu.memory_space<vmem>>, %arg5: memref<64x1xf32, #tpu.memory_space<vmem>>, %arg6: memref<32x64xbf16, #tpu.memory_space<vmem>>, %arg7: memref<32x1xf32, #tpu.memory_space<vmem>>, %arg8: memref<2x32x32x8xf32, #tpu.memory_space<vmem>>, %arg9: memref<2x32x32x8xf32, #tpu.memory_space<vmem>>, %arg10: memref<2x32x32xbf16, #tpu.memory_space<vmem>>, %arg11: memref<2x32x1xf32, #tpu.memory_space<vmem>>, %arg12: memref<64x32xbf16, #tpu.memory_space<vmem>>, %arg13: memref<64x1xf32, #tpu.memory_space<vmem>>, %arg14: memref<8x64xbf16, #tpu.memory_space<vmem>>, %arg15: memref<8x1xf32, #tpu.memory_space<vmem>>, %arg16: memref<1x8x16xf32, #tpu.memory_space<vmem>>) attributes {dimension_semantics = [#tpu.dimension_semantics<parallel>], iteration_bounds = array<i64: 2>, scalar_prefetch = 0 : i64, scratch_operands = 0 : i64, tpu.core_type = #tpu.core_type<tc>, window_params = [{transform_indices = @transform_0, window_bounds = array<i64: 1, 8, 16>}, {pipeline_mode = #tpu.pipeline_mode<synchronous>, transform_indices = @transform_1, window_bounds = array<i64: 16, 16>}, {pipeline_mode = #tpu.pipeline_mode<synchronous>, transform_indices = @transform_2, window_bounds = array<i64: 16, 16>}, {pipeline_mode = #tpu.pipeline_mode<synchronous>, transform_indices = @transform_3, window_bounds = array<i64: 64, 8>}, {pipeline_mode = #tpu.pipeline_mode<synchronous>, transform_indices = @transform_4, window_bounds = array<i64: 64, 1>}, {pipeline_mode = #tpu.pipeline_mode<synchronous>, transform_indices = @transform_5, window_bounds = array<i64: 32, 64>}, {pipeline_mode = #tpu.pipeline_mode<synchronous>, transform_indices = @transform_6, window_bounds = array<i64: 32, 1>}, {pipeline_mode = #tpu.pipeline_mode<synchronous>, transform_indices = @transform_7, window_bounds = array<i64: 2, 32, 32, 8>}, {pipeline_mode = #tpu.pipeline_mode<synchronous>, transform_indices = @transform_8, window_bounds = array<i64: 2, 32, 32, 8>}, {pipeline_mode = #tpu.pipeline_mode<synchronous>, transform_indices = @transform_9, window_bounds = array<i64: 2, 32, 32>}, {pipeline_mode = #tpu.pipeline_mode<synchronous>, transform_indices = @transform_10, window_bounds = array<i64: 2, 32, 1>}, {pipeline_mode = #tpu.pipeline_mode<synchronous>, transform_indices = @transform_11, window_bounds = array<i64: 64, 32>}, {pipeline_mode = #tpu.pipeline_mode<synchronous>, transform_indices = @transform_12, window_bounds = array<i64: 64, 1>}, {pipeline_mode = #tpu.pipeline_mode<synchronous>, transform_indices = @transform_13, window_bounds = array<i64: 8, 64>}, {pipeline_mode = #tpu.pipeline_mode<synchronous>, transform_indices = @transform_14, window_bounds = array<i64: 8, 1>}, {transform_indices = @transform_15, window_bounds = array<i64: 1, 8, 16>}]} {
    %c0 = arith.constant 0 : index
    %c0_0 = arith.constant 0 : index
    %c0_1 = arith.constant 0 : index
    %0 = vector.load %arg1[%c0, %c0_0, %c0_1] : memref<1x8x16xbf16, #tpu.memory_space<vmem>>, vector<1x8x16xbf16>
    %1 = vector.shape_cast %0 : vector<1x8x16xbf16> to vector<8x16xbf16>
    %c0_2 = arith.constant 0 : index
    %c0_3 = arith.constant 0 : index
    %2 = vector.load %arg4[%c0_2, %c0_3] : memref<64x8xbf16, #tpu.memory_space<vmem>>, vector<64x8xbf16>
    %cst = arith.constant dense<0.000000e+00> : vector<64x16xf32>
    %3 = tpu.matmul %2, %1, %cst {dimension_numbers = #tpu.dot_dimension_numbers<[1], [0], [0], [1], [0, 0, 1, 1], [], []>} : vector<64x8xbf16>, vector<8x16xbf16>, vector<64x16xf32> -> vector<64x16xf32>
    %c0_4 = arith.constant 0 : index
    %c0_5 = arith.constant 0 : index
    %4 = vector.load %arg5[%c0_4, %c0_5] : memref<64x1xf32, #tpu.memory_space<vmem>>, vector<64x1xf32>
    %5 = vector.broadcast %4 : vector<64x1xf32> to vector<64x16xf32>
    %6 = arith.addf %3, %5 : vector<64x16xf32>
    %7 = arith.mulf %6, %6 : vector<64x16xf32>
    %8 = arith.mulf %6, %7 : vector<64x16xf32>
    %cst_6 = arith.constant 4.471500e-02 : f32
    %9 = vector.broadcast %cst_6 : f32 to vector<64x16xf32>
    %10 = arith.mulf %9, %8 : vector<64x16xf32>
    %11 = arith.addf %6, %10 : vector<64x16xf32>
    %cst_7 = arith.constant 0.797884583 : f32
    %12 = vector.broadcast %cst_7 : f32 to vector<64x16xf32>
    %13 = arith.mulf %12, %11 : vector<64x16xf32>
    %14 = math.tanh %13 : vector<64x16xf32>
    %cst_8 = arith.constant 1.000000e+00 : f32
    %15 = vector.broadcast %cst_8 : f32 to vector<64x16xf32>
    %16 = arith.addf %15, %14 : vector<64x16xf32>
    %cst_9 = arith.constant 5.000000e-01 : f32
    %17 = vector.broadcast %cst_9 : f32 to vector<64x16xf32>
    %18 = arith.mulf %17, %16 : vector<64x16xf32>
    %19 = arith.mulf %6, %18 : vector<64x16xf32>
    %c0_10 = arith.constant 0 : index
    %c0_11 = arith.constant 0 : index
    %20 = vector.load %arg6[%c0_10, %c0_11] : memref<32x64xbf16, #tpu.memory_space<vmem>>, vector<32x64xbf16>
    %21 = arith.truncf %19 : vector<64x16xf32> to vector<64x16xbf16>
    %cst_12 = arith.constant dense<0.000000e+00> : vector<32x16xf32>
    %22 = tpu.matmul %20, %21, %cst_12 {dimension_numbers = #tpu.dot_dimension_numbers<[1], [0], [0], [1], [0, 0, 1, 1], [], []>} : vector<32x64xbf16>, vector<64x16xbf16>, vector<32x16xf32> -> vector<32x16xf32>
    %c0_13 = arith.constant 0 : index
    %c0_14 = arith.constant 0 : index
    %23 = vector.load %arg7[%c0_13, %c0_14] : memref<32x1xf32, #tpu.memory_space<vmem>>, vector<32x1xf32>
    %24 = vector.broadcast %23 : vector<32x1xf32> to vector<32x16xf32>
    %25 = arith.addf %22, %24 : vector<32x16xf32>
    %c0_15 = arith.constant 0 : index
    %c0_16 = arith.constant 0 : index
    %26 = vector.load %arg2[%c0_15, %c0_16] : memref<16x16xbf16, #tpu.memory_space<vmem>>, vector<16x16xbf16>
    %c0_17 = arith.constant 0 : index
    %c0_18 = arith.constant 0 : index
    %27 = vector.load %arg3[%c0_17, %c0_18] : memref<16x16xbf16, #tpu.memory_space<vmem>>, vector<16x16xbf16>
    %28 = arith.truncf %25 : vector<32x16xf32> to vector<32x16xbf16>
    %cst_19 = arith.constant dense<0.000000e+00> : vector<32x16xf32>
    %29 = tpu.matmul %28, %26, %cst_19 {dimension_numbers = #tpu.dot_dimension_numbers<[1], [0], [0], [1], [0, 0, 1, 1], [], []>} : vector<32x16xbf16>, vector<16x16xbf16>, vector<32x16xf32> -> vector<32x16xf32>
    %30 = vector.extract_strided_slice %29 {offsets = [0, 0], sizes = [32, 8], strides = [1, 1]} : vector<32x16xf32> to vector<32x8xf32>
    %31 = vector.extract_strided_slice %29 {offsets = [0, 8], sizes = [32, 8], strides = [1, 1]} : vector<32x16xf32> to vector<32x8xf32>
    %c0_20 = arith.constant 0 : index
    %c0_21 = arith.constant 0 : index
    %c0_22 = arith.constant 0 : index
    %c0_23 = arith.constant 0 : index
    %32 = vector.load %arg8[%c0_20, %c0_21, %c0_22, %c0_23] : memref<2x32x32x8xf32, #tpu.memory_space<vmem>>, vector<1x32x32x8xf32>
    %33 = vector.shape_cast %32 : vector<1x32x32x8xf32> to vector<32x32x8xf32>
    %c0_24 = arith.constant 0 : index
    %c0_25 = arith.constant 0 : index
    %c0_26 = arith.constant 0 : index
    %c0_27 = arith.constant 0 : index
    %34 = vector.load %arg9[%c0_24, %c0_25, %c0_26, %c0_27] : memref<2x32x32x8xf32, #tpu.memory_space<vmem>>, vector<1x32x32x8xf32>
    %35 = vector.shape_cast %34 : vector<1x32x32x8xf32> to vector<32x32x8xf32>
    %36 = vector.shape_cast %30 : vector<32x8xf32> to vector<32x1x8xf32>
    %37 = vector.shape_cast %31 : vector<32x8xf32> to vector<32x1x8xf32>
    %38 = vector.broadcast %36 : vector<32x1x8xf32> to vector<32x32x8xf32>
    %39 = arith.mulf %33, %38 : vector<32x32x8xf32>
    %40 = vector.broadcast %37 : vector<32x1x8xf32> to vector<32x32x8xf32>
    %41 = arith.mulf %35, %40 : vector<32x32x8xf32>
    %42 = arith.subf %39, %41 : vector<32x32x8xf32>
    %cst_28 = arith.constant dense<0.000000e+00> : vector<32x8xf32>
    %43 = vector.multi_reduction <add>, %42, %cst_28 [0] : vector<32x32x8xf32> to vector<32x8xf32>
    %44 = vector.broadcast %36 : vector<32x1x8xf32> to vector<32x32x8xf32>
    %45 = arith.mulf %35, %44 : vector<32x32x8xf32>
    %46 = vector.broadcast %37 : vector<32x1x8xf32> to vector<32x32x8xf32>
    %47 = arith.mulf %33, %46 : vector<32x32x8xf32>
    %48 = arith.addf %45, %47 : vector<32x32x8xf32>
    %cst_29 = arith.constant dense<0.000000e+00> : vector<32x8xf32>
    %49 = vector.multi_reduction <add>, %48, %cst_29 [0] : vector<32x32x8xf32> to vector<32x8xf32>
    %50 = tpu.concatenate %43, %49 in 1 : vector<32x8xf32>, vector<32x8xf32> -> vector<32x16xf32>
    %51 = arith.truncf %50 : vector<32x16xf32> to vector<32x16xbf16>
    %cst_30 = arith.constant dense<0.000000e+00> : vector<32x16xf32>
    %52 = tpu.matmul %51, %27, %cst_30 {dimension_numbers = #tpu.dot_dimension_numbers<[1], [0], [0], [1], [0, 0, 1, 1], [], []>} : vector<32x16xbf16>, vector<16x16xbf16>, vector<32x16xf32> -> vector<32x16xf32>
    %c0_31 = arith.constant 0 : index
    %c0_32 = arith.constant 0 : index
    %c0_33 = arith.constant 0 : index
    %53 = vector.load %arg10[%c0_31, %c0_32, %c0_33] : memref<2x32x32xbf16, #tpu.memory_space<vmem>>, vector<1x32x32xbf16>
    %54 = vector.shape_cast %53 : vector<1x32x32xbf16> to vector<32x32xbf16>
    %cst_34 = arith.constant dense<0.000000e+00> : vector<32x16xf32>
    %55 = tpu.matmul %54, %28, %cst_34 {dimension_numbers = #tpu.dot_dimension_numbers<[1], [0], [0], [1], [0, 0, 1, 1], [], []>} : vector<32x32xbf16>, vector<32x16xbf16>, vector<32x16xf32> -> vector<32x16xf32>
    %c0_35 = arith.constant 0 : index
    %c0_36 = arith.constant 0 : index
    %c0_37 = arith.constant 0 : index
    %56 = vector.load %arg11[%c0_35, %c0_36, %c0_37] : memref<2x32x1xf32, #tpu.memory_space<vmem>>, vector<1x32x1xf32>
    %57 = vector.shape_cast %56 : vector<1x32x1xf32> to vector<32x1xf32>
    %58 = vector.broadcast %57 : vector<32x1xf32> to vector<32x16xf32>
    %59 = arith.addf %55, %58 : vector<32x16xf32>
    %60 = arith.addf %52, %59 : vector<32x16xf32>
    %61 = arith.mulf %60, %60 : vector<32x16xf32>
    %62 = arith.mulf %60, %61 : vector<32x16xf32>
    %cst_38 = arith.constant 4.471500e-02 : f32
    %63 = vector.broadcast %cst_38 : f32 to vector<32x16xf32>
    %64 = arith.mulf %63, %62 : vector<32x16xf32>
    %65 = arith.addf %60, %64 : vector<32x16xf32>
    %cst_39 = arith.constant 0.797884583 : f32
    %66 = vector.broadcast %cst_39 : f32 to vector<32x16xf32>
    %67 = arith.mulf %66, %65 : vector<32x16xf32>
    %68 = math.tanh %67 : vector<32x16xf32>
    %cst_40 = arith.constant 1.000000e+00 : f32
    %69 = vector.broadcast %cst_40 : f32 to vector<32x16xf32>
    %70 = arith.addf %69, %68 : vector<32x16xf32>
    %cst_41 = arith.constant 5.000000e-01 : f32
    %71 = vector.broadcast %cst_41 : f32 to vector<32x16xf32>
    %72 = arith.mulf %71, %70 : vector<32x16xf32>
    %73 = arith.mulf %60, %72 : vector<32x16xf32>
    %74 = arith.truncf %73 : vector<32x16xf32> to vector<32x16xbf16>
    %cst_42 = arith.constant dense<0.000000e+00> : vector<32x16xf32>
    %75 = tpu.matmul %74, %26, %cst_42 {dimension_numbers = #tpu.dot_dimension_numbers<[1], [0], [0], [1], [0, 0, 1, 1], [], []>} : vector<32x16xbf16>, vector<16x16xbf16>, vector<32x16xf32> -> vector<32x16xf32>
    %76 = vector.extract_strided_slice %75 {offsets = [0, 0], sizes = [32, 8], strides = [1, 1]} : vector<32x16xf32> to vector<32x8xf32>
    %77 = vector.extract_strided_slice %75 {offsets = [0, 8], sizes = [32, 8], strides = [1, 1]} : vector<32x16xf32> to vector<32x8xf32>
    %c1 = arith.constant 1 : index
    %c0_43 = arith.constant 0 : index
    %c0_44 = arith.constant 0 : index
    %c0_45 = arith.constant 0 : index
    %78 = vector.load %arg8[%c1, %c0_43, %c0_44, %c0_45] : memref<2x32x32x8xf32, #tpu.memory_space<vmem>>, vector<1x32x32x8xf32>
    %79 = vector.shape_cast %78 : vector<1x32x32x8xf32> to vector<32x32x8xf32>
    %c1_46 = arith.constant 1 : index
    %c0_47 = arith.constant 0 : index
    %c0_48 = arith.constant 0 : index
    %c0_49 = arith.constant 0 : index
    %80 = vector.load %arg9[%c1_46, %c0_47, %c0_48, %c0_49] : memref<2x32x32x8xf32, #tpu.memory_space<vmem>>, vector<1x32x32x8xf32>
    %81 = vector.shape_cast %80 : vector<1x32x32x8xf32> to vector<32x32x8xf32>
    %82 = vector.shape_cast %76 : vector<32x8xf32> to vector<32x1x8xf32>
    %83 = vector.shape_cast %77 : vector<32x8xf32> to vector<32x1x8xf32>
    %84 = vector.broadcast %82 : vector<32x1x8xf32> to vector<32x32x8xf32>
    %85 = arith.mulf %79, %84 : vector<32x32x8xf32>
    %86 = vector.broadcast %83 : vector<32x1x8xf32> to vector<32x32x8xf32>
    %87 = arith.mulf %81, %86 : vector<32x32x8xf32>
    %88 = arith.subf %85, %87 : vector<32x32x8xf32>
    %cst_50 = arith.constant dense<0.000000e+00> : vector<32x8xf32>
    %89 = vector.multi_reduction <add>, %88, %cst_50 [0] : vector<32x32x8xf32> to vector<32x8xf32>
    %90 = vector.broadcast %82 : vector<32x1x8xf32> to vector<32x32x8xf32>
    %91 = arith.mulf %81, %90 : vector<32x32x8xf32>
    %92 = vector.broadcast %83 : vector<32x1x8xf32> to vector<32x32x8xf32>
    %93 = arith.mulf %79, %92 : vector<32x32x8xf32>
    %94 = arith.addf %91, %93 : vector<32x32x8xf32>
    %cst_51 = arith.constant dense<0.000000e+00> : vector<32x8xf32>
    %95 = vector.multi_reduction <add>, %94, %cst_51 [0] : vector<32x32x8xf32> to vector<32x8xf32>
    %96 = tpu.concatenate %89, %95 in 1 : vector<32x8xf32>, vector<32x8xf32> -> vector<32x16xf32>
    %97 = arith.truncf %96 : vector<32x16xf32> to vector<32x16xbf16>
    %cst_52 = arith.constant dense<0.000000e+00> : vector<32x16xf32>
    %98 = tpu.matmul %97, %27, %cst_52 {dimension_numbers = #tpu.dot_dimension_numbers<[1], [0], [0], [1], [0, 0, 1, 1], [], []>} : vector<32x16xbf16>, vector<16x16xbf16>, vector<32x16xf32> -> vector<32x16xf32>
    %c1_53 = arith.constant 1 : index
    %c0_54 = arith.constant 0 : index
    %c0_55 = arith.constant 0 : index
    %99 = vector.load %arg10[%c1_53, %c0_54, %c0_55] : memref<2x32x32xbf16, #tpu.memory_space<vmem>>, vector<1x32x32xbf16>
    %100 = vector.shape_cast %99 : vector<1x32x32xbf16> to vector<32x32xbf16>
    %cst_56 = arith.constant dense<0.000000e+00> : vector<32x16xf32>
    %101 = tpu.matmul %100, %74, %cst_56 {dimension_numbers = #tpu.dot_dimension_numbers<[1], [0], [0], [1], [0, 0, 1, 1], [], []>} : vector<32x32xbf16>, vector<32x16xbf16>, vector<32x16xf32> -> vector<32x16xf32>
    %c1_57 = arith.constant 1 : index
    %c0_58 = arith.constant 0 : index
    %c0_59 = arith.constant 0 : index
    %102 = vector.load %arg11[%c1_57, %c0_58, %c0_59] : memref<2x32x1xf32, #tpu.memory_space<vmem>>, vector<1x32x1xf32>
    %103 = vector.shape_cast %102 : vector<1x32x1xf32> to vector<32x1xf32>
    %104 = vector.broadcast %103 : vector<32x1xf32> to vector<32x16xf32>
    %105 = arith.addf %101, %104 : vector<32x16xf32>
    %106 = arith.addf %98, %105 : vector<32x16xf32>
    %c0_60 = arith.constant 0 : index
    %c0_61 = arith.constant 0 : index
    %107 = vector.load %arg12[%c0_60, %c0_61] : memref<64x32xbf16, #tpu.memory_space<vmem>>, vector<64x32xbf16>
    %108 = arith.truncf %106 : vector<32x16xf32> to vector<32x16xbf16>
    %cst_62 = arith.constant dense<0.000000e+00> : vector<64x16xf32>
    %109 = tpu.matmul %107, %108, %cst_62 {dimension_numbers = #tpu.dot_dimension_numbers<[1], [0], [0], [1], [0, 0, 1, 1], [], []>} : vector<64x32xbf16>, vector<32x16xbf16>, vector<64x16xf32> -> vector<64x16xf32>
    %c0_63 = arith.constant 0 : index
    %c0_64 = arith.constant 0 : index
    %110 = vector.load %arg13[%c0_63, %c0_64] : memref<64x1xf32, #tpu.memory_space<vmem>>, vector<64x1xf32>
    %111 = vector.broadcast %110 : vector<64x1xf32> to vector<64x16xf32>
    %112 = arith.addf %109, %111 : vector<64x16xf32>
    %113 = arith.mulf %112, %112 : vector<64x16xf32>
    %114 = arith.mulf %112, %113 : vector<64x16xf32>
    %cst_65 = arith.constant 4.471500e-02 : f32
    %115 = vector.broadcast %cst_65 : f32 to vector<64x16xf32>
    %116 = arith.mulf %115, %114 : vector<64x16xf32>
    %117 = arith.addf %112, %116 : vector<64x16xf32>
    %cst_66 = arith.constant 0.797884583 : f32
    %118 = vector.broadcast %cst_66 : f32 to vector<64x16xf32>
    %119 = arith.mulf %118, %117 : vector<64x16xf32>
    %120 = math.tanh %119 : vector<64x16xf32>
    %cst_67 = arith.constant 1.000000e+00 : f32
    %121 = vector.broadcast %cst_67 : f32 to vector<64x16xf32>
    %122 = arith.addf %121, %120 : vector<64x16xf32>
    %cst_68 = arith.constant 5.000000e-01 : f32
    %123 = vector.broadcast %cst_68 : f32 to vector<64x16xf32>
    %124 = arith.mulf %123, %122 : vector<64x16xf32>
    %125 = arith.mulf %112, %124 : vector<64x16xf32>
    %c0_69 = arith.constant 0 : index
    %c0_70 = arith.constant 0 : index
    %126 = vector.load %arg14[%c0_69, %c0_70] : memref<8x64xbf16, #tpu.memory_space<vmem>>, vector<8x64xbf16>
    %127 = arith.truncf %125 : vector<64x16xf32> to vector<64x16xbf16>
    %cst_71 = arith.constant dense<0.000000e+00> : vector<8x16xf32>
    %128 = tpu.matmul %126, %127, %cst_71 {dimension_numbers = #tpu.dot_dimension_numbers<[1], [0], [0], [1], [0, 0, 1, 1], [], []>} : vector<8x64xbf16>, vector<64x16xbf16>, vector<8x16xf32> -> vector<8x16xf32>
    %c0_72 = arith.constant 0 : index
    %c0_73 = arith.constant 0 : index
    %129 = vector.load %arg15[%c0_72, %c0_73] : memref<8x1xf32, #tpu.memory_space<vmem>>, vector<8x1xf32>
    %130 = vector.broadcast %129 : vector<8x1xf32> to vector<8x16xf32>
    %131 = arith.addf %128, %130 : vector<8x16xf32>
    %c0_74 = arith.constant 0 : index
    %c0_75 = arith.constant 0 : index
    %c0_76 = arith.constant 0 : index
    %132 = vector.load %arg16[%c0_74, %c0_75, %c0_76] : memref<1x8x16xf32, #tpu.memory_space<vmem>>, vector<1x8x16xf32>
    %133 = vector.shape_cast %132 : vector<1x8x16xf32> to vector<8x16xf32>
    %134 = vector.shape_cast %131 : vector<8x16xf32> to vector<1x8x16xf32>
    tpu.vector_store %arg16[%c0_74, %c0_75, %c0_76], %134 {strides = array<i32>} : memref<1x8x16xf32, #tpu.memory_space<vmem>>, vector<1x8x16xf32>,
    return
  }
  func.func @transform_0(%arg0: i32) -> (i32, i32, i32) {
    %c0_i32 = arith.constant 0 : i32
    %c0_i32_0 = arith.constant 0 : i32
    %c0_i32_1 = arith.constant 0 : i32
    return %arg0, %c0_i32, %c0_i32_0 : i32, i32, i32
  }
  func.func @transform_1(%arg0: i32) -> (i32, i32) {
    %c0_i32 = arith.constant 0 : i32
    %c0_i32_0 = arith.constant 0 : i32
    %c0_i32_1 = arith.constant 0 : i32
    return %c0_i32, %c0_i32_0 : i32, i32
  }
  func.func @transform_2(%arg0: i32) -> (i32, i32) {
    %c0_i32 = arith.constant 0 : i32
    %c0_i32_0 = arith.constant 0 : i32
    %c0_i32_1 = arith.constant 0 : i32
    return %c0_i32, %c0_i32_0 : i32, i32
  }
  func.func @transform_3(%arg0: i32) -> (i32, i32) {
    %c0_i32 = arith.constant 0 : i32
    %c0_i32_0 = arith.constant 0 : i32
    %c0_i32_1 = arith.constant 0 : i32
    return %c0_i32, %c0_i32_0 : i32, i32
  }
  func.func @transform_4(%arg0: i32) -> (i32, i32) {
    %c0_i32 = arith.constant 0 : i32
    %c0_i32_0 = arith.constant 0 : i32
    %c0_i32_1 = arith.constant 0 : i32
    return %c0_i32, %c0_i32_0 : i32, i32
  }
  func.func @transform_5(%arg0: i32) -> (i32, i32) {
    %c0_i32 = arith.constant 0 : i32
    %c0_i32_0 = arith.constant 0 : i32
    %c0_i32_1 = arith.constant 0 : i32
    return %c0_i32, %c0_i32_0 : i32, i32
  }
  func.func @transform_6(%arg0: i32) -> (i32, i32) {
    %c0_i32 = arith.constant 0 : i32
    %c0_i32_0 = arith.constant 0 : i32
    %c0_i32_1 = arith.constant 0 : i32
    return %c0_i32, %c0_i32_0 : i32, i32
  }
  func.func @transform_7(%arg0: i32) -> (i32, i32, i32, i32) {
    %c0_i32 = arith.constant 0 : i32
    %c0_i32_0 = arith.constant 0 : i32
    %c0_i32_1 = arith.constant 0 : i32
    %c0_i32_2 = arith.constant 0 : i32
    %c0_i32_3 = arith.constant 0 : i32
    return %c0_i32, %c0_i32_0, %c0_i32_1, %c0_i32_2 : i32, i32, i32, i32
  }
  func.func @transform_8(%arg0: i32) -> (i32, i32, i32, i32) {
    %c0_i32 = arith.constant 0 : i32
    %c0_i32_0 = arith.constant 0 : i32
    %c0_i32_1 = arith.constant 0 : i32
    %c0_i32_2 = arith.constant 0 : i32
    %c0_i32_3 = arith.constant 0 : i32
    return %c0_i32, %c0_i32_0, %c0_i32_1, %c0_i32_2 : i32, i32, i32, i32
  }
  func.func @transform_9(%arg0: i32) -> (i32, i32, i32) {
    %c0_i32 = arith.constant 0 : i32
    %c0_i32_0 = arith.constant 0 : i32
    %c0_i32_1 = arith.constant 0 : i32
    %c0_i32_2 = arith.constant 0 : i32
    return %c0_i32, %c0_i32_0, %c0_i32_1 : i32, i32, i32
  }
  func.func @transform_10(%arg0: i32) -> (i32, i32, i32) {
    %c0_i32 = arith.constant 0 : i32
    %c0_i32_0 = arith.constant 0 : i32
    %c0_i32_1 = arith.constant 0 : i32
    %c0_i32_2 = arith.constant 0 : i32
    return %c0_i32, %c0_i32_0, %c0_i32_1 : i32, i32, i32
  }
  func.func @transform_11(%arg0: i32) -> (i32, i32) {
    %c0_i32 = arith.constant 0 : i32
    %c0_i32_0 = arith.constant 0 : i32
    %c0_i32_1 = arith.constant 0 : i32
    return %c0_i32, %c0_i32_0 : i32, i32
  }
  func.func @transform_12(%arg0: i32) -> (i32, i32) {
    %c0_i32 = arith.constant 0 : i32
    %c0_i32_0 = arith.constant 0 : i32
    %c0_i32_1 = arith.constant 0 : i32
    return %c0_i32, %c0_i32_0 : i32, i32
  }
  func.func @transform_13(%arg0: i32) -> (i32, i32) {
    %c0_i32 = arith.constant 0 : i32
    %c0_i32_0 = arith.constant 0 : i32
    %c0_i32_1 = arith.constant 0 : i32
    return %c0_i32, %c0_i32_0 : i32, i32
  }
  func.func @transform_14(%arg0: i32) -> (i32, i32) {
    %c0_i32 = arith.constant 0 : i32
    %c0_i32_0 = arith.constant 0 : i32
    %c0_i32_1 = arith.constant 0 : i32
    return %c0_i32, %c0_i32_0 : i32, i32
  }
  func.func @transform_15(%arg0: i32) -> (i32, i32, i32) {
    %c0_i32 = arith.constant 0 : i32
    %c0_i32_0 = arith.constant 0 : i32
    %c0_i32_1 = arith.constant 0 : i32
    return %arg0, %c0_i32, %c0_i32_0 : i32, i32, i32
  }
}

</mosaic_0001>

<llo_original>
// kernel: fno_projected_forward.1
$region0: #{fno_projected_forward.1}
  #allocation0 [shape = 'u32[]', space=smem, size = 0x4, offset = 0x4, fixed_abs, tag = 'smem constant byte address 0x4 - core index']
  #allocation1 [shape = 'u32[72,128]{1,0:T(1,128)}', space=vmem, size = 0x9000, scoped, tag = 'internal scratch']
  %s0 = inlined_call_operand.vmem [shape: bf16[2,8,16], index: 0, kind: input, shape index: {}]
  %s1 = inlined_call_operand.vmem [shape: bf16[16,16], index: 1, kind: input, shape index: {}]
  %s2 = inlined_call_operand.vmem [shape: bf16[16,16], index: 2, kind: input, shape index: {}]
  %s3 = inlined_call_operand.vmem [shape: bf16[64,8], index: 3, kind: input, shape index: {}]
  %s4 = inlined_call_operand.vmem [shape: f32[64,1], index: 4, kind: input, shape index: {}]
  %s5 = inlined_call_operand.vmem [shape: bf16[32,64], index: 5, kind: input, shape index: {}]
  %s6 = inlined_call_operand.vmem [shape: f32[32,1], index: 6, kind: input, shape index: {}]
  %s7 = inlined_call_operand.vmem [shape: f32[2,32,32,8], index: 7, kind: input, shape index: {}]
  %s8 = inlined_call_operand.vmem [shape: f32[2,32,32,8], index: 8, kind: input, shape index: {}]
  %s9 = inlined_call_operand.vmem [shape: bf16[2,32,32], index: 9, kind: input, shape index: {}]
  %s10 = inlined_call_operand.vmem [shape: f32[2,32,1], index: 10, kind: input, shape index: {}]
  %s11 = inlined_call_operand.vmem [shape: bf16[64,32], index: 11, kind: input, shape index: {}]
  %s12 = inlined_call_operand.vmem [shape: f32[64,1], index: 12, kind: input, shape index: {}]
  %s13 = inlined_call_operand.vmem [shape: bf16[8,64], index: 13, kind: input, shape index: {}]
  %s14 = inlined_call_operand.vmem [shape: f32[8,1], index: 14, kind: input, shape index: {}]
  %s15 = inlined_call_operand.vmem [shape: f32[2,8,16], index: 15, kind: output, shape index: {}]
  %s16 = sld [smem:[#allocation0]]
  $region93: #{fno_projected_forward.1} parent=0
    _
  %s18 = ssub.s32 1, %s16
  %s19 = scalar_select 0, %s18, %s16
  loop: start=0, step=1, limit=4
  $region2: #{fno_projected_forward.1} parent=0 // loop_pre_header
    _
  $region3: #{fno_projected_forward.1} parent=0 // loop_header
    %s21 = sphi 0, %s25
    %p22 = scmp.ge.s32.totalorder %s21, 4
    %s31 = sphi 0, %s33
    %s34 = sphi 0, %s31
    %s35 = sphi 0, %s34
    %s51 = sphi 0, %s35
    %s55 = sphi 0, %s55
    %s57 = sphi 0, %s55
    %s58 = sphi 0, %s57
    %s72 = sphi 0, %s58
    %s76 = sphi 0, %s76
    %s78 = sphi 0, %s76
    %s79 = sphi 0, %s78
    %s93 = sphi 0, %s79
    %s97 = sphi 0, %s97
    %s99 = sphi 0, %s97
    %s100 = sphi 0, %s99
    %s114 = sphi 0, %s100
    %s118 = sphi 0, %s118
    %s120 = sphi 0, %s118
    %s121 = sphi 0, %s120
    %s135 = sphi 0, %s121
    %s139 = sphi 0, %s139
    %s141 = sphi 0, %s139
    %s142 = sphi 0, %s141
    %s156 = sphi 0, %s142
    %s160 = sphi 0, %s160
    %s162 = sphi 0, %s160
    %s163 = sphi 0, %s162
    %s177 = sphi 0, %s163
    %s181 = sphi 0, %s181
    %s183 = sphi 0, %s181
    %s184 = sphi 0, %s183
    %s198 = sphi 0, %s184
    %s202 = sphi 0, %s202
    %s204 = sphi 0, %s202
    %s205 = sphi 0, %s204
    %s219 = sphi 0, %s205
    %s223 = sphi 0, %s223
    %s225 = sphi 0, %s223
    %s226 = sphi 0, %s225
    %s240 = sphi 0, %s226
    %s244 = sphi 0, %s244
    %s246 = sphi 0, %s244
    %s247 = sphi 0, %s246
    %s261 = sphi 0, %s247
    %s265 = sphi 0, %s265
    %s267 = sphi 0, %s265
    %s268 = sphi 0, %s267
    %s282 = sphi 0, %s268
    %s286 = sphi 0, %s286
    %s288 = sphi 0, %s286
    %s289 = sphi 0, %s288
    %s303 = sphi 0, %s289
    %s307 = sphi 0, %s307
    %s309 = sphi 0, %s307
    %s310 = sphi 0, %s309
    %s324 = sphi 0, %s310
    %s328 = sphi 0, %s328
    %s330 = sphi 0, %s328
    %s331 = sphi 0, %s330
    %s345 = sphi 0, %s331
    %s351 = sphi 0, %s353
    %s354 = sphi 0, %s351
    %s355 = sphi 0, %s354
    %s371 = sphi 0, %s355
  $region4: #{fno_projected_forward.1} parent=0 // loop_header_branch
    %24 = sbr.rel (%p22) target = $region8
  $region5: #{fno_projected_forward.1} parent=0 // loop_body
    %s26 = ssub.s32 %s21, 1
    %s27 = ssub.s32 %s21, 2
    %s28 = sadd.s32 %s21, 1
    %s29 = ssub.s32 %s21, %s28
    %p30 = scmp.eq.s32.totalorder %s29, 0
    %s32 = sadd.s32 %s31, 1
    %s33 = scalar_select %p30, %s31, %s32
    %p36 = pneg %p30
    %p37 = scmp.eq.s32.totalorder %s21, 1
    %p38 = por %p36, %p37
    %p39 = scmp.ne.s32.totalorder %s31, %s34
    %p40 = scmp.eq.s32.totalorder %s21, 0
    %p41 = por %p39, %p40
    %p42 = scmp.ne.s32.totalorder %s31, %s34
    %p43 = scmp.eq.s32.totalorder %s26, 1
    %p44 = por %p42, %p43
    %p45 = scmp.ne.s32.totalorder %s34, %s35
    %p46 = scmp.eq.s32.totalorder %s26, 0
    %p47 = por %p45, %p46
    %p48 = scmp.ne.s32.totalorder %s34, %s35
    %p49 = scmp.eq.s32.totalorder %s27, 1
    %p50 = por %p48, %p49
    %p52 = scmp.ne.s32.totalorder %s35, %s51
    %p53 = scmp.eq.s32.totalorder %s27, 0
    %p54 = por %p52, %p53
    %s56 = sadd.s32 %s55, 1
    %p59 = scmp.eq.s32.totalorder %s21, 1
    %p60 = scmp.ne.s32.totalorder %s55, %s57
    %p61 = scmp.eq.s32.totalorder %s21, 0
    %p62 = por %p60, %p61
    %p63 = scmp.ne.s32.totalorder %s55, %s57
    %p64 = scmp.eq.s32.totalorder %s26, 1
    %p65 = por %p63, %p64
    %p66 = scmp.ne.s32.totalorder %s57, %s58
    %p67 = scmp.eq.s32.totalorder %s26, 0
    %p68 = por %p66, %p67
    %p69 = scmp.ne.s32.totalorder %s57, %s58
    %p70 = scmp.eq.s32.totalorder %s27, 1
    %p71 = por %p69, %p70
    %p73 = scmp.ne.s32.totalorder %s58, %s72
    %p74 = scmp.eq.s32.totalorder %s27, 0
    %p75 = por %p73, %p74
    %s77 = sadd.s32 %s76, 1
    %p80 = scmp.eq.s32.totalorder %s21, 1
    %p81 = scmp.ne.s32.totalorder %s76, %s78
    %p82 = scmp.eq.s32.totalorder %s21, 0
    %p83 = por %p81, %p82
    %p84 = scmp.ne.s32.totalorder %s76, %s78
    %p85 = scmp.eq.s32.totalorder %s26, 1
    %p86 = por %p84, %p85
    %p87 = scmp.ne.s32.totalorder %s78, %s79
    %p88 = scmp.eq.s32.totalorder %s26, 0
    %p89 = por %p87, %p88
    %p90 = scmp.ne.s32.totalorder %s78, %s79
    %p91 = scmp.eq.s32.totalorder %s27, 1
    %p92 = por %p90, %p91
    %p94 = scmp.ne.s32.totalorder %s79, %s93
    %p95 = scmp.eq.s32.totalorder %s27, 0
    %p96 = por %p94, %p95
    %s98 = sadd.s32 %s97, 1
    %p101 = scmp.eq.s32.totalorder %s21, 1
    %p102 = scmp.ne.s32.totalorder %s97, %s99
    %p103 = scmp.eq.s32.totalorder %s21, 0
    %p104 = por %p102, %p103
    %p105 = scmp.ne.s32.totalorder %s97, %s99
    %p106 = scmp.eq.s32.totalorder %s26, 1
    %p107 = por %p105, %p106
    %p108 = scmp.ne.s32.totalorder %s99, %s100
    %p109 = scmp.eq.s32.totalorder %s26, 0
    %p110 = por %p108, %p109
    %p111 = scmp.ne.s32.totalorder %s99, %s100
    %p112 = scmp.eq.s32.totalorder %s27, 1
    %p113 = por %p111, %p112
    %p115 = scmp.ne.s32.totalorder %s100, %s114
    %p116 = scmp.eq.s32.totalorder %s27, 0
    %p117 = por %p115, %p116
    %s119 = sadd.s32 %s118, 1
    %p122 = scmp.eq.s32.totalorder %s21, 1
    %p123 = scmp.ne.s32.totalorder %s118, %s120
    %p124 = scmp.eq.s32.totalorder %s21, 0
    %p125 = por %p123, %p124
    %p126 = scmp.ne.s32.totalorder %s118, %s120
    %p127 = scmp.eq.s32.totalorder %s26, 1
    %p128 = por %p126, %p127
    %p129 = scmp.ne.s32.totalorder %s120, %s121
    %p130 = scmp.eq.s32.totalorder %s26, 0
    %p131 = por %p129, %p130
    %p132 = scmp.ne.s32.totalorder %s120, %s121
    %p133 = scmp.eq.s32.totalorder %s27, 1
    %p134 = por %p132, %p133
    %p136 = scmp.ne.s32.totalorder %s121, %s135
    %p137 = scmp.eq.s32.totalorder %s27, 0
    %p138 = por %p136, %p137
    %s140 = sadd.s32 %s139, 1
    %p143 = scmp.eq.s32.totalorder %s21, 1
    %p144 = scmp.ne.s32.totalorder %s139, %s141
    %p145 = scmp.eq.s32.totalorder %s21, 0
    %p146 = por %p144, %p145
    %p147 = scmp.ne.s32.totalorder %s139, %s141
    %p148 = scmp.eq.s32.totalorder %s26, 1
    %p149 = por %p147, %p148
    %p150 = scmp.ne.s32.totalorder %s141, %s142
    %p151 = scmp.eq.s32.totalorder %s26, 0
    %p152 = por %p150, %p151
    %p153 = scmp.ne.s32.totalorder %s141, %s142
    %p154 = scmp.eq.s32.totalorder %s27, 1
    %p155 = por %p153, %p154
    %p157 = scmp.ne.s32.totalorder %s142, %s156
    %p158 = scmp.eq.s32.totalorder %s27, 0
    %p159 = por %p157, %p158
    %s161 = sadd.s32 %s160, 1
    %p164 = scmp.eq.s32.totalorder %s21, 1
    %p165 = scmp.ne.s32.totalorder %s160, %s162
    %p166 = scmp.eq.s32.totalorder %s21, 0
    %p167 = por %p165, %p166
    %p168 = scmp.ne.s32.totalorder %s160, %s162
    %p169 = scmp.eq.s32.totalorder %s26, 1
    %p170 = por %p168, %p169
    %p171 = scmp.ne.s32.totalorder %s162, %s163
    %p172 = scmp.eq.s32.totalorder %s26, 0
    %p173 = por %p171, %p172
    %p174 = scmp.ne.s32.totalorder %s162, %s163
    %p175 = scmp.eq.s32.totalorder %s27, 1
    %p176 = por %p174, %p175
    %p178 = scmp.ne.s32.totalorder %s163, %s177
    %p179 = scmp.eq.s32.totalorder %s27, 0
    %p180 = por %p178, %p179
    %s182 = sadd.s32 %s181, 1
    %p185 = scmp.eq.s32.totalorder %s21, 1
    %p186 = scmp.ne.s32.totalorder %s181, %s183
    %p187 = scmp.eq.s32.totalorder %s21, 0
    %p188 = por %p186, %p187
    %p189 = scmp.ne.s32.totalorder %s181, %s183
    %p190 = scmp.eq.s32.totalorder %s26, 1
    %p191 = por %p189, %p190
    %p192 = scmp.ne.s32.totalorder %s183, %s184
    %p193 = scmp.eq.s32.totalorder %s26, 0
    %p194 = por %p192, %p193
    %p195 = scmp.ne.s32.totalorder %s183, %s184
    %p196 = scmp.eq.s32.totalorder %s27, 1
    %p197 = por %p195, %p196
    %p199 = scmp.ne.s32.totalorder %s184, %s198
    %p200 = scmp.eq.s32.totalorder %s27, 0
    %p201 = por %p199, %p200
    %s203 = sadd.s32 %s202, 1
    %p206 = scmp.eq.s32.totalorder %s21, 1
    %p207 = scmp.ne.s32.totalorder %s202, %s204
    %p208 = scmp.eq.s32.totalorder %s21, 0
    %p209 = por %p207, %p208
    %p210 = scmp.ne.s32.totalorder %s202, %s204
    %p211 = scmp.eq.s32.totalorder %s26, 1
    %p212 = por %p210, %p211
    %p213 = scmp.ne.s32.totalorder %s204, %s205
    %p214 = scmp.eq.s32.totalorder %s26, 0
    %p215 = por %p213, %p214
    %p216 = scmp.ne.s32.totalorder %s204, %s205
    %p217 = scmp.eq.s32.totalorder %s27, 1
    %p218 = por %p216, %p217
    %p220 = scmp.ne.s32.totalorder %s205, %s219
    %p221 = scmp.eq.s32.totalorder %s27, 0
    %p222 = por %p220, %p221
    %s224 = sadd.s32 %s223, 1
    %p227 = scmp.eq.s32.totalorder %s21, 1
    %p228 = scmp.ne.s32.totalorder %s223, %s225
    %p229 = scmp.eq.s32.totalorder %s21, 0
    %p230 = por %p228, %p229
    %p231 = scmp.ne.s32.totalorder %s223, %s225
    %p232 = scmp.eq.s32.totalorder %s26, 1
    %p233 = por %p231, %p232
    %p234 = scmp.ne.s32.totalorder %s225, %s226
    %p235 = scmp.eq.s32.totalorder %s26, 0
    %p236 = por %p234, %p235
    %p237 = scmp.ne.s32.totalorder %s225, %s226
    %p238 = scmp.eq.s32.totalorder %s27, 1
    %p239 = por %p237, %p238
    %p241 = scmp.ne.s32.totalorder %s226, %s240
    %p242 = scmp.eq.s32.totalorder %s27, 0
    %p243 = por %p241, %p242
    %s245 = sadd.s32 %s244, 1
    %p248 = scmp.eq.s32.totalorder %s21, 1
    %p249 = scmp.ne.s32.totalorder %s244, %s246
    %p250 = scmp.eq.s32.totalorder %s21, 0
    %p251 = por %p249, %p250
    %p252 = scmp.ne.s32.totalorder %s244, %s246
    %p253 = scmp.eq.s32.totalorder %s26, 1
    %p254 = por %p252, %p253
    %p255 = scmp.ne.s32.totalorder %s246, %s247
    %p256 = scmp.eq.s32.totalorder %s26, 0
    %p257 = por %p255, %p256
    %p258 = scmp.ne.s32.totalorder %s246, %s247
    %p259 = scmp.eq.s32.totalorder %s27, 1
    %p260 = por %p258, %p259
    %p262 = scmp.ne.s32.totalorder %s247, %s261
    %p263 = scmp.eq.s32.totalorder %s27, 0
    %p264 = por %p262, %p263
    %s266 = sadd.s32 %s265, 1
    %p269 = scmp.eq.s32.totalorder %s21, 1
    %p270 = scmp.ne.s32.totalorder %s265, %s267
    %p271 = scmp.eq.s32.totalorder %s21, 0
    %p272 = por %p270, %p271
    %p273 = scmp.ne.s32.totalorder %s265, %s267
    %p274 = scmp.eq.s32.totalorder %s26, 1
    %p275 = por %p273, %p274
    %p276 = scmp.ne.s32.totalorder %s267, %s268
    %p277 = scmp.eq.s32.totalorder %s26, 0
    %p278 = por %p276, %p277
    %p279 = scmp.ne.s32.totalorder %s267, %s268
    %p280 = scmp.eq.s32.totalorder %s27, 1
    %p281 = por %p279, %p280
    %p283 = scmp.ne.s32.totalorder %s268, %s282
    %p284 = scmp.eq.s32.totalorder %s27, 0
    %p285 = por %p283, %p284
    %s287 = sadd.s32 %s286, 1
    %p290 = scmp.eq.s32.totalorder %s21, 1
    %p291 = scmp.ne.s32.totalorder %s286, %s288
    %p292 = scmp.eq.s32.totalorder %s21, 0
    %p293 = por %p291, %p292
    %p294 = scmp.ne.s32.totalorder %s286, %s288
    %p295 = scmp.eq.s32.totalorder %s26, 1
    %p296 = por %p294, %p295
    %p297 = scmp.ne.s32.totalorder %s288, %s289
    %p298 = scmp.eq.s32.totalorder %s26, 0
    %p299 = por %p297, %p298
    %p300 = scmp.ne.s32.totalorder %s288, %s289
    %p301 = scmp.eq.s32.totalorder %s27, 1
    %p302 = por %p300, %p301
    %p304 = scmp.ne.s32.totalorder %s289, %s303
    %p305 = scmp.eq.s32.totalorder %s27, 0
    %p306 = por %p304, %p305
    %s308 = sadd.s32 %s307, 1
    %p311 = scmp.eq.s32.totalorder %s21, 1
    %p312 = scmp.ne.s32.totalorder %s307, %s309
    %p313 = scmp.eq.s32.totalorder %s21, 0
    %p314 = por %p312, %p313
    %p315 = scmp.ne.s32.totalorder %s307, %s309
    %p316 = scmp.eq.s32.totalorder %s26, 1
    %p317 = por %p315, %p316
    %p318 = scmp.ne.s32.totalorder %s309, %s310
    %p319 = scmp.eq.s32.totalorder %s26, 0
    %p320 = por %p318, %p319
    %p321 = scmp.ne.s32.totalorder %s309, %s310
    %p322 = scmp.eq.s32.totalorder %s27, 1
    %p323 = por %p321, %p322
    %p325 = scmp.ne.s32.totalorder %s310, %s324
    %p326 = scmp.eq.s32.totalorder %s27, 0
    %p327 = por %p325, %p326
    %s329 = sadd.s32 %s328, 1
    %p332 = scmp.eq.s32.totalorder %s21, 1
    %p333 = scmp.ne.s32.totalorder %s328, %s330
    %p334 = scmp.eq.s32.totalorder %s21, 0
    %p335 = por %p333, %p334
    %p336 = scmp.ne.s32.totalorder %s328, %s330
    %p337 = scmp.eq.s32.totalorder %s26, 1
    %p338 = por %p336, %p337
    %p339 = scmp.ne.s32.totalorder %s330, %s331
    %p340 = scmp.eq.s32.totalorder %s26, 0
    %p341 = por %p339, %p340
    %p342 = scmp.ne.s32.totalorder %s330, %s331
    %p343 = scmp.eq.s32.totalorder %s27, 1
    %p344 = por %p342, %p343
    %p346 = scmp.ne.s32.totalorder %s331, %s345
    %p347 = scmp.eq.s32.totalorder %s27, 0
    %p348 = por %p346, %p347
    %s349 = ssub.s32 %s21, %s28
    %p350 = scmp.eq.s32.totalorder %s349, 0
    %s352 = sadd.s32 %s351, 1
    %s353 = scalar_select %p350, %s351, %s352
    %p356 = pneg %p350
    %p357 = scmp.eq.s32.totalorder %s21, 1
    %p358 = por %p356, %p357
    %p359 = scmp.ne.s32.totalorder %s351, %s354
    %p360 = scmp.eq.s32.totalorder %s21, 0
    %p361 = por %p359, %p360
    %p362 = scmp.ne.s32.totalorder %s351, %s354
    %p363 = scmp.eq.s32.totalorder %s26, 1
    %p364 = por %p362, %p363
    %p365 = scmp.ne.s32.totalorder %s354, %s355
    %p366 = scmp.eq.s32.totalorder %s26, 0
    %p367 = por %p365, %p366
    %p368 = scmp.ne.s32.totalorder %s354, %s355
    %p369 = scmp.eq.s32.totalorder %s27, 1
    %p370 = por %p368, %p369
    %p372 = scmp.ne.s32.totalorder %s355, %s371
    %p373 = scmp.eq.s32.totalorder %s27, 0
    %p374 = por %p372, %p373
    %p375 = scmp.le.s32.totalorder 1, %s21
    %p376 = scmp.lt.s32.totalorder %s21, 3
    %p377 = pnand %p375, %p376
    %p378 = pneg %p377
    // Predicated region
    $region9: #{fno_projected_forward.1} parent=5 // pred_check
      _
    $region10: #{fno_projected_forward.1} parent=5 // pred_check_branch
      %380 = sbr.rel (%p377) target = $region12
    $region11: #{fno_projected_forward.1} parent=5 // pred_region
      %s381 = ssub.s32 %s21, 1
      // Predicated region
      $region13: #{fno_projected_forward.1} parent=11 // pred_check
        %p382 = pneg %p68
      $region14: #{fno_projected_forward.1} parent=11 // pred_check_branch
        %384 = sbr.rel (%p382) target = $region16
      $region15: #{fno_projected_forward.1} parent=11 // pred_region
        _
      $region16: #{fno_projected_forward.1} parent=11 // pred_fallthru
        _
      // Predicated region
      $region17: #{fno_projected_forward.1} parent=11 // pred_check
        %p385 = pneg %p89
      $region18: #{fno_projected_forward.1} parent=11 // pred_check_branch
        %387 = sbr.rel (%p385) target = $region20
      $region19: #{fno_projected_forward.1} parent=11 // pred_region
        _
      $region20: #{fno_projected_forward.1} parent=11 // pred_fallthru
        _
      // Predicated region
      $region21: #{fno_projected_forward.1} parent=11 // pred_check
        %p388 = pneg %p110
      $region22: #{fno_projected_forward.1} parent=11 // pred_check_branch
        %390 = sbr.rel (%p388) target = $region24
      $region23: #{fno_projected_forward.1} parent=11 // pred_region
        _
      $region24: #{fno_projected_forward.1} parent=11 // pred_fallthru
        _
      // Predicated region
      $region25: #{fno_projected_forward.1} parent=11 // pred_check
        %p391 = pneg %p131
      $region26: #{fno_projected_forward.1} parent=11 // pred_check_branch
        %393 = sbr.rel (%p391) target = $region28
      $region27: #{fno_projected_forward.1} parent=11 // pred_region
        _
      $region28: #{fno_projected_forward.1} parent=11 // pred_fallthru
        _
      // Predicated region
      $region29: #{fno_projected_forward.1} parent=11 // pred_check
        %p394 = pneg %p152
      $region30: #{fno_projected_forward.1} parent=11 // pred_check_branch
        %396 = sbr.rel (%p394) target = $region32
      $region31: #{fno_projected_forward.1} parent=11 // pred_region
        _
      $region32: #{fno_projected_forward.1} parent=11 // pred_fallthru
        _
      // Predicated region
      $region33: #{fno_projected_forward.1} parent=11 // pred_check
        %p397 = pneg %p173
      $region34: #{fno_projected_forward.1} parent=11 // pred_check_branch
        %399 = sbr.rel (%p397) target = $region36
      $region35: #{fno_projected_forward.1} parent=11 // pred_region
        _
      $region36: #{fno_projected_forward.1} parent=11 // pred_fallthru
        _
      // Predicated region
      $region37: #{fno_projected_forward.1} parent=11 // pred_check
        %p400 = pneg %p194
      $region38: #{fno_projected_forward.1} parent=11 // pred_check_branch
        %402 = sbr.rel (%p400) target = $region40
      $region39: #{fno_projected_forward.1} parent=11 // pred_region
        _
      $region40: #{fno_projected_forward.1} parent=11 // pred_fallthru
        _
      // Predicated region
      $region41: #{fno_projected_forward.1} parent=11 // pred_check
        %p403 = pneg %p215
      $region42: #{fno_projected_forward.1} parent=11 // pred_check_branch
        %405 = sbr.rel (%p403) target = $region44
      $region43: #{fno_projected_forward.1} parent=11 // pred_region
        _
      $region44: #{fno_projected_forward.1} parent=11 // pred_fallthru
        _
      // Predicated region
      $region45: #{fno_projected_forward.1} parent=11 // pred_check
        %p406 = pneg %p236
      $region46: #{fno_projected_forward.1} parent=11 // pred_check_branch
        %408 = sbr.rel (%p406) target = $region48
      $region47: #{fno_projected_forward.1} parent=11 // pred_region
        _
      $region48: #{fno_projected_forward.1} parent=11 // pred_fallthru
        _
      // Predicated region
      $region49: #{fno_projected_forward.1} parent=11 // pred_check
        %p409 = pneg %p257
      $region50: #{fno_projected_forward.1} parent=11 // pred_check_branch
        %411 = sbr.rel (%p409) target = $region52
      $region51: #{fno_projected_forward.1} parent=11 // pred_region
        _
      $region52: #{fno_projected_forward.1} parent=11 // pred_fallthru
        _
      // Predicated region
      $region53: #{fno_projected_forward.1} parent=11 // pred_check
        %p412 = pneg %p278
      $region54: #{fno_projected_forward.1} parent=11 // pred_check_branch
        %414 = sbr.rel (%p412) target = $region56
      $region55: #{fno_projected_forward.1} parent=11 // pred_region
        _
      $region56: #{fno_projected_forward.1} parent=11 // pred_fallthru
        _
      // Predicated region
      $region57: #{fno_projected_forward.1} parent=11 // pred_check
        %p415 = pneg %p299
      $region58: #{fno_projected_forward.1} parent=11 // pred_check_branch
        %417 = sbr.rel (%p415) target = $region60
      $region59: #{fno_projected_forward.1} parent=11 // pred_region
        _
      $region60: #{fno_projected_forward.1} parent=11 // pred_fallthru
        _
      // Predicated region
      $region61: #{fno_projected_forward.1} parent=11 // pred_check
        %p418 = pneg %p320
      $region62: #{fno_projected_forward.1} parent=11 // pred_check_branch
        %420 = sbr.rel (%p418) target = $region64
      $region63: #{fno_projected_forward.1} parent=11 // pred_region
        _
      $region64: #{fno_projected_forward.1} parent=11 // pred_fallthru
        _
      // Predicated region
      $region65: #{fno_projected_forward.1} parent=11 // pred_check
        %p421 = pneg %p341
      $region66: #{fno_projected_forward.1} parent=11 // pred_check_branch
        %423 = sbr.rel (%p421) target = $region68
      $region67: #{fno_projected_forward.1} parent=11 // pred_region
        _
      $region68: #{fno_projected_forward.1} parent=11 // pred_fallthru
        _
    $region12: #{fno_projected_forward.1} parent=5 // pred_fallthru
      _
    %p424 = scmp.lt.s32.totalorder %s21, 2
    // Predicated region
    $region69: #{fno_projected_forward.1} parent=5 // pred_check
      %p425 = pneg %p424
    $region70: #{fno_projected_forward.1} parent=5 // pred_check_branch
      %427 = sbr.rel (%p425) target = $region72
    $region71: #{fno_projected_forward.1} parent=5 // pred_region
      // Predicated region
      $region73: #{fno_projected_forward.1} parent=71 // pred_check
        %p428 = pneg %p41
      $region74: #{fno_projected_forward.1} parent=71 // pred_check_branch
        %430 = sbr.rel (%p428) target = $region76
      $region75: #{fno_projected_forward.1} parent=71 // pred_region
        %p431 = scmp.lt.s32.totalorder %s21, 1
        %s432 = scalar_select %p431, %s21, 1
        %s433 = smul.addr %s432, 4
        %s434 = scalar_lea.vmem %s0, %s433
      $region76: #{fno_projected_forward.1} parent=71 // pred_fallthru
        _
    $region72: #{fno_projected_forward.1} parent=5 // pred_fallthru
      _
    %p435 = scmp.le.s32.totalorder 1, %s21
    %p436 = scmp.lt.s32.totalorder %s21, 3
    %p437 = pnand %p435, %p436
    %p438 = pneg %p437
    // Predicated region
    $region77: #{fno_projected_forward.1} parent=5 // pred_check
      _
    $region78: #{fno_projected_forward.1} parent=5 // pred_check_branch
      %440 = sbr.rel (%p437) target = $region80
    $region79: #{fno_projected_forward.1} parent=5 // pred_region
      %s441 = ssub.s32 %s21, 1
      %p442 = scmp.lt.s32.totalorder %s26, 1
      %s443 = scalar_select %p442, %s26, 1
      %s444 = smul.addr %s443, 4
      %s445 = scalar_lea.vmem %s0, %s444
      %p446 = pneg %p47
      %p447 = pneg %p44
      %p448 = pneg %p68
      %p449 = pneg %p65
      %p450 = pneg %p89
      %p451 = pneg %p86
      %p452 = pneg %p110
      %p453 = pneg %p107
      %p454 = pneg %p131
      %p455 = pneg %p128
      %p456 = pneg %p152
      %p457 = pneg %p149
      %p458 = pneg %p173
      %p459 = pneg %p170
      %p460 = pneg %p194
      %p461 = pneg %p191
      %p462 = pneg %p215
      %p463 = pneg %p212
      %p464 = pneg %p236
      %p465 = pneg %p233
      %p466 = pneg %p257
      %p467 = pneg %p254
      %p468 = pneg %p278
      %p469 = pneg %p275
      %p470 = pneg %p299
      %p471 = pneg %p296
      %p472 = pneg %p320
      %p473 = pneg %p317
      %p474 = pneg %p341
      %p475 = pneg %p338
      %p476 = pneg %p367
      %p477 = pneg %p364
      %p478 = scmp.lt.s32.totalorder %s26, 1
      %s479 = scalar_select %p478, %s26, 1
      %s480 = smul.addr %s479, 8
      %s481 = scalar_lea.vmem %s15, %s480
      %p482 = scmp.lt.s32.totalorder %s26, 1
      %s483 = scalar_select %p482, %s26, 1
      %s484 = smul.addr %s483, 4
      %s485 = scalar_lea.vmem %s0, %s484
      %p486 = scmp.lt.s32.totalorder %s26, 1
      %s487 = scalar_select %p486, %s26, 1
      %s488 = smul.addr %s487, 8
      %s489 = scalar_lea.vmem %s15, %s488
      %v491 = vld [vmem:[%s485] sm:$0xf]
      %v492 = vld [vmem:[%s3] sm:$0xf]
      %v493 = vld [vmem:[%s3 + $0x4] sm:$0xf]
      %v494 = vld [vmem:[%s3 + $0x8] sm:$0xf]
      %v495 = vld [vmem:[%s3 + $0xc] sm:$0xf]
      %v496 = vld [vmem:[%s3 + $0x10] sm:$0xf]
      %v497 = vld [vmem:[%s3 + $0x14] sm:$0xf]
      %v498 = vld [vmem:[%s3 + $0x18] sm:$0xf]
      %v499 = vld [vmem:[%s3 + $0x1c] sm:$0xf]
      %v500 = vld [vmem:[%s4] sm:$0xff]
      %v501 = vld [vmem:[%s4 + $0x8] sm:$0xff]
      %v502 = vld [vmem:[%s4 + $0x10] sm:$0xff]
      %v503 = vld [vmem:[%s4 + $0x18] sm:$0xff]
      %v504 = vld [vmem:[%s4 + $0x20] sm:$0xff]
      %v505 = vld [vmem:[%s4 + $0x28] sm:$0xff]
      %v506 = vld [vmem:[%s4 + $0x30] sm:$0xff]
      %v507 = vld [vmem:[%s4 + $0x38] sm:$0xff]
      %509 = vset.pattern.permute.xlu0 0
      %510 = vperm.xlu0 %509, %v500
      %v511 = vpop.permute.xlu0 %510
      %514 = vset.pattern.permute.xlu0 0
      %515 = vperm.xlu0 %514, %v501
      %v516 = vpop.permute.xlu0 %515
      %519 = vset.pattern.permute.xlu0 0
      %520 = vperm.xlu0 %519, %v502
      %v521 = vpop.permute.xlu0 %520
      %524 = vset.pattern.permute.xlu0 0
      %525 = vperm.xlu0 %524, %v503
      %v526 = vpop.permute.xlu0 %525
      %529 = vset.pattern.permute.xlu0 0
      %530 = vperm.xlu0 %529, %v504
      %v531 = vpop.permute.xlu0 %530
      %534 = vset.pattern.permute.xlu0 0
      %535 = vperm.xlu0 %534, %v505
      %v536 = vpop.permute.xlu0 %535
      %539 = vset.pattern.permute.xlu0 0
      %540 = vperm.xlu0 %539, %v506
      %v541 = vpop.permute.xlu0 %540
      %544 = vset.pattern.permute.xlu0 0
      %545 = vperm.xlu0 %544, %v507
      %v546 = vpop.permute.xlu0 %545
      %v556 = vunpack.c.l.b16 %v492
      %v557 = vunpack.c.l.b16 %v493
      %v558 = vunpack.c.l.b16 %v494
      %v559 = vunpack.c.l.b16 %v495
      %v560 = vunpack.c.l.b16 %v496
      %v561 = vunpack.c.l.b16 %v497
      %v562 = vunpack.c.l.b16 %v498
      %v563 = vunpack.c.l.b16 %v499
      %v564 = vpack.c.b16 %v557, %v556
      %v565 = vpack.c.b16 %v559, %v558
      %v566 = vpack.c.b16 %v561, %v560
      %v567 = vpack.c.b16 %v563, %v562
      %vm568 = vcmask 64512
      %v570 = vsel %vm568, %v564, 0
      %v573 = vsel %vm568, %v565, 0
      %v576 = vsel %vm568, %v566, 0
      %v579 = vsel %vm568, %v567, 0
      %vm581 = vcmask 1043456
      %v583 = vsel %vm581, %v491, 0
      %585 = vmatpush.bf16.msra.mxu0 0
      %586 = vmatpush.bf16.msra.mxu0 0
      %587 = vmatpush.bf16.msra.mxu0 0
      %588 = vmatpush.bf16.msra.mxu0 0
      %589 = vmatpush.bf16.msra.mxu0 0
      %590 = vmatpush.bf16.msra.mxu0 0
      %591 = vmatpush.bf16.msra.mxu0 0
      %592 = vmatpush.bf16.msra.mxu0 %v583
      %593 = vmatmul.bf16.gmra.mxu0 %v570
      %v594 = vpop.f32.mrf.mxu0
      %v595 = vadd.f32 %v511, %v594
      %v596 = vpop.f32.mrf.mxu0
      %v597 = vadd.f32 %v516, %v596
      %598 = vmatmul.bf16.gmra.mxu0 %v573
      %v599 = vpop.f32.mrf.mxu0
      %v600 = vadd.f32 %v521, %v599
      %v601 = vpop.f32.mrf.mxu0
      %v602 = vadd.f32 %v526, %v601
      %603 = vmatmul.bf16.gmra.mxu0 %v576
      %v604 = vpop.f32.mrf.mxu0
      %v605 = vadd.f32 %v531, %v604
      %v606 = vpop.f32.mrf.mxu0
      %v607 = vadd.f32 %v536, %v606
      %608 = vmatmul.bf16.gmra.mxu0 %v579
      %v609 = vpop.f32.mrf.mxu0
      %v610 = vadd.f32 %v541, %v609
      %v611 = vpop.f32.mrf.mxu0
      %v612 = vadd.f32 %v546, %v611
      %613 = vdwg.mxu0
      %v614 = vmul.f32 %v595, %v595
      %v615 = vmul.f32 %v597, %v597
      %v616 = vmul.f32 %v600, %v600
      %v617 = vmul.f32 %v602, %v602
      %v618 = vmul.f32 %v605, %v605
      %v619 = vmul.f32 %v607, %v607
      %v620 = vmul.f32 %v610, %v610
      %v621 = vmul.f32 %v612, %v612
      %v622 = vmul.f32 %v595, %v614
      %v623 = vmul.f32 %v597, %v615
      %v624 = vmul.f32 %v600, %v616
      %v625 = vmul.f32 %v602, %v617
      %v626 = vmul.f32 %v605, %v618
      %v627 = vmul.f32 %v607, %v619
      %v628 = vmul.f32 %v610, %v620
      %v629 = vmul.f32 %v612, %v621
      %v630 = vmul.f32 %v622, 0.044715
      %v631 = vmul.f32 %v623, 0.044715
      %v632 = vmul.f32 %v624, 0.044715
      %v633 = vmul.f32 %v625, 0.044715
      %v634 = vmul.f32 %v626, 0.044715
      %v635 = vmul.f32 %v627, 0.044715
      %v636 = vmul.f32 %v628, 0.044715
      %v637 = vmul.f32 %v629, 0.044715
      %v638 = vadd.f32 %v595, %v630
      %v639 = vadd.f32 %v597, %v631
      %v640 = vadd.f32 %v600, %v632
      %v641 = vadd.f32 %v602, %v633
      %v642 = vadd.f32 %v605, %v634
      %v643 = vadd.f32 %v607, %v635
      %v644 = vadd.f32 %v610, %v636
      %v645 = vadd.f32 %v612, %v637
      %v646 = vmul.f32 %v638, 0.7978846
      %v647 = vmul.f32 %v639, 0.7978846
      %v648 = vmul.f32 %v640, 0.7978846
      %v649 = vmul.f32 %v641, 0.7978846
      %v650 = vmul.f32 %v642, 0.7978846
      %v651 = vmul.f32 %v643, 0.7978846
      %v652 = vmul.f32 %v644, 0.7978846
      %v653 = vmul.f32 %v645, 0.7978846
      %v654 = vtanh.pop %v646
      %v655 = vtanh.pop %v647
      %v656 = vtanh.pop %v648
      %v657 = vtanh.pop %v649
      %v658 = vtanh.pop %v650
      %v659 = vtanh.pop %v651
      %v660 = vtanh.pop %v652
      %v661 = vtanh.pop %v653
      %v662 = vadd.f32 %v654, 1.0
      %v663 = vadd.f32 %v655, 1.0
      %v664 = vadd.f32 %v656, 1.0
      %v665 = vadd.f32 %v657, 1.0
      %v666 = vadd.f32 %v658, 1.0
      %v667 = vadd.f32 %v659, 1.0
      %v668 = vadd.f32 %v660, 1.0
      %v669 = vadd.f32 %v661, 1.0
      %v670 = vmul.f32 %v662, 0.5
      %v671 = vmul.f32 %v663, 0.5
      %v672 = vmul.f32 %v664, 0.5
      %v673 = vmul.f32 %v665, 0.5
      %v674 = vmul.f32 %v666, 0.5
      %v675 = vmul.f32 %v667, 0.5
      %v676 = vmul.f32 %v668, 0.5
      %v677 = vmul.f32 %v669, 0.5
      %v678 = vmul.f32 %v595, %v670
      %v679 = vmul.f32 %v597, %v671
      %v680 = vmul.f32 %v600, %v672
      %v681 = vmul.f32 %v602, %v673
      %v682 = vmul.f32 %v605, %v674
      %v683 = vmul.f32 %v607, %v675
      %v684 = vmul.f32 %v610, %v676
      %v685 = vmul.f32 %v612, %v677
      %v686 = vld [vmem:[%s5] sm:$0xf]
      %v687 = vld [vmem:[%s5 + $0x4] sm:$0xf]
      %v688 = vld [vmem:[%s5 + $0x8] sm:$0xf]
      %v689 = vld [vmem:[%s5 + $0xc] sm:$0xf]
      %v690 = vpack.c.bf16 %v679, %v678
      %v691 = vpack.c.bf16 %v681, %v680
      %v692 = vpack.c.bf16 %v683, %v682
      %v693 = vpack.c.bf16 %v685, %v684
      %v694 = vld [vmem:[%s6] sm:$0xff]
      %v695 = vld [vmem:[%s6 + $0x8] sm:$0xff]
      %v696 = vld [vmem:[%s6 + $0x10] sm:$0xff]
      %v697 = vld [vmem:[%s6 + $0x18] sm:$0xff]
      %699 = vset.pattern.permute.xlu0 0
      %700 = vperm.xlu0 %699, %v694
      %v701 = vpop.permute.xlu0 %700
      %704 = vset.pattern.permute.xlu0 0
      %705 = vperm.xlu0 %704, %v695
      %v706 = vpop.permute.xlu0 %705
      %709 = vset.pattern.permute.xlu0 0
      %710 = vperm.xlu0 %709, %v696
      %v711 = vpop.permute.xlu0 %710
      %714 = vset.pattern.permute.xlu0 0
      %715 = vperm.xlu0 %714, %v697
      %v716 = vpop.permute.xlu0 %715
      %v722 = vunpack.c.l.b16 %v686
      %v723 = vunpack.c.l.b16 %v687
      %v724 = vunpack.c.l.b16 %v688
      %v725 = vunpack.c.l.b16 %v689
      %v726 = vpack.c.b16 %v723, %v722
      %v727 = vpack.c.b16 %v725, %v724
      %vm728 = vcmask 523264
      %v730 = vsel %vm728, %v726, 0
      %v733 = vsel %vm728, %v727, 0
      %735 = vmatpush.bf16.msra.mxu0 0
      %736 = vmatpush.bf16.msra.mxu0 0
      %737 = vmatpush.bf16.msra.mxu0 0
      %738 = vmatpush.bf16.msra.mxu0 0
      %739 = vmatpush.bf16.msra.mxu0 %v693
      %740 = vmatpush.bf16.msra.mxu0 %v692
      %741 = vmatpush.bf16.msra.mxu0 %v691
      %742 = vmatpush.bf16.msra.mxu0 %v690
      %743 = vmatmul.bf16.gmra.mxu0 %v730
      %v744 = vpop.f32.mrf.mxu0
      %v745 = vadd.f32 %v701, %v744
      %v746 = vpop.f32.mrf.mxu0
      %v747 = vadd.f32 %v706, %v746
      %748 = vmatmul.bf16.gmra.mxu0 %v733
      %v749 = vpop.f32.mrf.mxu0
      %v750 = vadd.f32 %v711, %v749
      %v751 = vpop.f32.mrf.mxu0
      %v752 = vadd.f32 %v716, %v751
      %753 = vdwg.mxu0
      %v754 = vld [vmem:[%s1] sm:$0xf]
      %v755 = vld [vmem:[%s1 + $0x4] sm:$0xf]
      %v756 = vld [vmem:[%s2] sm:$0xf]
      %v757 = vld [vmem:[%s2 + $0x4] sm:$0xf]
      %v758 = vpack.c.bf16 %v747, %v745
      %v759 = vpack.c.bf16 %v752, %v750
      %v762 = vunpack.c.l.b16 %v754
      %v763 = vunpack.c.l.b16 %v755
      %v764 = vpack.c.b16 %v763, %v762
      %vm766 = vcmask 130048
      %v768 = vsel %vm766, %v758, 0
      %v771 = vsel %vm766, %v759, 0
      %773 = vmatpush.bf16.msra.mxu0 0
      %774 = vmatpush.bf16.msra.mxu0 0
      %775 = vmatpush.bf16.msra.mxu0 0
      %776 = vmatpush.bf16.msra.mxu0 0
      %777 = vmatpush.bf16.msra.mxu0 0
      %778 = vmatpush.bf16.msra.mxu0 0
      %779 = vmatpush.bf16.msra.mxu0 0
      %780 = vmatpush.bf16.msra.mxu0 %v764
      %781 = vmatmul.bf16.gmra.mxu0 %v768
      %v782 = vpop.f32.mrf.mxu0
      %v783 = vadd.f32 0.0, %v782
      %v784 = vpop.f32.mrf.mxu0
      %v785 = vadd.f32 0.0, %v784
      %786 = vmatmul.bf16.gmra.mxu0 %v771
      %v787 = vpop.f32.mrf.mxu0
      %v788 = vadd.f32 0.0, %v787
      %v789 = vpop.f32.mrf.mxu0
      %v790 = vadd.f32 0.0, %v789
      %791 = vdwg.mxu0
      %v792 = vld [vmem:[%s7] sm:$0xff]
      %v793 = vld [vmem:[%s7 + $0x8] sm:$0xff]
      %v794 = vld [vmem:[%s7 + $0x10] sm:$0xff]
      %v795 = vld [vmem:[%s7 + $0x18] sm:$0xff]
      %v796 = vld [vmem:[%s7 + $0x20] sm:$0xff]
      %v797 = vld [vmem:[%s7 + $0x28] sm:$0xff]
      %v798 = vld [vmem:[%s7 + $0x30] sm:$0xff]
      %v799 = vld [vmem:[%s7 + $0x38] sm:$0xff]
      %v800 = vld [vmem:[%s7 + $0x40] sm:$0xff]
      %v801 = vld [vmem:[%s7 + $0x48] sm:$0xff]
      %v802 = vld [vmem:[%s7 + $0x50] sm:$0xff]
      %v803 = vld [vmem:[%s7 + $0x58] sm:$0xff]
      %v804 = vld [vmem:[%s7 + $0x60] sm:$0xff]
      %v805 = vld [vmem:[%s7 + $0x68] sm:$0xff]
      %v806 = vld [vmem:[%s7 + $0x70] sm:$0xff]
      %v807 = vld [vmem:[%s7 + $0x78] sm:$0xff]
      %v808 = vld [vmem:[%s7 + $0x80] sm:$0xff]
      %v809 = vld [vmem:[%s7 + $0x88] sm:$0xff]
      %v810 = vld [vmem:[%s7 + $0x90] sm:$0xff]
      %v811 = vld [vmem:[%s7 + $0x98] sm:$0xff]
      %v812 = vld [vmem:[%s7 + $0xa0] sm:$0xff]
      %v813 = vld [vmem:[%s7 + $0xa8] sm:$0xff]
      %v814 = vld [vmem:[%s7 + $0xb0] sm:$0xff]
      %v815 = vld [vmem:[%s7 + $0xb8] sm:$0xff]
      %v816 = vld [vmem:[%s7 + $0xc0] sm:$0xff]
      %v817 = vld [vmem:[%s7 + $0xc8] sm:$0xff]
      %v818 = vld [vmem:[%s7 + $0xd0] sm:$0xff]
      %v819 = vld [vmem:[%s7 + $0xd8] sm:$0xff]
      %v820 = vld [vmem:[%s7 + $0xe0] sm:$0xff]
      %v821 = vld [vmem:[%s7 + $0xe8] sm:$0xff]
      %v822 = vld [vmem:[%s7 + $0xf0] sm:$0xff]
      %v823 = vld [vmem:[%s7 + $0xf8] sm:$0xff]
      %v824 = vld [vmem:[%s7 + $0x100] sm:$0xff]
      %v825 = vld [vmem:[%s7 + $0x108] sm:$0xff]
      %v826 = vld [vmem:[%s7 + $0x110] sm:$0xff]
      %v827 = vld [vmem:[%s7 + $0x118] sm:$0xff]
      %v828 = vld [vmem:[%s7 + $0x120] sm:$0xff]
      %v829 = vld [vmem:[%s7 + $0x128] sm:$0xff]
      %v830 = vld [vmem:[%s7 + $0x130] sm:$0xff]
      %v831 = vld [vmem:[%s7 + $0x138] sm:$0xff]
      %v832 = vld [vmem:[%s7 + $0x140] sm:$0xff]
      %v833 = vld [vmem:[%s7 + $0x148] sm:$0xff]
      %v834 = vld [vmem:[%s7 + $0x150] sm:$0xff]
      %v835 = vld [vmem:[%s7 + $0x158] sm:$0xff]
      %v836 = vld [vmem:[%s7 + $0x160] sm:$0xff]
      %v837 = vld [vmem:[%s7 + $0x168] sm:$0xff]
      %v838 = vld [vmem:[%s7 + $0x170] sm:$0xff]
      %v839 = vld [vmem:[%s7 + $0x178] sm:$0xff]
      %v840 = vld [vmem:[%s7 + $0x180] sm:$0xff]
      %v841 = vld [vmem:[%s7 + $0x188] sm:$0xff]
      %v842 = vld [vmem:[%s7 + $0x190] sm:$0xff]
      %v843 = vld [vmem:[%s7 + $0x198] sm:$0xff]
      %v844 = vld [vmem:[%s7 + $0x1a0] sm:$0xff]
      %v845 = vld [vmem:[%s7 + $0x1a8] sm:$0xff]
      %v846 = vld [vmem:[%s7 + $0x1b0] sm:$0xff]
      %v847 = vld [vmem:[%s7 + $0x1b8] sm:$0xff]
      %v848 = vld [vmem:[%s7 + $0x1c0] sm:$0xff]
      %v849 = vld [vmem:[%s7 + $0x1c8] sm:$0xff]
      %v850 = vld [vmem:[%s7 + $0x1d0] sm:$0xff]
      %v851 = vld [vmem:[%s7 + $0x1d8] sm:$0xff]
      %v852 = vld [vmem:[%s7 + $0x1e0] sm:$0xff]
      %v853 = vld [vmem:[%s7 + $0x1e8] sm:$0xff]
      %v854 = vld [vmem:[%s7 + $0x1f0] sm:$0xff]
      %v855 = vld [vmem:[%s7 + $0x1f8] sm:$0xff]
      %v856 = vld [vmem:[%s7 + $0x200] sm:$0xff]
      %v857 = vld [vmem:[%s7 + $0x208] sm:$0xff]
      %v858 = vld [vmem:[%s7 + $0x210] sm:$0xff]
      %v859 = vld [vmem:[%s7 + $0x218] sm:$0xff]
      %v860 = vld [vmem:[%s7 + $0x220] sm:$0xff]
      %v861 = vld [vmem:[%s7 + $0x228] sm:$0xff]
      %v862 = vld [vmem:[%s7 + $0x230] sm:$0xff]
      %v863 = vld [vmem:[%s7 + $0x238] sm:$0xff]
      %v864 = vld [vmem:[%s7 + $0x240] sm:$0xff]
      %v865 = vld [vmem:[%s7 + $0x248] sm:$0xff]
      %v866 = vld [vmem:[%s7 + $0x250] sm:$0xff]
      %v867 = vld [vmem:[%s7 + $0x258] sm:$0xff]
      %v868 = vld [vmem:[%s7 + $0x260] sm:$0xff]
      %v869 = vld [vmem:[%s7 + $0x268] sm:$0xff]
      %v870 = vld [vmem:[%s7 + $0x270] sm:$0xff]
      %v871 = vld [vmem:[%s7 + $0x278] sm:$0xff]
      %v872 = vld [vmem:[%s7 + $0x280] sm:$0xff]
      %v873 = vld [vmem:[%s7 + $0x288] sm:$0xff]
      %v874 = vld [vmem:[%s7 + $0x290] sm:$0xff]
      %v875 = vld [vmem:[%s7 + $0x298] sm:$0xff]
      %v876 = vld [vmem:[%s7 + $0x2a0] sm:$0xff]
      %v877 = vld [vmem:[%s7 + $0x2a8] sm:$0xff]
      %v878 = vld [vmem:[%s7 + $0x2b0] sm:$0xff]
      %v879 = vld [vmem:[%s7 + $0x2b8] sm:$0xff]
      %v880 = vld [vmem:[%s7 + $0x2c0] sm:$0xff]
      %v881 = vld [vmem:[%s7 + $0x2c8] sm:$0xff]
      %v882 = vld [vmem:[%s7 + $0x2d0] sm:$0xff]
      %v883 = vld [vmem:[%s7 + $0x2d8] sm:$0xff]
      %v884 = vld [vmem:[%s7 + $0x2e0] sm:$0xff]
      %v885 = vld [vmem:[%s7 + $0x2e8] sm:$0xff]
      %v886 = vld [vmem:[%s7 + $0x2f0] sm:$0xff]
      %v887 = vld [vmem:[%s7 + $0x2f8] sm:$0xff]
      %v888 = vld [vmem:[%s7 + $0x300] sm:$0xff]
      %v889 = vld [vmem:[%s7 + $0x308] sm:$0xff]
      %v890 = vld [vmem:[%s7 + $0x310] sm:$0xff]
      %v891 = vld [vmem:[%s7 + $0x318] sm:$0xff]
      %v892 = vld [vmem:[%s7 + $0x320] sm:$0xff]
      %v893 = vld [vmem:[%s7 + $0x328] sm:$0xff]
      %v894 = vld [vmem:[%s7 + $0x330] sm:$0xff]
      %v895 = vld [vmem:[%s7 + $0x338] sm:$0xff]
      %v896 = vld [vmem:[%s7 + $0x340] sm:$0xff]
      %v897 = vld [vmem:[%s7 + $0x348] sm:$0xff]
      %v898 = vld [vmem:[%s7 + $0x350] sm:$0xff]
      %v899 = vld [vmem:[%s7 + $0x358] sm:$0xff]
      %v900 = vld [vmem:[%s7 + $0x360] sm:$0xff]
      %v901 = vld [vmem:[%s7 + $0x368] sm:$0xff]
      %v902 = vld [vmem:[%s7 + $0x370] sm:$0xff]
      %v903 = vld [vmem:[%s7 + $0x378] sm:$0xff]
      %v904 = vld [vmem:[%s7 + $0x380] sm:$0xff]
      %v905 = vld [vmem:[%s7 + $0x388] sm:$0xff]
      %v906 = vld [vmem:[%s7 + $0x390] sm:$0xff]
      %v907 = vld [vmem:[%s7 + $0x398] sm:$0xff]
      %v908 = vld [vmem:[%s7 + $0x3a0] sm:$0xff]
      %v909 = vld [vmem:[%s7 + $0x3a8] sm:$0xff]
      %v910 = vld [vmem:[%s7 + $0x3b0] sm:$0xff]
      %v911 = vld [vmem:[%s7 + $0x3b8] sm:$0xff]
      %v912 = vld [vmem:[%s7 + $0x3c0] sm:$0xff]
      %v913 = vld [vmem:[%s7 + $0x3c8] sm:$0xff]
      %v914 = vld [vmem:[%s7 + $0x3d0] sm:$0xff]
      %v915 = vld [vmem:[%s7 + $0x3d8] sm:$0xff]
      %v916 = vld [vmem:[%s7 + $0x3e0] sm:$0xff]
      %v917 = vld [vmem:[%s7 + $0x3e8] sm:$0xff]
      %v918 = vld [vmem:[%s7 + $0x3f0] sm:$0xff]
      %v919 = vld [vmem:[%s7 + $0x3f8] sm:$0xff]
      %v920 = vld [vmem:[%s8] sm:$0xff]
      %v921 = vld [vmem:[%s8 + $0x8] sm:$0xff]
      %v922 = vld [vmem:[%s8 + $0x10] sm:$0xff]
      %v923 = vld [vmem:[%s8 + $0x18] sm:$0xff]
      %v924 = vld [vmem:[%s8 + $0x20] sm:$0xff]
      %v925 = vld [vmem:[%s8 + $0x28] sm:$0xff]
      %v926 = vld [vmem:[%s8 + $0x30] sm:$0xff]
      %v927 = vld [vmem:[%s8 + $0x38] sm:$0xff]
      %v928 = vld [vmem:[%s8 + $0x40] sm:$0xff]
      %v929 = vld [vmem:[%s8 + $0x48] sm:$0xff]
      %v930 = vld [vmem:[%s8 + $0x50] sm:$0xff]
      %v931 = vld [vmem:[%s8 + $0x58] sm:$0xff]
      %v932 = vld [vmem:[%s8 + $0x60] sm:$0xff]
      %v933 = vld [vmem:[%s8 + $0x68] sm:$0xff]
      %v934 = vld [vmem:[%s8 + $0x70] sm:$0xff]
      %v935 = vld [vmem:[%s8 + $0x78] sm:$0xff]
      %v936 = vld [vmem:[%s8 + $0x80] sm:$0xff]
      %v937 = vld [vmem:[%s8 + $0x88] sm:$0xff]
      %v938 = vld [vmem:[%s8 + $0x90] sm:$0xff]
      %v939 = vld [vmem:[%s8 + $0x98] sm:$0xff]
      %v940 = vld [vmem:[%s8 + $0xa0] sm:$0xff]
      %v941 = vld [vmem:[%s8 + $0xa8] sm:$0xff]
      %v942 = vld [vmem:[%s8 + $0xb0] sm:$0xff]
      %v943 = vld [vmem:[%s8 + $0xb8] sm:$0xff]
      %v944 = vld [vmem:[%s8 + $0xc0] sm:$0xff]
      %v945 = vld [vmem:[%s8 + $0xc8] sm:$0xff]
      %v946 = vld [vmem:[%s8 + $0xd0] sm:$0xff]
      %v947 = vld [vmem:[%s8 + $0xd8] sm:$0xff]
      %v948 = vld [vmem:[%s8 + $0xe0] sm:$0xff]
      %v949 = vld [vmem:[%s8 + $0xe8] sm:$0xff]
      %v950 = vld [vmem:[%s8 + $0xf0] sm:$0xff]
      %v951 = vld [vmem:[%s8 + $0xf8] sm:$0xff]
      %v952 = vld [vmem:[%s8 + $0x100] sm:$0xff]
      %v953 = vld [vmem:[%s8 + $0x108] sm:$0xff]
      %v954 = vld [vmem:[%s8 + $0x110] sm:$0xff]
      %v955 = vld [vmem:[%s8 + $0x118] sm:$0xff]
      %v956 = vld [vmem:[%s8 + $0x120] sm:$0xff]
      %v957 = vld [vmem:[%s8 + $0x128] sm:$0xff]
      %v958 = vld [vmem:[%s8 + $0x130] sm:$0xff]
      %v959 = vld [vmem:[%s8 + $0x138] sm:$0xff]
      %v960 = vld [vmem:[%s8 + $0x140] sm:$0xff]
      %v961 = vld [vmem:[%s8 + $0x148] sm:$0xff]
      %v962 = vld [vmem:[%s8 + $0x150] sm:$0xff]
      %v963 = vld [vmem:[%s8 + $0x158] sm:$0xff]
      %v964 = vld [vmem:[%s8 + $0x160] sm:$0xff]
      %v965 = vld [vmem:[%s8 + $0x168] sm:$0xff]
      %v966 = vld [vmem:[%s8 + $0x170] sm:$0xff]
      %v967 = vld [vmem:[%s8 + $0x178] sm:$0xff]
      %v968 = vld [vmem:[%s8 + $0x180] sm:$0xff]
      %v969 = vld [vmem:[%s8 + $0x188] sm:$0xff]
      %v970 = vld [vmem:[%s8 + $0x190] sm:$0xff]
      %v971 = vld [vmem:[%s8 + $0x198] sm:$0xff]
      %v972 = vld [vmem:[%s8 + $0x1a0] sm:$0xff]
      %v973 = vld [vmem:[%s8 + $0x1a8] sm:$0xff]
      %v974 = vld [vmem:[%s8 + $0x1b0] sm:$0xff]
      %v975 = vld [vmem:[%s8 + $0x1b8] sm:$0xff]
      %v976 = vld [vmem:[%s8 + $0x1c0] sm:$0xff]
      %v977 = vld [vmem:[%s8 + $0x1c8] sm:$0xff]
      %v978 = vld [vmem:[%s8 + $0x1d0] sm:$0xff]
      %v979 = vld [vmem:[%s8 + $0x1d8] sm:$0xff]
      %v980 = vld [vmem:[%s8 + $0x1e0] sm:$0xff]
      %v981 = vld [vmem:[%s8 + $0x1e8] sm:$0xff]
      %v982 = vld [vmem:[%s8 + $0x1f0] sm:$0xff]
      %v983 = vld [vmem:[%s8 + $0x1f8] sm:$0xff]
      %v984 = vld [vmem:[%s8 + $0x200] sm:$0xff]
      %v985 = vld [vmem:[%s8 + $0x208] sm:$0xff]
      %v986 = vld [vmem:[%s8 + $0x210] sm:$0xff]
      %v987 = vld [vmem:[%s8 + $0x218] sm:$0xff]
      %v988 = vld [vmem:[%s8 + $0x220] sm:$0xff]
      %v989 = vld [vmem:[%s8 + $0x228] sm:$0xff]
      %v990 = vld [vmem:[%s8 + $0x230] sm:$0xff]
      %v991 = vld [vmem:[%s8 + $0x238] sm:$0xff]
      %v992 = vld [vmem:[%s8 + $0x240] sm:$0xff]
      %v993 = vld [vmem:[%s8 + $0x248] sm:$0xff]
      %v994 = vld [vmem:[%s8 + $0x250] sm:$0xff]
      %v995 = vld [vmem:[%s8 + $0x258] sm:$0xff]
      %v996 = vld [vmem:[%s8 + $0x260] sm:$0xff]
      %v997 = vld [vmem:[%s8 + $0x268] sm:$0xff]
      %v998 = vld [vmem:[%s8 + $0x270] sm:$0xff]
      %v999 = vld [vmem:[%s8 + $0x278] sm:$0xff]
      %v1000 = vld [vmem:[%s8 + $0x280] sm:$0xff]
      %v1001 = vld [vmem:[%s8 + $0x288] sm:$0xff]
      %v1002 = vld [vmem:[%s8 + $0x290] sm:$0xff]
      %v1003 = vld [vmem:[%s8 + $0x298] sm:$0xff]
      %v1004 = vld [vmem:[%s8 + $0x2a0] sm:$0xff]
      %v1005 = vld [vmem:[%s8 + $0x2a8] sm:$0xff]
      %v1006 = vld [vmem:[%s8 + $0x2b0] sm:$0xff]
      %v1007 = vld [vmem:[%s8 + $0x2b8] sm:$0xff]
      %v1008 = vld [vmem:[%s8 + $0x2c0] sm:$0xff]
      %v1009 = vld [vmem:[%s8 + $0x2c8] sm:$0xff]
      %v1010 = vld [vmem:[%s8 + $0x2d0] sm:$0xff]
      %v1011 = vld [vmem:[%s8 + $0x2d8] sm:$0xff]
      %v1012 = vld [vmem:[%s8 + $0x2e0] sm:$0xff]
      %v1013 = vld [vmem:[%s8 + $0x2e8] sm:$0xff]
      %v1014 = vld [vmem:[%s8 + $0x2f0] sm:$0xff]
      %v1015 = vld [vmem:[%s8 + $0x2f8] sm:$0xff]
      %v1016 = vld [vmem:[%s8 + $0x300] sm:$0xff]
      %v1017 = vld [vmem:[%s8 + $0x308] sm:$0xff]
      %v1018 = vld [vmem:[%s8 + $0x310] sm:$0xff]
      %v1019 = vld [vmem:[%s8 + $0x318] sm:$0xff]
      %v1020 = vld [vmem:[%s8 + $0x320] sm:$0xff]
      %v1021 = vld [vmem:[%s8 + $0x328] sm:$0xff]
      %v1022 = vld [vmem:[%s8 + $0x330] sm:$0xff]
      %v1023 = vld [vmem:[%s8 + $0x338] sm:$0xff]
      %v1024 = vld [vmem:[%s8 + $0x340] sm:$0xff]
      %v1025 = vld [vmem:[%s8 + $0x348] sm:$0xff]
      %v1026 = vld [vmem:[%s8 + $0x350] sm:$0xff]
      %v1027 = vld [vmem:[%s8 + $0x358] sm:$0xff]
      %v1028 = vld [vmem:[%s8 + $0x360] sm:$0xff]
      %v1029 = vld [vmem:[%s8 + $0x368] sm:$0xff]
      %v1030 = vld [vmem:[%s8 + $0x370] sm:$0xff]
      %v1031 = vld [vmem:[%s8 + $0x378] sm:$0xff]
      %v1032 = vld [vmem:[%s8 + $0x380] sm:$0xff]
      %v1033 = vld [vmem:[%s8 + $0x388] sm:$0xff]
      %v1034 = vld [vmem:[%s8 + $0x390] sm:$0xff]
      %v1035 = vld [vmem:[%s8 + $0x398] sm:$0xff]
      %v1036 = vld [vmem:[%s8 + $0x3a0] sm:$0xff]
      %v1037 = vld [vmem:[%s8 + $0x3a8] sm:$0xff]
      %v1038 = vld [vmem:[%s8 + $0x3b0] sm:$0xff]
      %v1039 = vld [vmem:[%s8 + $0x3b8] sm:$0xff]
      %v1040 = vld [vmem:[%s8 + $0x3c0] sm:$0xff]
      %v1041 = vld [vmem:[%s8 + $0x3c8] sm:$0xff]
      %v1042 = vld [vmem:[%s8 + $0x3d0] sm:$0xff]
      %v1043 = vld [vmem:[%s8 + $0x3d8] sm:$0xff]
      %v1044 = vld [vmem:[%s8 + $0x3e0] sm:$0xff]
      %v1045 = vld [vmem:[%s8 + $0x3e8] sm:$0xff]
      %v1046 = vld [vmem:[%s8 + $0x3f0] sm:$0xff]
      %v1047 = vld [vmem:[%s8 + $0x3f8] sm:$0xff]
      %v1052 = vrot.slane %v783, 1
      %v1053 = vrot.slane %v783, 2
      %v1054 = vrot.slane %v783, 3
      %v1055 = vrot.slane %v783, 4
      %v1056 = vrot.slane %v783, 5
      %v1057 = vrot.slane %v783, 6
      %v1058 = vrot.slane %v783, 7
      %v1059 = vrot.slane %v785, 1
      %v1060 = vrot.slane %v785, 2
      %v1061 = vrot.slane %v785, 3
      %v1062 = vrot.slane %v785, 4
      %v1063 = vrot.slane %v785, 5
      %v1064 = vrot.slane %v785, 6
      %v1065 = vrot.slane %v785, 7
      %v1066 = vrot.slane %v788, 1
      %v1067 = vrot.slane %v788, 2
      %v1068 = vrot.slane %v788, 3
      %v1069 = vrot.slane %v788, 4
      %v1070 = vrot.slane %v788, 5
      %v1071 = vrot.slane %v788, 6
      %v1072 = vrot.slane %v788, 7
      %v1073 = vrot.slane %v790, 1
      %v1074 = vrot.slane %v790, 2
      %v1075 = vrot.slane %v790, 3
      %v1076 = vrot.slane %v790, 4
      %v1077 = vrot.slane %v790, 5
      %v1078 = vrot.slane %v790, 6
      %v1079 = vrot.slane %v790, 7
      %v1080 = vperm.slane %v783, 0
      %v1081 = vperm.slane %v1052, 0
      %v1082 = vperm.slane %v1053, 0
      %v1083 = vperm.slane %v1054, 0
      %v1084 = vperm.slane %v1055, 0
      %v1085 = vperm.slane %v1056, 0
      %v1086 = vperm.slane %v1057, 0
      %v1087 = vperm.slane %v1058, 0
      %v1088 = vperm.slane %v785, 0
      %v1089 = vperm.slane %v1059, 0
      %v1090 = vperm.slane %v1060, 0
      %v1091 = vperm.slane %v1061, 0
      %v1092 = vperm.slane %v1062, 0
      %v1093 = vperm.slane %v1063, 0
      %v1094 = vperm.slane %v1064, 0
      %v1095 = vperm.slane %v1065, 0
      %v1096 = vperm.slane %v788, 0
      %v1097 = vperm.slane %v1066, 0
      %v1098 = vperm.slane %v1067, 0
      %v1099 = vperm.slane %v1068, 0
      %v1100 = vperm.slane %v1069, 0
      %v1101 = vperm.slane %v1070, 0
      %v1102 = vperm.slane %v1071, 0
      %v1103 = vperm.slane %v1072, 0
      %v1104 = vperm.slane %v790, 0
      %v1105 = vperm.slane %v1073, 0
      %v1106 = vperm.slane %v1074, 0
      %v1107 = vperm.slane %v1075, 0
      %v1108 = vperm.slane %v1076, 0
      %v1109 = vperm.slane %v1077, 0
      %v1110 = vperm.slane %v1078, 0
      %v1111 = vperm.slane %v1079, 0
      %v1144 = vmul.f32 %v792, %v1080
      %v1145 = vmul.f32 %v793, %v1080
      %v1146 = vmul.f32 %v794, %v1080
      %v1147 = vmul.f32 %v795, %v1080
      %v1148 = vmul.f32 %v796, %v1081
      %v1149 = vmul.f32 %v797, %v1081
      %v1150 = vmul.f32 %v798, %v1081
      %v1151 = vmul.f32 %v799, %v1081
      %v1152 = vmul.f32 %v800, %v1082
      %v1153 = vmul.f32 %v801, %v1082
      %v1154 = vmul.f32 %v802, %v1082
      %v1155 = vmul.f32 %v803, %v1082
      %v1156 = vmul.f32 %v804, %v1083
      %v1157 = vmul.f32 %v805, %v1083
      %v1158 = vmul.f32 %v806, %v1083
      %v1159 = vmul.f32 %v807, %v1083
      %v1160 = vmul.f32 %v808, %v1084
      %v1161 = vmul.f32 %v809, %v1084
      %v1162 = vmul.f32 %v810, %v1084
      %v1163 = vmul.f32 %v811, %v1084
      %v1164 = vmul.f32 %v812, %v1085
      %v1165 = vmul.f32 %v813, %v1085
      %v1166 = vmul.f32 %v814, %v1085
      %v1167 = vmul.f32 %v815, %v1085
      %v1168 = vmul.f32 %v816, %v1086
      %v1169 = vmul.f32 %v817, %v1086
      %v1170 = vmul.f32 %v818, %v1086
      %v1171 = vmul.f32 %v819, %v1086
      %v1172 = vmul.f32 %v820, %v1087
      %v1173 = vmul.f32 %v821, %v1087
      %v1174 = vmul.f32 %v822, %v1087
      %v1175 = vmul.f32 %v823, %v1087
      %v1176 = vmul.f32 %v824, %v1088
      %v1177 = vmul.f32 %v825, %v1088
      %v1178 = vmul.f32 %v826, %v1088
      %v1179 = vmul.f32 %v827, %v1088
      %v1180 = vmul.f32 %v828, %v1089
      %v1181 = vmul.f32 %v829, %v1089
      %v1182 = vmul.f32 %v830, %v1089
      %v1183 = vmul.f32 %v831, %v1089
      %v1184 = vmul.f32 %v832, %v1090
      %v1185 = vmul.f32 %v833, %v1090
      %v1186 = vmul.f32 %v834, %v1090
      %v1187 = vmul.f32 %v835, %v1090
      %v1188 = vmul.f32 %v836, %v1091
      %v1189 = vmul.f32 %v837, %v1091
      %v1190 = vmul.f32 %v838, %v1091
      %v1191 = vmul.f32 %v839, %v1091
      %v1192 = vmul.f32 %v840, %v1092
      %v1193 = vmul.f32 %v841, %v1092
      %v1194 = vmul.f32 %v842, %v1092
      %v1195 = vmul.f32 %v843, %v1092
      %v1196 = vmul.f32 %v844, %v1093
      %v1197 = vmul.f32 %v845, %v1093
      %v1198 = vmul.f32 %v846, %v1093
      %v1199 = vmul.f32 %v847, %v1093
      %v1200 = vmul.f32 %v848, %v1094
      %v1201 = vmul.f32 %v849, %v1094
      %v1202 = vmul.f32 %v850, %v1094
      %v1203 = vmul.f32 %v851, %v1094
      %v1204 = vmul.f32 %v852, %v1095
      %v1205 = vmul.f32 %v853, %v1095
      %v1206 = vmul.f32 %v854, %v1095
      %v1207 = vmul.f32 %v855, %v1095
      %v1208 = vmul.f32 %v856, %v1096
      %v1209 = vmul.f32 %v857, %v1096
      %v1210 = vmul.f32 %v858, %v1096
      %v1211 = vmul.f32 %v859, %v1096
      %v1212 = vmul.f32 %v860, %v1097
      %v1213 = vmul.f32 %v861, %v1097
      %v1214 = vmul.f32 %v862, %v1097
      %v1215 = vmul.f32 %v863, %v1097
      %v1216 = vmul.f32 %v864, %v1098
      %v1217 = vmul.f32 %v865, %v1098
      %v1218 = vmul.f32 %v866, %v1098
      %v1219 = vmul.f32 %v867, %v1098
      %v1220 = vmul.f32 %v868, %v1099
      %v1221 = vmul.f32 %v869, %v1099
      %v1222 = vmul.f32 %v870, %v1099
      %v1223 = vmul.f32 %v871, %v1099
      %v1224 = vmul.f32 %v872, %v1100
      %v1225 = vmul.f32 %v873, %v1100
      %v1226 = vmul.f32 %v874, %v1100
      %v1227 = vmul.f32 %v875, %v1100
      %v1228 = vmul.f32 %v876, %v1101
      %v1229 = vmul.f32 %v877, %v1101
      %v1230 = vmul.f32 %v878, %v1101
      %v1231 = vmul.f32 %v879, %v1101
      %v1232 = vmul.f32 %v880, %v1102
      %v1233 = vmul.f32 %v881, %v1102
      %v1234 = vmul.f32 %v882, %v1102
      %v1235 = vmul.f32 %v883, %v1102
      %v1236 = vmul.f32 %v884, %v1103
      %v1237 = vmul.f32 %v885, %v1103
      %v1238 = vmul.f32 %v886, %v1103
      %v1239 = vmul.f32 %v887, %v1103
      %v1240 = vmul.f32 %v888, %v1104
      %v1241 = vmul.f32 %v889, %v1104
      %v1242 = vmul.f32 %v890, %v1104
      %v1243 = vmul.f32 %v891, %v1104
      %v1244 = vmul.f32 %v892, %v1105
      %v1245 = vmul.f32 %v893, %v1105
      %v1246 = vmul.f32 %v894, %v1105
      %v1247 = vmul.f32 %v895, %v1105
      %v1248 = vmul.f32 %v896, %v1106
      %v1249 = vmul.f32 %v897, %v1106
      %v1250 = vmul.f32 %v898, %v1106
      %v1251 = vmul.f32 %v899, %v1106
      %v1252 = vmul.f32 %v900, %v1107
      %v1253 = vmul.f32 %v901, %v1107
      %v1254 = vmul.f32 %v902, %v1107
      %v1255 = vmul.f32 %v903, %v1107
      %v1256 = vmul.f32 %v904, %v1108
      %v1257 = vmul.f32 %v905, %v1108
      %v1258 = vmul.f32 %v906, %v1108
      %v1259 = vmul.f32 %v907, %v1108
      %v1260 = vmul.f32 %v908, %v1109
      %v1261 = vmul.f32 %v909, %v1109
      %v1262 = vmul.f32 %v910, %v1109
      %v1263 = vmul.f32 %v911, %v1109
      %v1264 = vmul.f32 %v912, %v1110
      %v1265 = vmul.f32 %v913, %v1110
      %v1266 = vmul.f32 %v914, %v1110
      %v1267 = vmul.f32 %v915, %v1110
      %v1268 = vmul.f32 %v916, %v1111
      %v1269 = vmul.f32 %v917, %v1111
      %v1270 = vmul.f32 %v918, %v1111
      %v1271 = vmul.f32 %v919, %v1111
      %1272 = vrot.lane.b32.xlu0 %v1080, 120
      %v1273 = vpop.permute.xlu0 %1272
      %1274 = vrot.lane.b32.xlu0 %v1081, 120
      %v1275 = vpop.permute.xlu0 %1274
      %1276 = vrot.lane.b32.xlu0 %v1082, 120
      %v1277 = vpop.permute.xlu0 %1276
      %1278 = vrot.lane.b32.xlu0 %v1083, 120
      %v1279 = vpop.permute.xlu0 %1278
      %1280 = vrot.lane.b32.xlu0 %v1084, 120
      %v1281 = vpop.permute.xlu0 %1280
      %1282 = vrot.lane.b32.xlu0 %v1085, 120
      %v1283 = vpop.permute.xlu0 %1282
      %1284 = vrot.lane.b32.xlu0 %v1086, 120
      %v1285 = vpop.permute.xlu0 %1284
      %1286 = vrot.lane.b32.xlu0 %v1087, 120
      %v1287 = vpop.permute.xlu0 %1286
      %1288 = vrot.lane.b32.xlu0 %v1088, 120
      %v1289 = vpop.permute.xlu0 %1288
      %1290 = vrot.lane.b32.xlu0 %v1089, 120
      %v1291 = vpop.permute.xlu0 %1290
      %1292 = vrot.lane.b32.xlu0 %v1090, 120
      %v1293 = vpop.permute.xlu0 %1292
      %1294 = vrot.lane.b32.xlu0 %v1091, 120
      %v1295 = vpop.permute.xlu0 %1294
      %1296 = vrot.lane.b32.xlu0 %v1092, 120
      %v1297 = vpop.permute.xlu0 %1296
      %1298 = vrot.lane.b32.xlu0 %v1093, 120
      %v1299 = vpop.permute.xlu0 %1298
      %1300 = vrot.lane.b32.xlu0 %v1094, 120
      %v1301 = vpop.permute.xlu0 %1300
      %1302 = vrot.lane.b32.xlu0 %v1095, 120
      %v1303 = vpop.permute.xlu0 %1302
      %1304 = vrot.lane.b32.xlu0 %v1096, 120
      %v1305 = vpop.permute.xlu0 %1304
      %1306 = vrot.lane.b32.xlu0 %v1097, 120
      %v1307 = vpop.permute.xlu0 %1306
      %1308 = vrot.lane.b32.xlu0 %v1098, 120
      %v1309 = vpop.permute.xlu0 %1308
      %1310 = vrot.lane.b32.xlu0 %v1099, 120
      %v1311 = vpop.permute.xlu0 %1310
      %1312 = vrot.lane.b32.xlu0 %v1100, 120
      %v1313 = vpop.permute.xlu0 %1312
      %1314 = vrot.lane.b32.xlu0 %v1101, 120
      %v1315 = vpop.permute.xlu0 %1314
      %1316 = vrot.lane.b32.xlu0 %v1102, 120
      %v1317 = vpop.permute.xlu0 %1316
      %1318 = vrot.lane.b32.xlu0 %v1103, 120
      %v1319 = vpop.permute.xlu0 %1318
      %1320 = vrot.lane.b32.xlu0 %v1104, 120
      %v1321 = vpop.permute.xlu0 %1320
      %1322 = vrot.lane.b32.xlu0 %v1105, 120
      %v1323 = vpop.permute.xlu0 %1322
      %1324 = vrot.lane.b32.xlu0 %v1106, 120
      %v1325 = vpop.permute.xlu0 %1324
      %1326 = vrot.lane.b32.xlu0 %v1107, 120
      %v1327 = vpop.permute.xlu0 %1326
      %1328 = vrot.lane.b32.xlu0 %v1108, 120
      %v1329 = vpop.permute.xlu0 %1328
      %1330 = vrot.lane.b32.xlu0 %v1109, 120
      %v1331 = vpop.permute.xlu0 %1330
      %1332 = vrot.lane.b32.xlu0 %v1110, 120
      %v1333 = vpop.permute.xlu0 %1332
      %1334 = vrot.lane.b32.xlu0 %v1111, 120
      %v1335 = vpop.permute.xlu0 %1334
      %v1368 = vmul.f32 %v920, %v1273
      %v1369 = vmul.f32 %v921, %v1273
      %v1370 = vmul.f32 %v922, %v1273
      %v1371 = vmul.f32 %v923, %v1273
      %v1372 = vmul.f32 %v924, %v1275
      %v1373 = vmul.f32 %v925, %v1275
      %v1374 = vmul.f32 %v926, %v1275
      %v1375 = vmul.f32 %v927, %v1275
      %v1376 = vmul.f32 %v928, %v1277
      %v1377 = vmul.f32 %v929, %v1277
      %v1378 = vmul.f32 %v930, %v1277
      %v1379 = vmul.f32 %v931, %v1277
      %v1380 = vmul.f32 %v932, %v1279
      %v1381 = vmul.f32 %v933, %v1279
      %v1382 = vmul.f32 %v934, %v1279
      %v1383 = vmul.f32 %v935, %v1279
      %v1384 = vmul.f32 %v936, %v1281
      %v1385 = vmul.f32 %v937, %v1281
      %v1386 = vmul.f32 %v938, %v1281
      %v1387 = vmul.f32 %v939, %v1281
      %v1388 = vmul.f32 %v940, %v1283
      %v1389 = vmul.f32 %v941, %v1283
      %v1390 = vmul.f32 %v942, %v1283
      %v1391 = vmul.f32 %v943, %v1283
      %v1392 = vmul.f32 %v944, %v1285
      %v1393 = vmul.f32 %v945, %v1285
      %v1394 = vmul.f32 %v946, %v1285
      %v1395 = vmul.f32 %v947, %v1285
      %v1396 = vmul.f32 %v948, %v1287
      %v1397 = vmul.f32 %v949, %v1287
      %v1398 = vmul.f32 %v950, %v1287
      %v1399 = vmul.f32 %v951, %v1287
      %v1400 = vmul.f32 %v952, %v1289
      %v1401 = vmul.f32 %v953, %v1289
      %v1402 = vmul.f32 %v954, %v1289
      %v1403 = vmul.f32 %v955, %v1289
      %v1404 = vmul.f32 %v956, %v1291
      %v1405 = vmul.f32 %v957, %v1291
      %v1406 = vmul.f32 %v958, %v1291
      %v1407 = vmul.f32 %v959, %v1291
      %v1408 = vmul.f32 %v960, %v1293
      %v1409 = vmul.f32 %v961, %v1293
      %v1410 = vmul.f32 %v962, %v1293
      %v1411 = vmul.f32 %v963, %v1293
      %v1412 = vmul.f32 %v964, %v1295
      %v1413 = vmul.f32 %v965, %v1295
      %v1414 = vmul.f32 %v966, %v1295
      %v1415 = vmul.f32 %v967, %v1295
      %v1416 = vmul.f32 %v968, %v1297
      %v1417 = vmul.f32 %v969, %v1297
      %v1418 = vmul.f32 %v970, %v1297
      %v1419 = vmul.f32 %v971, %v1297
      %v1420 = vmul.f32 %v972, %v1299
      %v1421 = vmul.f32 %v973, %v1299
      %v1422 = vmul.f32 %v974, %v1299
      %v1423 = vmul.f32 %v975, %v1299
      %v1424 = vmul.f32 %v976, %v1301
      %v1425 = vmul.f32 %v977, %v1301
      %v1426 = vmul.f32 %v978, %v1301
      %v1427 = vmul.f32 %v979, %v1301
      %v1428 = vmul.f32 %v980, %v1303
      %v1429 = vmul.f32 %v981, %v1303
      %v1430 = vmul.f32 %v982, %v1303
      %v1431 = vmul.f32 %v983, %v1303
      %v1432 = vmul.f32 %v984, %v1305
      %v1433 = vmul.f32 %v985, %v1305
      %v1434 = vmul.f32 %v986, %v1305
      %v1435 = vmul.f32 %v987, %v1305
      %v1436 = vmul.f32 %v988, %v1307
      %v1437 = vmul.f32 %v989, %v1307
      %v1438 = vmul.f32 %v990, %v1307
      %v1439 = vmul.f32 %v991, %v1307
      %v1440 = vmul.f32 %v992, %v1309
      %v1441 = vmul.f32 %v993, %v1309
      %v1442 = vmul.f32 %v994, %v1309
      %v1443 = vmul.f32 %v995, %v1309
      %v1444 = vmul.f32 %v996, %v1311
      %v1445 = vmul.f32 %v997, %v1311
      %v1446 = vmul.f32 %v998, %v1311
      %v1447 = vmul.f32 %v999, %v1311
      %v1448 = vmul.f32 %v1000, %v1313
      %v1449 = vmul.f32 %v1001, %v1313
      %v1450 = vmul.f32 %v1002, %v1313
      %v1451 = vmul.f32 %v1003, %v1313
      %v1452 = vmul.f32 %v1004, %v1315
      %v1453 = vmul.f32 %v1005, %v1315
      %v1454 = vmul.f32 %v1006, %v1315
      %v1455 = vmul.f32 %v1007, %v1315
      %v1456 = vmul.f32 %v1008, %v1317
      %v1457 = vmul.f32 %v1009, %v1317
      %v1458 = vmul.f32 %v1010, %v1317
      %v1459 = vmul.f32 %v1011, %v1317
      %v1460 = vmul.f32 %v1012, %v1319
      %v1461 = vmul.f32 %v1013, %v1319
      %v1462 = vmul.f32 %v1014, %v1319
      %v1463 = vmul.f32 %v1015, %v1319
      %v1464 = vmul.f32 %v1016, %v1321
      %v1465 = vmul.f32 %v1017, %v1321
      %v1466 = vmul.f32 %v1018, %v1321
      %v1467 = vmul.f32 %v1019, %v1321
      %v1468 = vmul.f32 %v1020, %v1323
      %v1469 = vmul.f32 %v1021, %v1323
      %v1470 = vmul.f32 %v1022, %v1323
      %v1471 = vmul.f32 %v1023, %v1323
      %v1472 = vmul.f32 %v1024, %v1325
      %v1473 = vmul.f32 %v1025, %v1325
      %v1474 = vmul.f32 %v1026, %v1325
      %v1475 = vmul.f32 %v1027, %v1325
      %v1476 = vmul.f32 %v1028, %v1327
      %v1477 = vmul.f32 %v1029, %v1327
      %v1478 = vmul.f32 %v1030, %v1327
      %v1479 = vmul.f32 %v1031, %v1327
      %v1480 = vmul.f32 %v1032, %v1329
      %v1481 = vmul.f32 %v1033, %v1329
      %v1482 = vmul.f32 %v1034, %v1329
      %v1483 = vmul.f32 %v1035, %v1329
      %v1484 = vmul.f32 %v1036, %v1331
      %v1485 = vmul.f32 %v1037, %v1331
      %v1486 = vmul.f32 %v1038, %v1331
      %v1487 = vmul.f32 %v1039, %v1331
      %v1488 = vmul.f32 %v1040, %v1333
      %v1489 = vmul.f32 %v1041, %v1333
      %v1490 = vmul.f32 %v1042, %v1333
      %v1491 = vmul.f32 %v1043, %v1333
      %v1492 = vmul.f32 %v1044, %v1335
      %v1493 = vmul.f32 %v1045, %v1335
      %v1494 = vmul.f32 %v1046, %v1335
      %v1495 = vmul.f32 %v1047, %v1335
      %v1496 = vsub.f32 %v1144, %v1368
      %v1497 = vsub.f32 %v1145, %v1369
      %v1498 = vsub.f32 %v1146, %v1370
      %v1499 = vsub.f32 %v1147, %v1371
      %v1500 = vsub.f32 %v1148, %v1372
      %v1501 = vsub.f32 %v1149, %v1373
      %v1502 = vsub.f32 %v1150, %v1374
      %v1503 = vsub.f32 %v1151, %v1375
      %v1504 = vsub.f32 %v1152, %v1376
      %v1505 = vsub.f32 %v1153, %v1377
      %v1506 = vsub.f32 %v1154, %v1378
      %v1507 = vsub.f32 %v1155, %v1379
      %v1508 = vsub.f32 %v1156, %v1380
      %v1509 = vsub.f32 %v1157, %v1381
      %v1510 = vsub.f32 %v1158, %v1382
      %v1511 = vsub.f32 %v1159, %v1383
      %v1512 = vsub.f32 %v1160, %v1384
      %v1513 = vsub.f32 %v1161, %v1385
      %v1514 = vsub.f32 %v1162, %v1386
      %v1515 = vsub.f32 %v1163, %v1387
      %v1516 = vsub.f32 %v1164, %v1388
      %v1517 = vsub.f32 %v1165, %v1389
      %v1518 = vsub.f32 %v1166, %v1390
      %v1519 = vsub.f32 %v1167, %v1391
      %v1520 = vsub.f32 %v1168, %v1392
      %v1521 = vsub.f32 %v1169, %v1393
      %v1522 = vsub.f32 %v1170, %v1394
      %v1523 = vsub.f32 %v1171, %v1395
      %v1524 = vsub.f32 %v1172, %v1396
      %v1525 = vsub.f32 %v1173, %v1397
      %v1526 = vsub.f32 %v1174, %v1398
      %v1527 = vsub.f32 %v1175, %v1399
      %v1528 = vsub.f32 %v1176, %v1400
      %v1529 = vsub.f32 %v1177, %v1401
      %v1530 = vsub.f32 %v1178, %v1402
      %v1531 = vsub.f32 %v1179, %v1403
      %v1532 = vsub.f32 %v1180, %v1404
      %v1533 = vsub.f32 %v1181, %v1405
      %v1534 = vsub.f32 %v1182, %v1406
      %v1535 = vsub.f32 %v1183, %v1407
      %v1536 = vsub.f32 %v1184, %v1408
      %v1537 = vsub.f32 %v1185, %v1409
      %v1538 = vsub.f32 %v1186, %v1410
      %v1539 = vsub.f32 %v1187, %v1411
      %v1540 = vsub.f32 %v1188, %v1412
      %v1541 = vsub.f32 %v1189, %v1413
      %v1542 = vsub.f32 %v1190, %v1414
      %v1543 = vsub.f32 %v1191, %v1415
      %v1544 = vsub.f32 %v1192, %v1416
      %v1545 = vsub.f32 %v1193, %v1417
      %v1546 = vsub.f32 %v1194, %v1418
      %v1547 = vsub.f32 %v1195, %v1419
      %v1548 = vsub.f32 %v1196, %v1420
      %v1549 = vsub.f32 %v1197, %v1421
      %v1550 = vsub.f32 %v1198, %v1422
      %v1551 = vsub.f32 %v1199, %v1423
      %v1552 = vsub.f32 %v1200, %v1424
      %v1553 = vsub.f32 %v1201, %v1425
      %v1554 = vsub.f32 %v1202, %v1426
      %v1555 = vsub.f32 %v1203, %v1427
      %v1556 = vsub.f32 %v1204, %v1428
      %v1557 = vsub.f32 %v1205, %v1429
      %v1558 = vsub.f32 %v1206, %v1430
      %v1559 = vsub.f32 %v1207, %v1431
      %v1560 = vsub.f32 %v1208, %v1432
      %v1561 = vsub.f32 %v1209, %v1433
      %v1562 = vsub.f32 %v1210, %v1434
      %v1563 = vsub.f32 %v1211, %v1435
      %v1564 = vsub.f32 %v1212, %v1436
      %v1565 = vsub.f32 %v1213, %v1437
      %v1566 = vsub.f32 %v1214, %v1438
      %v1567 = vsub.f32 %v1215, %v1439
      %v1568 = vsub.f32 %v1216, %v1440
      %v1569 = vsub.f32 %v1217, %v1441
      %v1570 = vsub.f32 %v1218, %v1442
      %v1571 = vsub.f32 %v1219, %v1443
      %v1572 = vsub.f32 %v1220, %v1444
      %v1573 = vsub.f32 %v1221, %v1445
      %v1574 = vsub.f32 %v1222, %v1446
      %v1575 = vsub.f32 %v1223, %v1447
      %v1576 = vsub.f32 %v1224, %v1448
      %v1577 = vsub.f32 %v1225, %v1449
      %v1578 = vsub.f32 %v1226, %v1450
      %v1579 = vsub.f32 %v1227, %v1451
      %v1580 = vsub.f32 %v1228, %v1452
      %v1581 = vsub.f32 %v1229, %v1453
      %v1582 = vsub.f32 %v1230, %v1454
      %v1583 = vsub.f32 %v1231, %v1455
      %v1584 = vsub.f32 %v1232, %v1456
      %v1585 = vsub.f32 %v1233, %v1457
      %v1586 = vsub.f32 %v1234, %v1458
      %v1587 = vsub.f32 %v1235, %v1459
      %v1588 = vsub.f32 %v1236, %v1460
      %v1589 = vsub.f32 %v1237, %v1461
      %v1590 = vsub.f32 %v1238, %v1462
      %v1591 = vsub.f32 %v1239, %v1463
      %v1592 = vsub.f32 %v1240, %v1464
      %v1593 = vsub.f32 %v1241, %v1465
      %v1594 = vsub.f32 %v1242, %v1466
      %v1595 = vsub.f32 %v1243, %v1467
      %v1596 = vsub.f32 %v1244, %v1468
      %v1597 = vsub.f32 %v1245, %v1469
      %v1598 = vsub.f32 %v1246, %v1470
      %v1599 = vsub.f32 %v1247, %v1471
      %v1600 = vsub.f32 %v1248, %v1472
      %v1601 = vsub.f32 %v1249, %v1473
      %v1602 = vsub.f32 %v1250, %v1474
      %v1603 = vsub.f32 %v1251, %v1475
      %v1604 = vsub.f32 %v1252, %v1476
      %v1605 = vsub.f32 %v1253, %v1477
      %v1606 = vsub.f32 %v1254, %v1478
      %v1607 = vsub.f32 %v1255, %v1479
      %v1608 = vsub.f32 %v1256, %v1480
      %v1609 = vsub.f32 %v1257, %v1481
      %v1610 = vsub.f32 %v1258, %v1482
      %v1611 = vsub.f32 %v1259, %v1483
      %v1612 = vsub.f32 %v1260, %v1484
      %v1613 = vsub.f32 %v1261, %v1485
      %v1614 = vsub.f32 %v1262, %v1486
      %v1615 = vsub.f32 %v1263, %v1487
      %v1616 = vsub.f32 %v1264, %v1488
      %v1617 = vsub.f32 %v1265, %v1489
      %v1618 = vsub.f32 %v1266, %v1490
      %v1619 = vsub.f32 %v1267, %v1491
      %v1620 = vsub.f32 %v1268, %v1492
      %v1621 = vsub.f32 %v1269, %v1493
      %v1622 = vsub.f32 %v1270, %v1494
      %v1623 = vsub.f32 %v1271, %v1495
      %v1624 = vsel %vm568, %v1496, 0.0
      %v1625 = vsel %vm568, %v1500, 0.0
      %v1626 = vadd.f32 %v1624, %v1625
      %v1627 = vsel %vm568, %v1504, 0.0
      %v1628 = vadd.f32 %v1626, %v1627
      %v1629 = vsel %vm568, %v1508, 0.0
      %v1630 = vadd.f32 %v1628, %v1629
      %v1631 = vsel %vm568, %v1512, 0.0
      %v1632 = vadd.f32 %v1630, %v1631
      %v1633 = vsel %vm568, %v1516, 0.0
      %v1634 = vadd.f32 %v1632, %v1633
      %v1635 = vsel %vm568, %v1520, 0.0
      %v1636 = vadd.f32 %v1634, %v1635
      %v1637 = vsel %vm568, %v1524, 0.0
      %v1638 = vadd.f32 %v1636, %v1637
      %v1639 = vsel %vm568, %v1528, 0.0
      %v1640 = vadd.f32 %v1638, %v1639
      %v1641 = vsel %vm568, %v1532, 0.0
      %v1642 = vadd.f32 %v1640, %v1641
      %v1643 = vsel %vm568, %v1536, 0.0
      %v1644 = vadd.f32 %v1642, %v1643
      %v1645 = vsel %vm568, %v1540, 0.0
      %v1646 = vadd.f32 %v1644, %v1645
      %v1647 = vsel %vm568, %v1544, 0.0
      %v1648 = vadd.f32 %v1646, %v1647
      %v1649 = vsel %vm568, %v1548, 0.0
      %v1650 = vadd.f32 %v1648, %v1649
      %v1651 = vsel %vm568, %v1552, 0.0
      %v1652 = vadd.f32 %v1650, %v1651
      %v1653 = vsel %vm568, %v1556, 0.0
      %v1654 = vadd.f32 %v1652, %v1653
      %v1655 = vsel %vm568, %v1560, 0.0
      %v1656 = vadd.f32 %v1654, %v1655
      %v1657 = vsel %vm568, %v1564, 0.0
      %v1658 = vadd.f32 %v1656, %v1657
      %v1659 = vsel %vm568, %v1568, 0.0
      %v1660 = vadd.f32 %v1658, %v1659
      %v1661 = vsel %vm568, %v1572, 0.0
      %v1662 = vadd.f32 %v1660, %v1661
      %v1663 = vsel %vm568, %v1576, 0.0
      %v1664 = vadd.f32 %v1662, %v1663
      %v1665 = vsel %vm568, %v1580, 0.0
      %v1666 = vadd.f32 %v1664, %v1665
      %v1667 = vsel %vm568, %v1584, 0.0
      %v1668 = vadd.f32 %v1666, %v1667
      %v1669 = vsel %vm568, %v1588, 0.0
      %v1670 = vadd.f32 %v1668, %v1669
      %v1671 = vsel %vm568, %v1592, 0.0
      %v1672 = vadd.f32 %v1670, %v1671
      %v1673 = vsel %vm568, %v1596, 0.0
      %v1674 = vadd.f32 %v1672, %v1673
      %v1675 = vsel %vm568, %v1600, 0.0
      %v1676 = vadd.f32 %v1674, %v1675
      %v1677 = vsel %vm568, %v1604, 0.0
      %v1678 = vadd.f32 %v1676, %v1677
      %v1679 = vsel %vm568, %v1608, 0.0
      %v1680 = vadd.f32 %v1678, %v1679
      %v1681 = vsel %vm568, %v1612, 0.0
      %v1682 = vadd.f32 %v1680, %v1681
      %v1683 = vsel %vm568, %v1616, 0.0
      %v1684 = vadd.f32 %v1682, %v1683
      %v1685 = vsel %vm568, %v1620, 0.0
      %v1686 = vadd.f32 %v1684, %v1685
      %v1687 = vsel %vm568, %v1497, 0.0
      %v1688 = vsel %vm568, %v1501, 0.0
      %v1689 = vadd.f32 %v1687, %v1688
      %v1690 = vsel %vm568, %v1505, 0.0
      %v1691 = vadd.f32 %v1689, %v1690
      %v1692 = vsel %vm568, %v1509, 0.0
      %v1693 = vadd.f32 %v1691, %v1692
      %v1694 = vsel %vm568, %v1513, 0.0
      %v1695 = vadd.f32 %v1693, %v1694
      %v1696 = vsel %vm568, %v1517, 0.0
      %v1697 = vadd.f32 %v1695, %v1696
      %v1698 = vsel %vm568, %v1521, 0.0
      %v1699 = vadd.f32 %v1697, %v1698
      %v1700 = vsel %vm568, %v1525, 0.0
      %v1701 = vadd.f32 %v1699, %v1700
      %v1702 = vsel %vm568, %v1529, 0.0
      %v1703 = vadd.f32 %v1701, %v1702
      %v1704 = vsel %vm568, %v1533, 0.0
      %v1705 = vadd.f32 %v1703, %v1704
      %v1706 = vsel %vm568, %v1537, 0.0
      %v1707 = vadd.f32 %v1705, %v1706
      %v1708 = vsel %vm568, %v1541, 0.0
      %v1709 = vadd.f32 %v1707, %v1708
      %v1710 = vsel %vm568, %v1545, 0.0
      %v1711 = vadd.f32 %v1709, %v1710
      %v1712 = vsel %vm568, %v1549, 0.0
      %v1713 = vadd.f32 %v1711, %v1712
      %v1714 = vsel %vm568, %v1553, 0.0
      %v1715 = vadd.f32 %v1713, %v1714
      %v1716 = vsel %vm568, %v1557, 0.0
      %v1717 = vadd.f32 %v1715, %v1716
      %v1718 = vsel %vm568, %v1561, 0.0
      %v1719 = vadd.f32 %v1717, %v1718
      %v1720 = vsel %vm568, %v1565, 0.0
      %v1721 = vadd.f32 %v1719, %v1720
      %v1722 = vsel %vm568, %v1569, 0.0
      %v1723 = vadd.f32 %v1721, %v1722
      %v1724 = vsel %vm568, %v1573, 0.0
      %v1725 = vadd.f32 %v1723, %v1724
      %v1726 = vsel %vm568, %v1577, 0.0
      %v1727 = vadd.f32 %v1725, %v1726
      %v1728 = vsel %vm568, %v1581, 0.0
      %v1729 = vadd.f32 %v1727, %v1728
      %v1730 = vsel %vm568, %v1585, 0.0
      %v1731 = vadd.f32 %v1729, %v1730
      %v1732 = vsel %vm568, %v1589, 0.0
      %v1733 = vadd.f32 %v1731, %v1732
      %v1734 = vsel %vm568, %v1593, 0.0
      %v1735 = vadd.f32 %v1733, %v1734
      %v1736 = vsel %vm568, %v1597, 0.0
      %v1737 = vadd.f32 %v1735, %v1736
      %v1738 = vsel %vm568, %v1601, 0.0
      %v1739 = vadd.f32 %v1737, %v1738
      %v1740 = vsel %vm568, %v1605, 0.0
      %v1741 = vadd.f32 %v1739, %v1740
      %v1742 = vsel %vm568, %v1609, 0.0
      %v1743 = vadd.f32 %v1741, %v1742
      %v1744 = vsel %vm568, %v1613, 0.0
      %v1745 = vadd.f32 %v1743, %v1744
      %v1746 = vsel %vm568, %v1617, 0.0
      %v1747 = vadd.f32 %v1745, %v1746
      %v1748 = vsel %vm568, %v1621, 0.0
      %v1749 = vadd.f32 %v1747, %v1748
      %v1750 = vsel %vm568, %v1498, 0.0
      %v1751 = vsel %vm568, %v1502, 0.0
      %v1752 = vadd.f32 %v1750, %v1751
      %v1753 = vsel %vm568, %v1506, 0.0
      %v1754 = vadd.f32 %v1752, %v1753
      %v1755 = vsel %vm568, %v1510, 0.0
      %v1756 = vadd.f32 %v1754, %v1755
      %v1757 = vsel %vm568, %v1514, 0.0
      %v1758 = vadd.f32 %v1756, %v1757
      %v1759 = vsel %vm568, %v1518, 0.0
      %v1760 = vadd.f32 %v1758, %v1759
      %v1761 = vsel %vm568, %v1522, 0.0
      %v1762 = vadd.f32 %v1760, %v1761
      %v1763 = vsel %vm568, %v1526, 0.0
      %v1764 = vadd.f32 %v1762, %v1763
      %v1765 = vsel %vm568, %v1530, 0.0
      %v1766 = vadd.f32 %v1764, %v1765
      %v1767 = vsel %vm568, %v1534, 0.0
      %v1768 = vadd.f32 %v1766, %v1767
      %v1769 = vsel %vm568, %v1538, 0.0
      %v1770 = vadd.f32 %v1768, %v1769
      %v1771 = vsel %vm568, %v1542, 0.0
      %v1772 = vadd.f32 %v1770, %v1771
      %v1773 = vsel %vm568, %v1546, 0.0
      %v1774 = vadd.f32 %v1772, %v1773
      %v1775 = vsel %vm568, %v1550, 0.0
      %v1776 = vadd.f32 %v1774, %v1775
      %v1777 = vsel %vm568, %v1554, 0.0
      %v1778 = vadd.f32 %v1776, %v1777
      %v1779 = vsel %vm568, %v1558, 0.0
      %v1780 = vadd.f32 %v1778, %v1779
      %v1781 = vsel %vm568, %v1562, 0.0
      %v1782 = vadd.f32 %v1780, %v1781
      %v1783 = vsel %vm568, %v1566, 0.0
      %v1784 = vadd.f32 %v1782, %v1783
      %v1785 = vsel %vm568, %v1570, 0.0
      %v1786 = vadd.f32 %v1784, %v1785
      %v1787 = vsel %vm568, %v1574, 0.0
      %v1788 = vadd.f32 %v1786, %v1787
      %v1789 = vsel %vm568, %v1578, 0.0
      %v1790 = vadd.f32 %v1788, %v1789
      %v1791 = vsel %vm568, %v1582, 0.0
      %v1792 = vadd.f32 %v1790, %v1791
      %v1793 = vsel %vm568, %v1586, 0.0
      %v1794 = vadd.f32 %v1792, %v1793
      %v1795 = vsel %vm568, %v1590, 0.0
      %v1796 = vadd.f32 %v1794, %v1795
      %v1797 = vsel %vm568, %v1594, 0.0
      %v1798 = vadd.f32 %v1796, %v1797
      %v1799 = vsel %vm568, %v1598, 0.0
      %v1800 = vadd.f32 %v1798, %v1799
      %v1801 = vsel %vm568, %v1602, 0.0
      %v1802 = vadd.f32 %v1800, %v1801
      %v1803 = vsel %vm568, %v1606, 0.0
      %v1804 = vadd.f32 %v1802, %v1803
      %v1805 = vsel %vm568, %v1610, 0.0
      %v1806 = vadd.f32 %v1804, %v1805
      %v1807 = vsel %vm568, %v1614, 0.0
      %v1808 = vadd.f32 %v1806, %v1807
      %v1809 = vsel %vm568, %v1618, 0.0
      %v1810 = vadd.f32 %v1808, %v1809
      %v1811 = vsel %vm568, %v1622, 0.0
      %v1812 = vadd.f32 %v1810, %v1811
      %v1813 = vsel %vm568, %v1499, 0.0
      %v1814 = vsel %vm568, %v1503, 0.0
      %v1815 = vadd.f32 %v1813, %v1814
      %v1816 = vsel %vm568, %v1507, 0.0
      %v1817 = vadd.f32 %v1815, %v1816
      %v1818 = vsel %vm568, %v1511, 0.0
      %v1819 = vadd.f32 %v1817, %v1818
      %v1820 = vsel %vm568, %v1515, 0.0
      %v1821 = vadd.f32 %v1819, %v1820
      %v1822 = vsel %vm568, %v1519, 0.0
      %v1823 = vadd.f32 %v1821, %v1822
      %v1824 = vsel %vm568, %v1523, 0.0
      %v1825 = vadd.f32 %v1823, %v1824
      %v1826 = vsel %vm568, %v1527, 0.0
      %v1827 = vadd.f32 %v1825, %v1826
      %v1828 = vsel %vm568, %v1531, 0.0
      %v1829 = vadd.f32 %v1827, %v1828
      %v1830 = vsel %vm568, %v1535, 0.0
      %v1831 = vadd.f32 %v1829, %v1830
      %v1832 = vsel %vm568, %v1539, 0.0
      %v1833 = vadd.f32 %v1831, %v1832
      %v1834 = vsel %vm568, %v1543, 0.0
      %v1835 = vadd.f32 %v1833, %v1834
      %v1836 = vsel %vm568, %v1547, 0.0
      %v1837 = vadd.f32 %v1835, %v1836
      %v1838 = vsel %vm568, %v1551, 0.0
      %v1839 = vadd.f32 %v1837, %v1838
      %v1840 = vsel %vm568, %v1555, 0.0
      %v1841 = vadd.f32 %v1839, %v1840
      %v1842 = vsel %vm568, %v1559, 0.0
      %v1843 = vadd.f32 %v1841, %v1842
      %v1844 = vsel %vm568, %v1563, 0.0
      %v1845 = vadd.f32 %v1843, %v1844
      %v1846 = vsel %vm568, %v1567, 0.0
      %v1847 = vadd.f32 %v1845, %v1846
      %v1848 = vsel %vm568, %v1571, 0.0
      %v1849 = vadd.f32 %v1847, %v1848
      %v1850 = vsel %vm568, %v1575, 0.0
      %v1851 = vadd.f32 %v1849, %v1850
      %v1852 = vsel %vm568, %v1579, 0.0
      %v1853 = vadd.f32 %v1851, %v1852
      %v1854 = vsel %vm568, %v1583, 0.0
      %v1855 = vadd.f32 %v1853, %v1854
      %v1856 = vsel %vm568, %v1587, 0.0
      %v1857 = vadd.f32 %v1855, %v1856
      %v1858 = vsel %vm568, %v1591, 0.0
      %v1859 = vadd.f32 %v1857, %v1858
      %v1860 = vsel %vm568, %v1595, 0.0
      %v1861 = vadd.f32 %v1859, %v1860
      %v1862 = vsel %vm568, %v1599, 0.0
      %v1863 = vadd.f32 %v1861, %v1862
      %v1864 = vsel %vm568, %v1603, 0.0
      %v1865 = vadd.f32 %v1863, %v1864
      %v1866 = vsel %vm568, %v1607, 0.0
      %v1867 = vadd.f32 %v1865, %v1866
      %v1868 = vsel %vm568, %v1611, 0.0
      %v1869 = vadd.f32 %v1867, %v1868
      %v1870 = vsel %vm568, %v1615, 0.0
      %v1871 = vadd.f32 %v1869, %v1870
      %v1872 = vsel %vm568, %v1619, 0.0
      %v1873 = vadd.f32 %v1871, %v1872
      %v1874 = vsel %vm568, %v1623, 0.0
      %v1875 = vadd.f32 %v1873, %v1874
      %v1876 = vmul.f32 %v920, %v1080
      %v1877 = vmul.f32 %v921, %v1080
      %v1878 = vmul.f32 %v922, %v1080
      %v1879 = vmul.f32 %v923, %v1080
      %v1880 = vmul.f32 %v924, %v1081
      %v1881 = vmul.f32 %v925, %v1081
      %v1882 = vmul.f32 %v926, %v1081
      %v1883 = vmul.f32 %v927, %v1081
      %v1884 = vmul.f32 %v928, %v1082
      %v1885 = vmul.f32 %v929, %v1082
      %v1886 = vmul.f32 %v930, %v1082
      %v1887 = vmul.f32 %v931, %v1082
      %v1888 = vmul.f32 %v932, %v1083
      %v1889 = vmul.f32 %v933, %v1083
      %v1890 = vmul.f32 %v934, %v1083
      %v1891 = vmul.f32 %v935, %v1083
      %v1892 = vmul.f32 %v936, %v1084
      %v1893 = vmul.f32 %v937, %v1084
      %v1894 = vmul.f32 %v938, %v1084
      %v1895 = vmul.f32 %v939, %v1084
      %v1896 = vmul.f32 %v940, %v1085
      %v1897 = vmul.f32 %v941, %v1085
      %v1898 = vmul.f32 %v942, %v1085
      %v1899 = vmul.f32 %v943, %v1085
      %v1900 = vmul.f32 %v944, %v1086
      %v1901 = vmul.f32 %v945, %v1086
      %v1902 = vmul.f32 %v946, %v1086
      %v1903 = vmul.f32 %v947, %v1086
      %v1904 = vmul.f32 %v948, %v1087
      %v1905 = vmul.f32 %v949, %v1087
      %v1906 = vmul.f32 %v950, %v1087
      %v1907 = vmul.f32 %v951, %v1087
      %v1908 = vmul.f32 %v952, %v1088
      %v1909 = vmul.f32 %v953, %v1088
      %v1910 = vmul.f32 %v954, %v1088
      %v1911 = vmul.f32 %v955, %v1088
      %v1912 = vmul.f32 %v956, %v1089
      %v1913 = vmul.f32 %v957, %v1089
      %v1914 = vmul.f32 %v958, %v1089
      %v1915 = vmul.f32 %v959, %v1089
      %v1916 = vmul.f32 %v960, %v1090
      %v1917 = vmul.f32 %v961, %v1090
      %v1918 = vmul.f32 %v962, %v1090
      %v1919 = vmul.f32 %v963, %v1090
      %v1920 = vmul.f32 %v964, %v1091
      %v1921 = vmul.f32 %v965, %v1091
      %v1922 = vmul.f32 %v966, %v1091
      %v1923 = vmul.f32 %v967, %v1091
      %v1924 = vmul.f32 %v968, %v1092
      %v1925 = vmul.f32 %v969, %v1092
      %v1926 = vmul.f32 %v970, %v1092
      %v1927 = vmul.f32 %v971, %v1092
      %v1928 = vmul.f32 %v972, %v1093
      %v1929 = vmul.f32 %v973, %v1093
      %v1930 = vmul.f32 %v974, %v1093
      %v1931 = vmul.f32 %v975, %v1093
      %v1932 = vmul.f32 %v976, %v1094
      %v1933 = vmul.f32 %v977, %v1094
      %v1934 = vmul.f32 %v978, %v1094
      %v1935 = vmul.f32 %v979, %v1094
      %v1936 = vmul.f32 %v980, %v1095
      %v1937 = vmul.f32 %v981, %v1095
      %v1938 = vmul.f32 %v982, %v1095
      %v1939 = vmul.f32 %v983, %v1095
      %v1940 = vmul.f32 %v984, %v1096
      %v1941 = vmul.f32 %v985, %v1096
      %v1942 = vmul.f32 %v986, %v1096
      %v1943 = vmul.f32 %v987, %v1096
      %v1944 = vmul.f32 %v988, %v1097
      %v1945 = vmul.f32 %v989, %v1097
      %v1946 = vmul.f32 %v990, %v1097
      %v1947 = vmul.f32 %v991, %v1097
      %v1948 = vmul.f32 %v992, %v1098
      %v1949 = vmul.f32 %v993, %v1098
      %v1950 = vmul.f32 %v994, %v1098
      %v1951 = vmul.f32 %v995, %v1098
      %v1952 = vmul.f32 %v996, %v1099
      %v1953 = vmul.f32 %v997, %v1099
      %v1954 = vmul.f32 %v998, %v1099
      %v1955 = vmul.f32 %v999, %v1099
      %v1956 = vmul.f32 %v1000, %v1100
      %v1957 = vmul.f32 %v1001, %v1100
      %v1958 = vmul.f32 %v1002, %v1100
      %v1959 = vmul.f32 %v1003, %v1100
      %v1960 = vmul.f32 %v1004, %v1101
      %v1961 = vmul.f32 %v1005, %v1101
      %v1962 = vmul.f32 %v1006, %v1101
      %v1963 = vmul.f32 %v1007, %v1101
      %v1964 = vmul.f32 %v1008, %v1102
      %v1965 = vmul.f32 %v1009, %v1102
      %v1966 = vmul.f32 %v1010, %v1102
      %v1967 = vmul.f32 %v1011, %v1102
      %v1968 = vmul.f32 %v1012, %v1103
      %v1969 = vmul.f32 %v1013, %v1103
      %v1970 = vmul.f32 %v1014, %v1103
      %v1971 = vmul.f32 %v1015, %v1103
      %v1972 = vmul.f32 %v1016, %v1104
      %v1973 = vmul.f32 %v1017, %v1104
      %v1974 = vmul.f32 %v1018, %v1104
      %v1975 = vmul.f32 %v1019, %v1104
      %v1976 = vmul.f32 %v1020, %v1105
      %v1977 = vmul.f32 %v1021, %v1105
      %v1978 = vmul.f32 %v1022, %v1105
      %v1979 = vmul.f32 %v1023, %v1105
      %v1980 = vmul.f32 %v1024, %v1106
      %v1981 = vmul.f32 %v1025, %v1106
      %v1982 = vmul.f32 %v1026, %v1106
      %v1983 = vmul.f32 %v1027, %v1106
      %v1984 = vmul.f32 %v1028, %v1107
      %v1985 = vmul.f32 %v1029, %v1107
      %v1986 = vmul.f32 %v1030, %v1107
      %v1987 = vmul.f32 %v1031, %v1107
      %v1988 = vmul.f32 %v1032, %v1108
      %v1989 = vmul.f32 %v1033, %v1108
      %v1990 = vmul.f32 %v1034, %v1108
      %v1991 = vmul.f32 %v1035, %v1108
      %v1992 = vmul.f32 %v1036, %v1109
      %v1993 = vmul.f32 %v1037, %v1109
      %v1994 = vmul.f32 %v1038, %v1109
      %v1995 = vmul.f32 %v1039, %v1109
      %v1996 = vmul.f32 %v1040, %v1110
      %v1997 = vmul.f32 %v1041, %v1110
      %v1998 = vmul.f32 %v1042, %v1110
      %v1999 = vmul.f32 %v1043, %v1110
      %v2000 = vmul.f32 %v1044, %v1111
      %v2001 = vmul.f32 %v1045, %v1111
      %v2002 = vmul.f32 %v1046, %v1111
      %v2003 = vmul.f32 %v1047, %v1111
      %v2004 = vmul.f32 %v792, %v1273
      %v2005 = vmul.f32 %v793, %v1273
      %v2006 = vmul.f32 %v794, %v1273
      %v2007 = vmul.f32 %v795, %v1273
      %v2008 = vmul.f32 %v796, %v1275
      %v2009 = vmul.f32 %v797, %v1275
      %v2010 = vmul.f32 %v798, %v1275
      %v2011 = vmul.f32 %v799, %v1275
      %v2012 = vmul.f32 %v800, %v1277
      %v2013 = vmul.f32 %v801, %v1277
      %v2014 = vmul.f32 %v802, %v1277
      %v2015 = vmul.f32 %v803, %v1277
      %v2016 = vmul.f32 %v804, %v1279
      %v2017 = vmul.f32 %v805, %v1279
      %v2018 = vmul.f32 %v806, %v1279
      %v2019 = vmul.f32 %v807, %v1279
      %v2020 = vmul.f32 %v808, %v1281
      %v2021 = vmul.f32 %v809, %v1281
      %v2022 = vmul.f32 %v810, %v1281
      %v2023 = vmul.f32 %v811, %v1281
      %v2024 = vmul.f32 %v812, %v1283
      %v2025 = vmul.f32 %v813, %v1283
      %v2026 = vmul.f32 %v814, %v1283
      %v2027 = vmul.f32 %v815, %v1283
      %v2028 = vmul.f32 %v816, %v1285
      %v2029 = vmul.f32 %v817, %v1285
      %v2030 = vmul.f32 %v818, %v1285
      %v2031 = vmul.f32 %v819, %v1285
      %v2032 = vmul.f32 %v820, %v1287
      %v2033 = vmul.f32 %v821, %v1287
      %v2034 = vmul.f32 %v822, %v1287
      %v2035 = vmul.f32 %v823, %v1287
      %v2036 = vmul.f32 %v824, %v1289
      %v2037 = vmul.f32 %v825, %v1289
      %v2038 = vmul.f32 %v826, %v1289
      %v2039 = vmul.f32 %v827, %v1289
      %v2040 = vmul.f32 %v828, %v1291
      %v2041 = vmul.f32 %v829, %v1291
      %v2042 = vmul.f32 %v830, %v1291
      %v2043 = vmul.f32 %v831, %v1291
      %v2044 = vmul.f32 %v832, %v1293
      %v2045 = vmul.f32 %v833, %v1293
      %v2046 = vmul.f32 %v834, %v1293
      %v2047 = vmul.f32 %v835, %v1293
      %v2048 = vmul.f32 %v836, %v1295
      %v2049 = vmul.f32 %v837, %v1295
      %v2050 = vmul.f32 %v838, %v1295
      %v2051 = vmul.f32 %v839, %v1295
      %v2052 = vmul.f32 %v840, %v1297
      %v2053 = vmul.f32 %v841, %v1297
      %v2054 = vmul.f32 %v842, %v1297
      %v2055 = vmul.f32 %v843, %v1297
      %v2056 = vmul.f32 %v844, %v1299
      %v2057 = vmul.f32 %v845, %v1299
      %v2058 = vmul.f32 %v846, %v1299
      %v2059 = vmul.f32 %v847, %v1299
      %v2060 = vmul.f32 %v848, %v1301
      %v2061 = vmul.f32 %v849, %v1301
      %v2062 = vmul.f32 %v850, %v1301
      %v2063 = vmul.f32 %v851, %v1301
      %v2064 = vmul.f32 %v852, %v1303
      %v2065 = vmul.f32 %v853, %v1303
      %v2066 = vmul.f32 %v854, %v1303
      %v2067 = vmul.f32 %v855, %v1303
      %v2068 = vmul.f32 %v856, %v1305
      %v2069 = vmul.f32 %v857, %v1305
      %v2070 = vmul.f32 %v858, %v1305
      %v2071 = vmul.f32 %v859, %v1305
      %v2072 = vmul.f32 %v860, %v1307
      %v2073 = vmul.f32 %v861, %v1307
      %v2074 = vmul.f32 %v862, %v1307
      %v2075 = vmul.f32 %v863, %v1307
      %v2076 = vmul.f32 %v864, %v1309
      %v2077 = vmul.f32 %v865, %v1309
      %v2078 = vmul.f32 %v866, %v1309
      %v2079 = vmul.f32 %v867, %v1309
      %v2080 = vmul.f32 %v868, %v1311
      %v2081 = vmul.f32 %v869, %v1311
      %v2082 = vmul.f32 %v870, %v1311
      %v2083 = vmul.f32 %v871, %v1311
      %v2084 = vmul.f32 %v872, %v1313
      %v2085 = vmul.f32 %v873, %v1313
      %v2086 = vmul.f32 %v874, %v1313
      %v2087 = vmul.f32 %v875, %v1313
      %v2088 = vmul.f32 %v876, %v1315
      %v2089 = vmul.f32 %v877, %v1315
      %v2090 = vmul.f32 %v878, %v1315
      %v2091 = vmul.f32 %v879, %v1315
      %v2092 = vmul.f32 %v880, %v1317
      %v2093 = vmul.f32 %v881, %v1317
      %v2094 = vmul.f32 %v882, %v1317
      %v2095 = vmul.f32 %v883, %v1317
      %v2096 = vmul.f32 %v884, %v1319
      %v2097 = vmul.f32 %v885, %v1319
      %v2098 = vmul.f32 %v886, %v1319
      %v2099 = vmul.f32 %v887, %v1319
      %v2100 = vmul.f32 %v888, %v1321
      %v2101 = vmul.f32 %v889, %v1321
      %v2102 = vmul.f32 %v890, %v1321
      %v2103 = vmul.f32 %v891, %v1321
      %v2104 = vmul.f32 %v892, %v1323
      %v2105 = vmul.f32 %v893, %v1323
      %v2106 = vmul.f32 %v894, %v1323
      %v2107 = vmul.f32 %v895, %v1323
      %v2108 = vmul.f32 %v896, %v1325
      %v2109 = vmul.f32 %v897, %v1325
      %v2110 = vmul.f32 %v898, %v1325
      %v2111 = vmul.f32 %v899, %v1325
      %v2112 = vmul.f32 %v900, %v1327
      %v2113 = vmul.f32 %v901, %v1327
      %v2114 = vmul.f32 %v902, %v1327
      %v2115 = vmul.f32 %v903, %v1327
      %v2116 = vmul.f32 %v904, %v1329
      %v2117 = vmul.f32 %v905, %v1329
      %v2118 = vmul.f32 %v906, %v1329
      %v2119 = vmul.f32 %v907, %v1329
      %v2120 = vmul.f32 %v908, %v1331
      %v2121 = vmul.f32 %v909, %v1331
      %v2122 = vmul.f32 %v910, %v1331
      %v2123 = vmul.f32 %v911, %v1331
      %v2124 = vmul.f32 %v912, %v1333
      %v2125 = vmul.f32 %v913, %v1333
      %v2126 = vmul.f32 %v914, %v1333
      %v2127 = vmul.f32 %v915, %v1333
      %v2128 = vmul.f32 %v916, %v1335
      %v2129 = vmul.f32 %v917, %v1335
      %v2130 = vmul.f32 %v918, %v1335
      %v2131 = vmul.f32 %v919, %v1335
      %v2132 = vadd.f32 %v1876, %v2004
      %v2133 = vadd.f32 %v1877, %v2005
      %v2134 = vadd.f32 %v1878, %v2006
      %v2135 = vadd.f32 %v1879, %v2007
      %v2136 = vadd.f32 %v1880, %v2008
      %v2137 = vadd.f32 %v1881, %v2009
      %v2138 = vadd.f32 %v1882, %v2010
      %v2139 = vadd.f32 %v1883, %v2011
      %v2140 = vadd.f32 %v1884, %v2012
      %v2141 = vadd.f32 %v1885, %v2013
      %v2142 = vadd.f32 %v1886, %v2014
      %v2143 = vadd.f32 %v1887, %v2015
      %v2144 = vadd.f32 %v1888, %v2016
      %v2145 = vadd.f32 %v1889, %v2017
      %v2146 = vadd.f32 %v1890, %v2018
      %v2147 = vadd.f32 %v1891, %v2019
      %v2148 = vadd.f32 %v1892, %v2020
      %v2149 = vadd.f32 %v1893, %v2021
      %v2150 = vadd.f32 %v1894, %v2022
      %v2151 = vadd.f32 %v1895, %v2023
      %v2152 = vadd.f32 %v1896, %v2024
      %v2153 = vadd.f32 %v1897, %v2025
      %v2154 = vadd.f32 %v1898, %v2026
      %v2155 = vadd.f32 %v1899, %v2027
      %v2156 = vadd.f32 %v1900, %v2028
      %v2157 = vadd.f32 %v1901, %v2029
      %v2158 = vadd.f32 %v1902, %v2030
      %v2159 = vadd.f32 %v1903, %v2031
      %v2160 = vadd.f32 %v1904, %v2032
      %v2161 = vadd.f32 %v1905, %v2033
      %v2162 = vadd.f32 %v1906, %v2034
      %v2163 = vadd.f32 %v1907, %v2035
      %v2164 = vadd.f32 %v1908, %v2036
      %v2165 = vadd.f32 %v1909, %v2037
      %v2166 = vadd.f32 %v1910, %v2038
      %v2167 = vadd.f32 %v1911, %v2039
      %v2168 = vadd.f32 %v1912, %v2040
      %v2169 = vadd.f32 %v1913, %v2041
      %v2170 = vadd.f32 %v1914, %v2042
      %v2171 = vadd.f32 %v1915, %v2043
      %v2172 = vadd.f32 %v1916, %v2044
      %v2173 = vadd.f32 %v1917, %v2045
      %v2174 = vadd.f32 %v1918, %v2046
      %v2175 = vadd.f32 %v1919, %v2047
      %v2176 = vadd.f32 %v1920, %v2048
      %v2177 = vadd.f32 %v1921, %v2049
      %v2178 = vadd.f32 %v1922, %v2050
      %v2179 = vadd.f32 %v1923, %v2051
      %v2180 = vadd.f32 %v1924, %v2052
      %v2181 = vadd.f32 %v1925, %v2053
      %v2182 = vadd.f32 %v1926, %v2054
      %v2183 = vadd.f32 %v1927, %v2055
      %v2184 = vadd.f32 %v1928, %v2056
      %v2185 = vadd.f32 %v1929, %v2057
      %v2186 = vadd.f32 %v1930, %v2058
      %v2187 = vadd.f32 %v1931, %v2059
      %v2188 = vadd.f32 %v1932, %v2060
      %v2189 = vadd.f32 %v1933, %v2061
      %v2190 = vadd.f32 %v1934, %v2062
      %v2191 = vadd.f32 %v1935, %v2063
      %v2192 = vadd.f32 %v1936, %v2064
      %v2193 = vadd.f32 %v1937, %v2065
      %v2194 = vadd.f32 %v1938, %v2066
      %v2195 = vadd.f32 %v1939, %v2067
      %v2196 = vadd.f32 %v1940, %v2068
      %v2197 = vadd.f32 %v1941, %v2069
      %v2198 = vadd.f32 %v1942, %v2070
      %v2199 = vadd.f32 %v1943, %v2071
      %v2200 = vadd.f32 %v1944, %v2072
      %v2201 = vadd.f32 %v1945, %v2073
      %v2202 = vadd.f32 %v1946, %v2074
      %v2203 = vadd.f32 %v1947, %v2075
      %v2204 = vadd.f32 %v1948, %v2076
      %v2205 = vadd.f32 %v1949, %v2077
      %v2206 = vadd.f32 %v1950, %v2078
      %v2207 = vadd.f32 %v1951, %v2079
      %v2208 = vadd.f32 %v1952, %v2080
      %v2209 = vadd.f32 %v1953, %v2081
      %v2210 = vadd.f32 %v1954, %v2082
      %v2211 = vadd.f32 %v1955, %v2083
      %v2212 = vadd.f32 %v1956, %v2084
      %v2213 = vadd.f32 %v1957, %v2085
      %v2214 = vadd.f32 %v1958, %v2086
      %v2215 = vadd.f32 %v1959, %v2087
      %v2216 = vadd.f32 %v1960, %v2088
      %v2217 = vadd.f32 %v1961, %v2089
      %v2218 = vadd.f32 %v1962, %v2090
      %v2219 = vadd.f32 %v1963, %v2091
      %v2220 = vadd.f32 %v1964, %v2092
      %v2221 = vadd.f32 %v1965, %v2093
      %v2222 = vadd.f32 %v1966, %v2094
      %v2223 = vadd.f32 %v1967, %v2095
      %v2224 = vadd.f32 %v1968, %v2096
      %v2225 = vadd.f32 %v1969, %v2097
      %v2226 = vadd.f32 %v1970, %v2098
      %v2227 = vadd.f32 %v1971, %v2099
      %v2228 = vadd.f32 %v1972, %v2100
      %v2229 = vadd.f32 %v1973, %v2101
      %v2230 = vadd.f32 %v1974, %v2102
      %v2231 = vadd.f32 %v1975, %v2103
      %v2232 = vadd.f32 %v1976, %v2104
      %v2233 = vadd.f32 %v1977, %v2105
      %v2234 = vadd.f32 %v1978, %v2106
      %v2235 = vadd.f32 %v1979, %v2107
      %v2236 = vadd.f32 %v1980, %v2108
      %v2237 = vadd.f32 %v1981, %v2109
      %v2238 = vadd.f32 %v1982, %v2110
      %v2239 = vadd.f32 %v1983, %v2111
      %v2240 = vadd.f32 %v1984, %v2112
      %v2241 = vadd.f32 %v1985, %v2113
      %v2242 = vadd.f32 %v1986, %v2114
      %v2243 = vadd.f32 %v1987, %v2115
      %v2244 = vadd.f32 %v1988, %v2116
      %v2245 = vadd.f32 %v1989, %v2117
      %v2246 = vadd.f32 %v1990, %v2118
      %v2247 = vadd.f32 %v1991, %v2119
      %v2248 = vadd.f32 %v1992, %v2120
      %v2249 = vadd.f32 %v1993, %v2121
      %v2250 = vadd.f32 %v1994, %v2122
      %v2251 = vadd.f32 %v1995, %v2123
      %v2252 = vadd.f32 %v1996, %v2124
      %v2253 = vadd.f32 %v1997, %v2125
      %v2254 = vadd.f32 %v1998, %v2126
      %v2255 = vadd.f32 %v1999, %v2127
      %v2256 = vadd.f32 %v2000, %v2128
      %v2257 = vadd.f32 %v2001, %v2129
      %v2258 = vadd.f32 %v2002, %v2130
      %v2259 = vadd.f32 %v2003, %v2131
      %v2260 = vsel %vm568, %v2132, 0.0
      %v2261 = vsel %vm568, %v2136, 0.0
      %v2262 = vadd.f32 %v2260, %v2261
      %v2263 = vsel %vm568, %v2140, 0.0
      %v2264 = vadd.f32 %v2262, %v2263
      %v2265 = vsel %vm568, %v2144, 0.0
      %v2266 = vadd.f32 %v2264, %v2265
      %v2267 = vsel %vm568, %v2148, 0.0
      %v2268 = vadd.f32 %v2266, %v2267
      %v2269 = vsel %vm568, %v2152, 0.0
      %v2270 = vadd.f32 %v2268, %v2269
      %v2271 = vsel %vm568, %v2156, 0.0
      %v2272 = vadd.f32 %v2270, %v2271
      %v2273 = vsel %vm568, %v2160, 0.0
      %v2274 = vadd.f32 %v2272, %v2273
      %v2275 = vsel %vm568, %v2164, 0.0
      %v2276 = vadd.f32 %v2274, %v2275
      %v2277 = vsel %vm568, %v2168, 0.0
      %v2278 = vadd.f32 %v2276, %v2277
      %v2279 = vsel %vm568, %v2172, 0.0
      %v2280 = vadd.f32 %v2278, %v2279
      %v2281 = vsel %vm568, %v2176, 0.0
      %v2282 = vadd.f32 %v2280, %v2281
      %v2283 = vsel %vm568, %v2180, 0.0
      %v2284 = vadd.f32 %v2282, %v2283
      %v2285 = vsel %vm568, %v2184, 0.0
      %v2286 = vadd.f32 %v2284, %v2285
      %v2287 = vsel %vm568, %v2188, 0.0
      %v2288 = vadd.f32 %v2286, %v2287
      %v2289 = vsel %vm568, %v2192, 0.0
      %v2290 = vadd.f32 %v2288, %v2289
      %v2291 = vsel %vm568, %v2196, 0.0
      %v2292 = vadd.f32 %v2290, %v2291
      %v2293 = vsel %vm568, %v2200, 0.0
      %v2294 = vadd.f32 %v2292, %v2293
      %v2295 = vsel %vm568, %v2204, 0.0
      %v2296 = vadd.f32 %v2294, %v2295
      %v2297 = vsel %vm568, %v2208, 0.0
      %v2298 = vadd.f32 %v2296, %v2297
      %v2299 = vsel %vm568, %v2212, 0.0
      %v2300 = vadd.f32 %v2298, %v2299
      %v2301 = vsel %vm568, %v2216, 0.0
      %v2302 = vadd.f32 %v2300, %v2301
      %v2303 = vsel %vm568, %v2220, 0.0
      %v2304 = vadd.f32 %v2302, %v2303
      %v2305 = vsel %vm568, %v2224, 0.0
      %v2306 = vadd.f32 %v2304, %v2305
      %v2307 = vsel %vm568, %v2228, 0.0
      %v2308 = vadd.f32 %v2306, %v2307
      %v2309 = vsel %vm568, %v2232, 0.0
      %v2310 = vadd.f32 %v2308, %v2309
      %v2311 = vsel %vm568, %v2236, 0.0
      %v2312 = vadd.f32 %v2310, %v2311
      %v2313 = vsel %vm568, %v2240, 0.0
      %v2314 = vadd.f32 %v2312, %v2313
      %v2315 = vsel %vm568, %v2244, 0.0
      %v2316 = vadd.f32 %v2314, %v2315
      %v2317 = vsel %vm568, %v2248, 0.0
      %v2318 = vadd.f32 %v2316, %v2317
      %v2319 = vsel %vm568, %v2252, 0.0
      %v2320 = vadd.f32 %v2318, %v2319
      %v2321 = vsel %vm568, %v2256, 0.0
      %v2322 = vadd.f32 %v2320, %v2321
      %v2323 = vsel %vm568, %v2133, 0.0
      %v2324 = vsel %vm568, %v2137, 0.0
      %v2325 = vadd.f32 %v2323, %v2324
      %v2326 = vsel %vm568, %v2141, 0.0
      %v2327 = vadd.f32 %v2325, %v2326
      %v2328 = vsel %vm568, %v2145, 0.0
      %v2329 = vadd.f32 %v2327, %v2328
      %v2330 = vsel %vm568, %v2149, 0.0
      %v2331 = vadd.f32 %v2329, %v2330
      %v2332 = vsel %vm568, %v2153, 0.0
      %v2333 = vadd.f32 %v2331, %v2332
      %v2334 = vsel %vm568, %v2157, 0.0
      %v2335 = vadd.f32 %v2333, %v2334
      %v2336 = vsel %vm568, %v2161, 0.0
      %v2337 = vadd.f32 %v2335, %v2336
      %v2338 = vsel %vm568, %v2165, 0.0
      %v2339 = vadd.f32 %v2337, %v2338
      %v2340 = vsel %vm568, %v2169, 0.0
      %v2341 = vadd.f32 %v2339, %v2340
      %v2342 = vsel %vm568, %v2173, 0.0
      %v2343 = vadd.f32 %v2341, %v2342
      %v2344 = vsel %vm568, %v2177, 0.0
      %v2345 = vadd.f32 %v2343, %v2344
      %v2346 = vsel %vm568, %v2181, 0.0
      %v2347 = vadd.f32 %v2345, %v2346
      %v2348 = vsel %vm568, %v2185, 0.0
      %v2349 = vadd.f32 %v2347, %v2348
      %v2350 = vsel %vm568, %v2189, 0.0
      %v2351 = vadd.f32 %v2349, %v2350
      %v2352 = vsel %vm568, %v2193, 0.0
      %v2353 = vadd.f32 %v2351, %v2352
      %v2354 = vsel %vm568, %v2197, 0.0
      %v2355 = vadd.f32 %v2353, %v2354
      %v2356 = vsel %vm568, %v2201, 0.0
      %v2357 = vadd.f32 %v2355, %v2356
      %v2358 = vsel %vm568, %v2205, 0.0
      %v2359 = vadd.f32 %v2357, %v2358
      %v2360 = vsel %vm568, %v2209, 0.0
      %v2361 = vadd.f32 %v2359, %v2360
      %v2362 = vsel %vm568, %v2213, 0.0
      %v2363 = vadd.f32 %v2361, %v2362
      %v2364 = vsel %vm568, %v2217, 0.0
      %v2365 = vadd.f32 %v2363, %v2364
      %v2366 = vsel %vm568, %v2221, 0.0
      %v2367 = vadd.f32 %v2365, %v2366
      %v2368 = vsel %vm568, %v2225, 0.0
      %v2369 = vadd.f32 %v2367, %v2368
      %v2370 = vsel %vm568, %v2229, 0.0
      %v2371 = vadd.f32 %v2369, %v2370
      %v2372 = vsel %vm568, %v2233, 0.0
      %v2373 = vadd.f32 %v2371, %v2372
      %v2374 = vsel %vm568, %v2237, 0.0
      %v2375 = vadd.f32 %v2373, %v2374
      %v2376 = vsel %vm568, %v2241, 0.0
      %v2377 = vadd.f32 %v2375, %v2376
      %v2378 = vsel %vm568, %v2245, 0.0
      %v2379 = vadd.f32 %v2377, %v2378
      %v2380 = vsel %vm568, %v2249, 0.0
      %v2381 = vadd.f32 %v2379, %v2380
      %v2382 = vsel %vm568, %v2253, 0.0
      %v2383 = vadd.f32 %v2381, %v2382
      %v2384 = vsel %vm568, %v2257, 0.0
      %v2385 = vadd.f32 %v2383, %v2384
      %v2386 = vsel %vm568, %v2134, 0.0
      %v2387 = vsel %vm568, %v2138, 0.0
      %v2388 = vadd.f32 %v2386, %v2387
      %v2389 = vsel %vm568, %v2142, 0.0
      %v2390 = vadd.f32 %v2388, %v2389
      %v2391 = vsel %vm568, %v2146, 0.0
      %v2392 = vadd.f32 %v2390, %v2391
      %v2393 = vsel %vm568, %v2150, 0.0
      %v2394 = vadd.f32 %v2392, %v2393
      %v2395 = vsel %vm568, %v2154, 0.0
      %v2396 = vadd.f32 %v2394, %v2395
      %v2397 = vsel %vm568, %v2158, 0.0
      %v2398 = vadd.f32 %v2396, %v2397
      %v2399 = vsel %vm568, %v2162, 0.0
      %v2400 = vadd.f32 %v2398, %v2399
      %v2401 = vsel %vm568, %v2166, 0.0
      %v2402 = vadd.f32 %v2400, %v2401
      %v2403 = vsel %vm568, %v2170, 0.0
      %v2404 = vadd.f32 %v2402, %v2403
      %v2405 = vsel %vm568, %v2174, 0.0
      %v2406 = vadd.f32 %v2404, %v2405
      %v2407 = vsel %vm568, %v2178, 0.0
      %v2408 = vadd.f32 %v2406, %v2407
      %v2409 = vsel %vm568, %v2182, 0.0
      %v2410 = vadd.f32 %v2408, %v2409
      %v2411 = vsel %vm568, %v2186, 0.0
      %v2412 = vadd.f32 %v2410, %v2411
      %v2413 = vsel %vm568, %v2190, 0.0
      %v2414 = vadd.f32 %v2412, %v2413
      %v2415 = vsel %vm568, %v2194, 0.0
      %v2416 = vadd.f32 %v2414, %v2415
      %v2417 = vsel %vm568, %v2198, 0.0
      %v2418 = vadd.f32 %v2416, %v2417
      %v2419 = vsel %vm568, %v2202, 0.0
      %v2420 = vadd.f32 %v2418, %v2419
      %v2421 = vsel %vm568, %v2206, 0.0
      %v2422 = vadd.f32 %v2420, %v2421
      %v2423 = vsel %vm568, %v2210, 0.0
      %v2424 = vadd.f32 %v2422, %v2423
      %v2425 = vsel %vm568, %v2214, 0.0
      %v2426 = vadd.f32 %v2424, %v2425
      %v2427 = vsel %vm568, %v2218, 0.0
      %v2428 = vadd.f32 %v2426, %v2427
      %v2429 = vsel %vm568, %v2222, 0.0
      %v2430 = vadd.f32 %v2428, %v2429
      %v2431 = vsel %vm568, %v2226, 0.0
      %v2432 = vadd.f32 %v2430, %v2431
      %v2433 = vsel %vm568, %v2230, 0.0
      %v2434 = vadd.f32 %v2432, %v2433
      %v2435 = vsel %vm568, %v2234, 0.0
      %v2436 = vadd.f32 %v2434, %v2435
      %v2437 = vsel %vm568, %v2238, 0.0
      %v2438 = vadd.f32 %v2436, %v2437
      %v2439 = vsel %vm568, %v2242, 0.0
      %v2440 = vadd.f32 %v2438, %v2439
      %v2441 = vsel %vm568, %v2246, 0.0
      %v2442 = vadd.f32 %v2440, %v2441
      %v2443 = vsel %vm568, %v2250, 0.0
      %v2444 = vadd.f32 %v2442, %v2443
      %v2445 = vsel %vm568, %v2254, 0.0
      %v2446 = vadd.f32 %v2444, %v2445
      %v2447 = vsel %vm568, %v2258, 0.0
      %v2448 = vadd.f32 %v2446, %v2447
      %v2449 = vsel %vm568, %v2135, 0.0
      %v2450 = vsel %vm568, %v2139, 0.0
      %v2451 = vadd.f32 %v2449, %v2450
      %v2452 = vsel %vm568, %v2143, 0.0
      %v2453 = vadd.f32 %v2451, %v2452
      %v2454 = vsel %vm568, %v2147, 0.0
      %v2455 = vadd.f32 %v2453, %v2454
      %v2456 = vsel %vm568, %v2151, 0.0
      %v2457 = vadd.f32 %v2455, %v2456
      %v2458 = vsel %vm568, %v2155, 0.0
      %v2459 = vadd.f32 %v2457, %v2458
      %v2460 = vsel %vm568, %v2159, 0.0
      %v2461 = vadd.f32 %v2459, %v2460
      %v2462 = vsel %vm568, %v2163, 0.0
      %v2463 = vadd.f32 %v2461, %v2462
      %v2464 = vsel %vm568, %v2167, 0.0
      %v2465 = vadd.f32 %v2463, %v2464
      %v2466 = vsel %vm568, %v2171, 0.0
      %v2467 = vadd.f32 %v2465, %v2466
      %v2468 = vsel %vm568, %v2175, 0.0
      %v2469 = vadd.f32 %v2467, %v2468
      %v2470 = vsel %vm568, %v2179, 0.0
      %v2471 = vadd.f32 %v2469, %v2470
      %v2472 = vsel %vm568, %v2183, 0.0
      %v2473 = vadd.f32 %v2471, %v2472
      %v2474 = vsel %vm568, %v2187, 0.0
      %v2475 = vadd.f32 %v2473, %v2474
      %v2476 = vsel %vm568, %v2191, 0.0
      %v2477 = vadd.f32 %v2475, %v2476
      %v2478 = vsel %vm568, %v2195, 0.0
      %v2479 = vadd.f32 %v2477, %v2478
      %v2480 = vsel %vm568, %v2199, 0.0
      %v2481 = vadd.f32 %v2479, %v2480
      %v2482 = vsel %vm568, %v2203, 0.0
      %v2483 = vadd.f32 %v2481, %v2482
      %v2484 = vsel %vm568, %v2207, 0.0
      %v2485 = vadd.f32 %v2483, %v2484
      %v2486 = vsel %vm568, %v2211, 0.0
      %v2487 = vadd.f32 %v2485, %v2486
      %v2488 = vsel %vm568, %v2215, 0.0
      %v2489 = vadd.f32 %v2487, %v2488
      %v2490 = vsel %vm568, %v2219, 0.0
      %v2491 = vadd.f32 %v2489, %v2490
      %v2492 = vsel %vm568, %v2223, 0.0
      %v2493 = vadd.f32 %v2491, %v2492
      %v2494 = vsel %vm568, %v2227, 0.0
      %v2495 = vadd.f32 %v2493, %v2494
      %v2496 = vsel %vm568, %v2231, 0.0
      %v2497 = vadd.f32 %v2495, %v2496
      %v2498 = vsel %vm568, %v2235, 0.0
      %v2499 = vadd.f32 %v2497, %v2498
      %v2500 = vsel %vm568, %v2239, 0.0
      %v2501 = vadd.f32 %v2499, %v2500
      %v2502 = vsel %vm568, %v2243, 0.0
      %v2503 = vadd.f32 %v2501, %v2502
      %v2504 = vsel %vm568, %v2247, 0.0
      %v2505 = vadd.f32 %v2503, %v2504
      %v2506 = vsel %vm568, %v2251, 0.0
      %v2507 = vadd.f32 %v2505, %v2506
      %v2508 = vsel %vm568, %v2255, 0.0
      %v2509 = vadd.f32 %v2507, %v2508
      %v2510 = vsel %vm568, %v2259, 0.0
      %v2511 = vadd.f32 %v2509, %v2510
      %2516 = vrot.lane.b32.xlu0 %v2322, 8
      %v2517 = vpop.permute.xlu0 %2516
      %2518 = vrot.lane.b32.xlu0 %v2385, 8
      %v2519 = vpop.permute.xlu0 %2518
      %2520 = vrot.lane.b32.xlu0 %v2448, 8
      %v2521 = vpop.permute.xlu0 %2520
      %2522 = vrot.lane.b32.xlu0 %v2511, 8
      %v2523 = vpop.permute.xlu0 %2522
      %v2528 = vsel %vm568, %v1686, %v2517
      %v2529 = vsel %vm568, %v1749, %v2519
      %v2530 = vsel %vm568, %v1812, %v2521
      %v2531 = vsel %vm568, %v1875, %v2523
      %v2532 = vpack.c.bf16 %v2529, %v2528
      %v2533 = vpack.c.bf16 %v2531, %v2530
      %v2534 = vld [vmem:[%s9] sm:$0xf]
      %v2535 = vld [vmem:[%s9 + $0x4] sm:$0xf]
      %v2536 = vld [vmem:[%s9 + $0x8] sm:$0xf]
      %v2537 = vld [vmem:[%s9 + $0xc] sm:$0xf]
      %v2538 = vld [vmem:[%s10] sm:$0xff]
      %v2539 = vld [vmem:[%s10 + $0x8] sm:$0xff]
      %v2540 = vld [vmem:[%s10 + $0x10] sm:$0xff]
      %v2541 = vld [vmem:[%s10 + $0x18] sm:$0xff]
      %2543 = vset.pattern.permute.xlu0 0
      %2544 = vperm.xlu0 %2543, %v2538
      %v2545 = vpop.permute.xlu0 %2544
      %2548 = vset.pattern.permute.xlu0 0
      %2549 = vperm.xlu0 %2548, %v2539
      %v2550 = vpop.permute.xlu0 %2549
      %2553 = vset.pattern.permute.xlu0 0
      %2554 = vperm.xlu0 %2553, %v2540
      %v2555 = vpop.permute.xlu0 %2554
      %2558 = vset.pattern.permute.xlu0 0
      %2559 = vperm.xlu0 %2558, %v2541
      %v2560 = vpop.permute.xlu0 %2559
      %v2566 = vunpack.c.l.b16 %v2534
      %v2567 = vunpack.c.l.b16 %v2535
      %v2568 = vunpack.c.l.b16 %v2536
      %v2569 = vunpack.c.l.b16 %v2537
      %v2570 = vpack.c.b16 %v2567, %v2566
      %v2571 = vpack.c.b16 %v2569, %v2568
      %vm2572 = vcmask 261120
      %v2574 = vsel %vm2572, %v2570, 0
      %v2577 = vsel %vm2572, %v2571, 0
      %2579 = vmatpush.bf16.msra.mxu0 0
      %2580 = vmatpush.bf16.msra.mxu0 0
      %2581 = vmatpush.bf16.msra.mxu0 0
      %2582 = vmatpush.bf16.msra.mxu0 0
      %2583 = vmatpush.bf16.msra.mxu0 0
      %2584 = vmatpush.bf16.msra.mxu0 0
      %2585 = vmatpush.bf16.msra.mxu0 %v759
      %2586 = vmatpush.bf16.msra.mxu0 %v758
      %2587 = vmatmul.bf16.gmra.mxu0 %v2574
      %v2588 = vpop.f32.mrf.mxu0
      %v2589 = vadd.f32 %v2545, %v2588
      %v2590 = vpop.f32.mrf.mxu0
      %v2591 = vadd.f32 %v2550, %v2590
      %2592 = vmatmul.bf16.gmra.mxu0 %v2577
      %v2593 = vpop.f32.mrf.mxu0
      %v2594 = vadd.f32 %v2555, %v2593
      %v2595 = vpop.f32.mrf.mxu0
      %v2596 = vadd.f32 %v2560, %v2595
      %2597 = vdwg.mxu0
      %v2600 = vunpack.c.l.b16 %v756
      %v2601 = vunpack.c.l.b16 %v757
      %v2602 = vpack.c.b16 %v2601, %v2600
      %v2605 = vsel %vm766, %v2532, 0
      %v2608 = vsel %vm766, %v2533, 0
      %2610 = vmatpush.bf16.msra.mxu0 0
      %2611 = vmatpush.bf16.msra.mxu0 0
      %2612 = vmatpush.bf16.msra.mxu0 0
      %2613 = vmatpush.bf16.msra.mxu0 0
      %2614 = vmatpush.bf16.msra.mxu0 0
      %2615 = vmatpush.bf16.msra.mxu0 0
      %2616 = vmatpush.bf16.msra.mxu0 0
      %2617 = vmatpush.bf16.msra.mxu0 %v2602
      %2618 = vmatmul.bf16.gmra.mxu0 %v2605
      %v2619 = vpop.f32.mrf.mxu0
      %v2620 = vadd.f32 %v2589, %v2619
      %v2621 = vpop.f32.mrf.mxu0
      %v2622 = vadd.f32 %v2591, %v2621
      %2623 = vmatmul.bf16.gmra.mxu0 %v2608
      %v2624 = vpop.f32.mrf.mxu0
      %v2625 = vadd.f32 %v2594, %v2624
      %v2626 = vpop.f32.mrf.mxu0
      %v2627 = vadd.f32 %v2596, %v2626
      %2628 = vdwg.mxu0
      %v2629 = vmul.f32 %v2620, %v2620
      %v2630 = vmul.f32 %v2622, %v2622
      %v2631 = vmul.f32 %v2625, %v2625
      %v2632 = vmul.f32 %v2627, %v2627
      %v2633 = vmul.f32 %v2620, %v2629
      %v2634 = vmul.f32 %v2622, %v2630
      %v2635 = vmul.f32 %v2625, %v2631
      %v2636 = vmul.f32 %v2627, %v2632
      %v2637 = vmul.f32 %v2633, 0.044715
      %v2638 = vmul.f32 %v2634, 0.044715
      %v2639 = vmul.f32 %v2635, 0.044715
      %v2640 = vmul.f32 %v2636, 0.044715
      %v2641 = vadd.f32 %v2620, %v2637
      %v2642 = vadd.f32 %v2622, %v2638
      %v2643 = vadd.f32 %v2625, %v2639
      %v2644 = vadd.f32 %v2627, %v2640
      %v2645 = vmul.f32 %v2641, 0.7978846
      %v2646 = vmul.f32 %v2642, 0.7978846
      %v2647 = vmul.f32 %v2643, 0.7978846
      %v2648 = vmul.f32 %v2644, 0.7978846
      %v2649 = vtanh.pop %v2645
      %v2650 = vtanh.pop %v2646
      %v2651 = vtanh.pop %v2647
      %v2652 = vtanh.pop %v2648
      %v2653 = vadd.f32 %v2649, 1.0
      %v2654 = vadd.f32 %v2650, 1.0
      %v2655 = vadd.f32 %v2651, 1.0
      %v2656 = vadd.f32 %v2652, 1.0
      %v2657 = vmul.f32 %v2653, 0.5
      %v2658 = vmul.f32 %v2654, 0.5
      %v2659 = vmul.f32 %v2655, 0.5
      %v2660 = vmul.f32 %v2656, 0.5
      %v2661 = vmul.f32 %v2620, %v2657
      %v2662 = vmul.f32 %v2622, %v2658
      %v2663 = vmul.f32 %v2625, %v2659
      %v2664 = vmul.f32 %v2627, %v2660
      %v2665 = vpack.c.bf16 %v2662, %v2661
      %v2666 = vpack.c.bf16 %v2664, %v2663
      %v2668 = vsel %vm766, %v2665, 0
      %v2671 = vsel %vm766, %v2666, 0
      %2673 = vmatpush.bf16.msra.mxu0 0
      %2674 = vmatpush.bf16.msra.mxu0 0
      %2675 = vmatpush.bf16.msra.mxu0 0
      %2676 = vmatpush.bf16.msra.mxu0 0
      %2677 = vmatpush.bf16.msra.mxu0 0
      %2678 = vmatpush.bf16.msra.mxu0 0
      %2679 = vmatpush.bf16.msra.mxu0 0
      %2680 = vmatpush.bf16.msra.mxu0 %v764
      %2681 = vmatmul.bf16.gmra.mxu0 %v2668
      %v2682 = vpop.f32.mrf.mxu0
      %v2683 = vadd.f32 0.0, %v2682
      %v2684 = vpop.f32.mrf.mxu0
      %v2685 = vadd.f32 0.0, %v2684
      %2686 = vmatmul.bf16.gmra.mxu0 %v2671
      %v2687 = vpop.f32.mrf.mxu0
      %v2688 = vadd.f32 0.0, %v2687
      %v2689 = vpop.f32.mrf.mxu0
      %v2690 = vadd.f32 0.0, %v2689
      %2691 = vdwg.mxu0
      %s2692 = scalar_lea.vmem %s7, 1024
      %v2693 = vld [vmem:[%s2692] sm:$0xff]
      %v2694 = vld [vmem:[%s2692 + $0x8] sm:$0xff]
      %v2695 = vld [vmem:[%s2692 + $0x10] sm:$0xff]
      %v2696 = vld [vmem:[%s2692 + $0x18] sm:$0xff]
      %v2697 = vld [vmem:[%s2692 + $0x20] sm:$0xff]
      %v2698 = vld [vmem:[%s2692 + $0x28] sm:$0xff]
      %v2699 = vld [vmem:[%s2692 + $0x30] sm:$0xff]
      %v2700 = vld [vmem:[%s2692 + $0x38] sm:$0xff]
      %v2701 = vld [vmem:[%s2692 + $0x40] sm:$0xff]
      %v2702 = vld [vmem:[%s2692 + $0x48] sm:$0xff]
      %v2703 = vld [vmem:[%s2692 + $0x50] sm:$0xff]
      %v2704 = vld [vmem:[%s2692 + $0x58] sm:$0xff]
      %v2705 = vld [vmem:[%s2692 + $0x60] sm:$0xff]
      %v2706 = vld [vmem:[%s2692 + $0x68] sm:$0xff]
      %v2707 = vld [vmem:[%s2692 + $0x70] sm:$0xff]
      %v2708 = vld [vmem:[%s2692 + $0x78] sm:$0xff]
      %v2709 = vld [vmem:[%s2692 + $0x80] sm:$0xff]
      %v2710 = vld [vmem:[%s2692 + $0x88] sm:$0xff]
      %v2711 = vld [vmem:[%s2692 + $0x90] sm:$0xff]
      %v2712 = vld [vmem:[%s2692 + $0x98] sm:$0xff]
      %v2713 = vld [vmem:[%s2692 + $0xa0] sm:$0xff]
      %v2714 = vld [vmem:[%s2692 + $0xa8] sm:$0xff]
      %v2715 = vld [vmem:[%s2692 + $0xb0] sm:$0xff]
      %v2716 = vld [vmem:[%s2692 + $0xb8] sm:$0xff]
      %v2717 = vld [vmem:[%s2692 + $0xc0] sm:$0xff]
      %v2718 = vld [vmem:[%s2692 + $0xc8] sm:$0xff]
      %v2719 = vld [vmem:[%s2692 + $0xd0] sm:$0xff]
      %v2720 = vld [vmem:[%s2692 + $0xd8] sm:$0xff]
      %v2721 = vld [vmem:[%s2692 + $0xe0] sm:$0xff]
      %v2722 = vld [vmem:[%s2692 + $0xe8] sm:$0xff]
      %v2723 = vld [vmem:[%s2692 + $0xf0] sm:$0xff]
      %v2724 = vld [vmem:[%s2692 + $0xf8] sm:$0xff]
      %v2725 = vld [vmem:[%s2692 + $0x100] sm:$0xff]
      %v2726 = vld [vmem:[%s2692 + $0x108] sm:$0xff]
      %v2727 = vld [vmem:[%s2692 + $0x110] sm:$0xff]
      %v2728 = vld [vmem:[%s2692 + $0x118] sm:$0xff]
      %v2729 = vld [vmem:[%s2692 + $0x120] sm:$0xff]
      %v2730 = vld [vmem:[%s2692 + $0x128] sm:$0xff]
      %v2731 = vld [vmem:[%s2692 + $0x130] sm:$0xff]
      %v2732 = vld [vmem:[%s2692 + $0x138] sm:$0xff]
      %v2733 = vld [vmem:[%s2692 + $0x140] sm:$0xff]
      %v2734 = vld [vmem:[%s2692 + $0x148] sm:$0xff]
      %v2735 = vld [vmem:[%s2692 + $0x150] sm:$0xff]
      %v2736 = vld [vmem:[%s2692 + $0x158] sm:$0xff]
      %v2737 = vld [vmem:[%s2692 + $0x160] sm:$0xff]
      %v2738 = vld [vmem:[%s2692 + $0x168] sm:$0xff]
      %v2739 = vld [vmem:[%s2692 + $0x170] sm:$0xff]
      %v2740 = vld [vmem:[%s2692 + $0x178] sm:$0xff]
      %v2741 = vld [vmem:[%s2692 + $0x180] sm:$0xff]
      %v2742 = vld [vmem:[%s2692 + $0x188] sm:$0xff]
      %v2743 = vld [vmem:[%s2692 + $0x190] sm:$0xff]
      %v2744 = vld [vmem:[%s2692 + $0x198] sm:$0xff]
      %v2745 = vld [vmem:[%s2692 + $0x1a0] sm:$0xff]
      %v2746 = vld [vmem:[%s2692 + $0x1a8] sm:$0xff]
      %v2747 = vld [vmem:[%s2692 + $0x1b0] sm:$0xff]
      %v2748 = vld [vmem:[%s2692 + $0x1b8] sm:$0xff]
      %v2749 = vld [vmem:[%s2692 + $0x1c0] sm:$0xff]
      %v2750 = vld [vmem:[%s2692 + $0x1c8] sm:$0xff]
      %v2751 = vld [vmem:[%s2692 + $0x1d0] sm:$0xff]
      %v2752 = vld [vmem:[%s2692 + $0x1d8] sm:$0xff]
      %v2753 = vld [vmem:[%s2692 + $0x1e0] sm:$0xff]
      %v2754 = vld [vmem:[%s2692 + $0x1e8] sm:$0xff]
      %v2755 = vld [vmem:[%s2692 + $0x1f0] sm:$0xff]
      %v2756 = vld [vmem:[%s2692 + $0x1f8] sm:$0xff]
      %v2757 = vld [vmem:[%s2692 + $0x200] sm:$0xff]
      %v2758 = vld [vmem:[%s2692 + $0x208] sm:$0xff]
      %v2759 = vld [vmem:[%s2692 + $0x210] sm:$0xff]
      %v2760 = vld [vmem:[%s2692 + $0x218] sm:$0xff]
      %v2761 = vld [vmem:[%s2692 + $0x220] sm:$0xff]
      %v2762 = vld [vmem:[%s2692 + $0x228] sm:$0xff]
      %v2763 = vld [vmem:[%s2692 + $0x230] sm:$0xff]
      %v2764 = vld [vmem:[%s2692 + $0x238] sm:$0xff]
      %v2765 = vld [vmem:[%s2692 + $0x240] sm:$0xff]
      %v2766 = vld [vmem:[%s2692 + $0x248] sm:$0xff]
      %v2767 = vld [vmem:[%s2692 + $0x250] sm:$0xff]
      %v2768 = vld [vmem:[%s2692 + $0x258] sm:$0xff]
      %v2769 = vld [vmem:[%s2692 + $0x260] sm:$0xff]
      %v2770 = vld [vmem:[%s2692 + $0x268] sm:$0xff]
      %v2771 = vld [vmem:[%s2692 + $0x270] sm:$0xff]
      %v2772 = vld [vmem:[%s2692 + $0x278] sm:$0xff]
      %v2773 = vld [vmem:[%s2692 + $0x280] sm:$0xff]
      %v2774 = vld [vmem:[%s2692 + $0x288] sm:$0xff]
      %v2775 = vld [vmem:[%s2692 + $0x290] sm:$0xff]
      %v2776 = vld [vmem:[%s2692 + $0x298] sm:$0xff]
      %v2777 = vld [vmem:[%s2692 + $0x2a0] sm:$0xff]
      %v2778 = vld [vmem:[%s2692 + $0x2a8] sm:$0xff]
      %v2779 = vld [vmem:[%s2692 + $0x2b0] sm:$0xff]
      %v2780 = vld [vmem:[%s2692 + $0x2b8] sm:$0xff]
      %v2781 = vld [vmem:[%s2692 + $0x2c0] sm:$0xff]
      %v2782 = vld [vmem:[%s2692 + $0x2c8] sm:$0xff]
      %v2783 = vld [vmem:[%s2692 + $0x2d0] sm:$0xff]
      %v2784 = vld [vmem:[%s2692 + $0x2d8] sm:$0xff]
      %v2785 = vld [vmem:[%s2692 + $0x2e0] sm:$0xff]
      %v2786 = vld [vmem:[%s2692 + $0x2e8] sm:$0xff]
      %v2787 = vld [vmem:[%s2692 + $0x2f0] sm:$0xff]
      %v2788 = vld [vmem:[%s2692 + $0x2f8] sm:$0xff]
      %v2789 = vld [vmem:[%s2692 + $0x300] sm:$0xff]
      %v2790 = vld [vmem:[%s2692 + $0x308] sm:$0xff]
      %v2791 = vld [vmem:[%s2692 + $0x310] sm:$0xff]
      %v2792 = vld [vmem:[%s2692 + $0x318] sm:$0xff]
      %v2793 = vld [vmem:[%s2692 + $0x320] sm:$0xff]
      %v2794 = vld [vmem:[%s2692 + $0x328] sm:$0xff]
      %v2795 = vld [vmem:[%s2692 + $0x330] sm:$0xff]
      %v2796 = vld [vmem:[%s2692 + $0x338] sm:$0xff]
      %v2797 = vld [vmem:[%s2692 + $0x340] sm:$0xff]
      %v2798 = vld [vmem:[%s2692 + $0x348] sm:$0xff]
      %v2799 = vld [vmem:[%s2692 + $0x350] sm:$0xff]
      %v2800 = vld [vmem:[%s2692 + $0x358] sm:$0xff]
      %v2801 = vld [vmem:[%s2692 + $0x360] sm:$0xff]
      %v2802 = vld [vmem:[%s2692 + $0x368] sm:$0xff]
      %v2803 = vld [vmem:[%s2692 + $0x370] sm:$0xff]
      %v2804 = vld [vmem:[%s2692 + $0x378] sm:$0xff]
      %v2805 = vld [vmem:[%s2692 + $0x380] sm:$0xff]
      %v2806 = vld [vmem:[%s2692 + $0x388] sm:$0xff]
      %v2807 = vld [vmem:[%s2692 + $0x390] sm:$0xff]
      %v2808 = vld [vmem:[%s2692 + $0x398] sm:$0xff]
      %v2809 = vld [vmem:[%s2692 + $0x3a0] sm:$0xff]
      %v2810 = vld [vmem:[%s2692 + $0x3a8] sm:$0xff]
      %v2811 = vld [vmem:[%s2692 + $0x3b0] sm:$0xff]
      %v2812 = vld [vmem:[%s2692 + $0x3b8] sm:$0xff]
      %v2813 = vld [vmem:[%s2692 + $0x3c0] sm:$0xff]
      %v2814 = vld [vmem:[%s2692 + $0x3c8] sm:$0xff]
      %v2815 = vld [vmem:[%s2692 + $0x3d0] sm:$0xff]
      %v2816 = vld [vmem:[%s2692 + $0x3d8] sm:$0xff]
      %v2817 = vld [vmem:[%s2692 + $0x3e0] sm:$0xff]
      %v2818 = vld [vmem:[%s2692 + $0x3e8] sm:$0xff]
      %v2819 = vld [vmem:[%s2692 + $0x3f0] sm:$0xff]
      %v2820 = vld [vmem:[%s2692 + $0x3f8] sm:$0xff]
      %s2821 = scalar_lea.vmem %s8, 1024
      %v2822 = vld [vmem:[%s2821] sm:$0xff]
      %v2823 = vld [vmem:[%s2821 + $0x8] sm:$0xff]
      %v2824 = vld [vmem:[%s2821 + $0x10] sm:$0xff]
      %v2825 = vld [vmem:[%s2821 + $0x18] sm:$0xff]
      %v2826 = vld [vmem:[%s2821 + $0x20] sm:$0xff]
      %v2827 = vld [vmem:[%s2821 + $0x28] sm:$0xff]
      %v2828 = vld [vmem:[%s2821 + $0x30] sm:$0xff]
      %v2829 = vld [vmem:[%s2821 + $0x38] sm:$0xff]
      %v2830 = vld [vmem:[%s2821 + $0x40] sm:$0xff]
      %v2831 = vld [vmem:[%s2821 + $0x48] sm:$0xff]
      %v2832 = vld [vmem:[%s2821 + $0x50] sm:$0xff]
      %v2833 = vld [vmem:[%s2821 + $0x58] sm:$0xff]
      %v2834 = vld [vmem:[%s2821 + $0x60] sm:$0xff]
      %v2835 = vld [vmem:[%s2821 + $0x68] sm:$0xff]
      %v2836 = vld [vmem:[%s2821 + $0x70] sm:$0xff]
      %v2837 = vld [vmem:[%s2821 + $0x78] sm:$0xff]
      %v2838 = vld [vmem:[%s2821 + $0x80] sm:$0xff]
      %v2839 = vld [vmem:[%s2821 + $0x88] sm:$0xff]
      %v2840 = vld [vmem:[%s2821 + $0x90] sm:$0xff]
      %v2841 = vld [vmem:[%s2821 + $0x98] sm:$0xff]
      %v2842 = vld [vmem:[%s2821 + $0xa0] sm:$0xff]
      %v2843 = vld [vmem:[%s2821 + $0xa8] sm:$0xff]
      %v2844 = vld [vmem:[%s2821 + $0xb0] sm:$0xff]
      %v2845 = vld [vmem:[%s2821 + $0xb8] sm:$0xff]
      %v2846 = vld [vmem:[%s2821 + $0xc0] sm:$0xff]
      %v2847 = vld [vmem:[%s2821 + $0xc8] sm:$0xff]
      %v2848 = vld [vmem:[%s2821 + $0xd0] sm:$0xff]
      %v2849 = vld [vmem:[%s2821 + $0xd8] sm:$0xff]
      %v2850 = vld [vmem:[%s2821 + $0xe0] sm:$0xff]
      %v2851 = vld [vmem:[%s2821 + $0xe8] sm:$0xff]
      %v2852 = vld [vmem:[%s2821 + $0xf0] sm:$0xff]
      %v2853 = vld [vmem:[%s2821 + $0xf8] sm:$0xff]
      %v2854 = vld [vmem:[%s2821 + $0x100] sm:$0xff]
      %v2855 = vld [vmem:[%s2821 + $0x108] sm:$0xff]
      %v2856 = vld [vmem:[%s2821 + $0x110] sm:$0xff]
      %v2857 = vld [vmem:[%s2821 + $0x118] sm:$0xff]
      %v2858 = vld [vmem:[%s2821 + $0x120] sm:$0xff]
      %v2859 = vld [vmem:[%s2821 + $0x128] sm:$0xff]
      %v2860 = vld [vmem:[%s2821 + $0x130] sm:$0xff]
      %v2861 = vld [vmem:[%s2821 + $0x138] sm:$0xff]
      %v2862 = vld [vmem:[%s2821 + $0x140] sm:$0xff]
      %v2863 = vld [vmem:[%s2821 + $0x148] sm:$0xff]
      %v2864 = vld [vmem:[%s2821 + $0x150] sm:$0xff]
      %v2865 = vld [vmem:[%s2821 + $0x158] sm:$0xff]
      %v2866 = vld [vmem:[%s2821 + $0x160] sm:$0xff]
      %v2867 = vld [vmem:[%s2821 + $0x168] sm:$0xff]
      %v2868 = vld [vmem:[%s2821 + $0x170] sm:$0xff]
      %v2869 = vld [vmem:[%s2821 + $0x178] sm:$0xff]
      %v2870 = vld [vmem:[%s2821 + $0x180] sm:$0xff]
      %v2871 = vld [vmem:[%s2821 + $0x188] sm:$0xff]
      %v2872 = vld [vmem:[%s2821 + $0x190] sm:$0xff]
      %v2873 = vld [vmem:[%s2821 + $0x198] sm:$0xff]
      %v2874 = vld [vmem:[%s2821 + $0x1a0] sm:$0xff]
      %v2875 = vld [vmem:[%s2821 + $0x1a8] sm:$0xff]
      %v2876 = vld [vmem:[%s2821 + $0x1b0] sm:$0xff]
      %v2877 = vld [vmem:[%s2821 + $0x1b8] sm:$0xff]
      %v2878 = vld [vmem:[%s2821 + $0x1c0] sm:$0xff]
      %v2879 = vld [vmem:[%s2821 + $0x1c8] sm:$0xff]
      %v2880 = vld [vmem:[%s2821 + $0x1d0] sm:$0xff]
      %v2881 = vld [vmem:[%s2821 + $0x1d8] sm:$0xff]
      %v2882 = vld [vmem:[%s2821 + $0x1e0] sm:$0xff]
      %v2883 = vld [vmem:[%s2821 + $0x1e8] sm:$0xff]
      %v2884 = vld [vmem:[%s2821 + $0x1f0] sm:$0xff]
      %v2885 = vld [vmem:[%s2821 + $0x1f8] sm:$0xff]
      %v2886 = vld [vmem:[%s2821 + $0x200] sm:$0xff]
      %v2887 = vld [vmem:[%s2821 + $0x208] sm:$0xff]
      %v2888 = vld [vmem:[%s2821 + $0x210] sm:$0xff]
      %v2889 = vld [vmem:[%s2821 + $0x218] sm:$0xff]
      %v2890 = vld [vmem:[%s2821 + $0x220] sm:$0xff]
      %v2891 = vld [vmem:[%s2821 + $0x228] sm:$0xff]
      %v2892 = vld [vmem:[%s2821 + $0x230] sm:$0xff]
      %v2893 = vld [vmem:[%s2821 + $0x238] sm:$0xff]
      %v2894 = vld [vmem:[%s2821 + $0x240] sm:$0xff]
      %v2895 = vld [vmem:[%s2821 + $0x248] sm:$0xff]
      %v2896 = vld [vmem:[%s2821 + $0x250] sm:$0xff]
      %v2897 = vld [vmem:[%s2821 + $0x258] sm:$0xff]
      %v2898 = vld [vmem:[%s2821 + $0x260] sm:$0xff]
      %v2899 = vld [vmem:[%s2821 + $0x268] sm:$0xff]
      %v2900 = vld [vmem:[%s2821 + $0x270] sm:$0xff]
      %v2901 = vld [vmem:[%s2821 + $0x278] sm:$0xff]
      %v2902 = vld [vmem:[%s2821 + $0x280] sm:$0xff]
      %v2903 = vld [vmem:[%s2821 + $0x288] sm:$0xff]
      %v2904 = vld [vmem:[%s2821 + $0x290] sm:$0xff]
      %v2905 = vld [vmem:[%s2821 + $0x298] sm:$0xff]
      %v2906 = vld [vmem:[%s2821 + $0x2a0] sm:$0xff]
      %v2907 = vld [vmem:[%s2821 + $0x2a8] sm:$0xff]
      %v2908 = vld [vmem:[%s2821 + $0x2b0] sm:$0xff]
      %v2909 = vld [vmem:[%s2821 + $0x2b8] sm:$0xff]
      %v2910 = vld [vmem:[%s2821 + $0x2c0] sm:$0xff]
      %v2911 = vld [vmem:[%s2821 + $0x2c8] sm:$0xff]
      %v2912 = vld [vmem:[%s2821 + $0x2d0] sm:$0xff]
      %v2913 = vld [vmem:[%s2821 + $0x2d8] sm:$0xff]
      %v2914 = vld [vmem:[%s2821 + $0x2e0] sm:$0xff]
      %v2915 = vld [vmem:[%s2821 + $0x2e8] sm:$0xff]
      %v2916 = vld [vmem:[%s2821 + $0x2f0] sm:$0xff]
      %v2917 = vld [vmem:[%s2821 + $0x2f8] sm:$0xff]
      %v2918 = vld [vmem:[%s2821 + $0x300] sm:$0xff]
      %v2919 = vld [vmem:[%s2821 + $0x308] sm:$0xff]
      %v2920 = vld [vmem:[%s2821 + $0x310] sm:$0xff]
      %v2921 = vld [vmem:[%s2821 + $0x318] sm:$0xff]
      %v2922 = vld [vmem:[%s2821 + $0x320] sm:$0xff]
      %v2923 = vld [vmem:[%s2821 + $0x328] sm:$0xff]
      %v2924 = vld [vmem:[%s2821 + $0x330] sm:$0xff]
      %v2925 = vld [vmem:[%s2821 + $0x338] sm:$0xff]
      %v2926 = vld [vmem:[%s2821 + $0x340] sm:$0xff]
      %v2927 = vld [vmem:[%s2821 + $0x348] sm:$0xff]
      %v2928 = vld [vmem:[%s2821 + $0x350] sm:$0xff]
      %v2929 = vld [vmem:[%s2821 + $0x358] sm:$0xff]
      %v2930 = vld [vmem:[%s2821 + $0x360] sm:$0xff]
      %v2931 = vld [vmem:[%s2821 + $0x368] sm:$0xff]
      %v2932 = vld [vmem:[%s2821 + $0x370] sm:$0xff]
      %v2933 = vld [vmem:[%s2821 + $0x378] sm:$0xff]
      %v2934 = vld [vmem:[%s2821 + $0x380] sm:$0xff]
      %v2935 = vld [vmem:[%s2821 + $0x388] sm:$0xff]
      %v2936 = vld [vmem:[%s2821 + $0x390] sm:$0xff]
      %v2937 = vld [vmem:[%s2821 + $0x398] sm:$0xff]
      %v2938 = vld [vmem:[%s2821 + $0x3a0] sm:$0xff]
      %v2939 = vld [vmem:[%s2821 + $0x3a8] sm:$0xff]
      %v2940 = vld [vmem:[%s2821 + $0x3b0] sm:$0xff]
      %v2941 = vld [vmem:[%s2821 + $0x3b8] sm:$0xff]
      %v2942 = vld [vmem:[%s2821 + $0x3c0] sm:$0xff]
      %v2943 = vld [vmem:[%s2821 + $0x3c8] sm:$0xff]
      %v2944 = vld [vmem:[%s2821 + $0x3d0] sm:$0xff]
      %v2945 = vld [vmem:[%s2821 + $0x3d8] sm:$0xff]
      %v2946 = vld [vmem:[%s2821 + $0x3e0] sm:$0xff]
      %v2947 = vld [vmem:[%s2821 + $0x3e8] sm:$0xff]
      %v2948 = vld [vmem:[%s2821 + $0x3f0] sm:$0xff]
      %v2949 = vld [vmem:[%s2821 + $0x3f8] sm:$0xff]
      %v2954 = vrot.slane %v2683, 1
      %v2955 = vrot.slane %v2683, 2
      %v2956 = vrot.slane %v2683, 3
      %v2957 = vrot.slane %v2683, 4
      %v2958 = vrot.slane %v2683, 5
      %v2959 = vrot.slane %v2683, 6
      %v2960 = vrot.slane %v2683, 7
      %v2961 = vrot.slane %v2685, 1
      %v2962 = vrot.slane %v2685, 2
      %v2963 = vrot.slane %v2685, 3
      %v2964 = vrot.slane %v2685, 4
      %v2965 = vrot.slane %v2685, 5
      %v2966 = vrot.slane %v2685, 6
      %v2967 = vrot.slane %v2685, 7
      %v2968 = vrot.slane %v2688, 1
      %v2969 = vrot.slane %v2688, 2
      %v2970 = vrot.slane %v2688, 3
      %v2971 = vrot.slane %v2688, 4
      %v2972 = vrot.slane %v2688, 5
      %v2973 = vrot.slane %v2688, 6
      %v2974 = vrot.slane %v2688, 7
      %v2975 = vrot.slane %v2690, 1
      %v2976 = vrot.slane %v2690, 2
      %v2977 = vrot.slane %v2690, 3
      %v2978 = vrot.slane %v2690, 4
      %v2979 = vrot.slane %v2690, 5
      %v2980 = vrot.slane %v2690, 6
      %v2981 = vrot.slane %v2690, 7
      %v2982 = vperm.slane %v2683, 0
      %v2983 = vperm.slane %v2954, 0
      %v2984 = vperm.slane %v2955, 0
      %v2985 = vperm.slane %v2956, 0
      %v2986 = vperm.slane %v2957, 0
      %v2987 = vperm.slane %v2958, 0
      %v2988 = vperm.slane %v2959, 0
      %v2989 = vperm.slane %v2960, 0
      %v2990 = vperm.slane %v2685, 0
      %v2991 = vperm.slane %v2961, 0
      %v2992 = vperm.slane %v2962, 0
      %v2993 = vperm.slane %v2963, 0
      %v2994 = vperm.slane %v2964, 0
      %v2995 = vperm.slane %v2965, 0
      %v2996 = vperm.slane %v2966, 0
      %v2997 = vperm.slane %v2967, 0
      %v2998 = vperm.slane %v2688, 0
      %v2999 = vperm.slane %v2968, 0
      %v3000 = vperm.slane %v2969, 0
      %v3001 = vperm.slane %v2970, 0
      %v3002 = vperm.slane %v2971, 0
      %v3003 = vperm.slane %v2972, 0
      %v3004 = vperm.slane %v2973, 0
      %v3005 = vperm.slane %v2974, 0
      %v3006 = vperm.slane %v2690, 0
      %v3007 = vperm.slane %v2975, 0
      %v3008 = vperm.slane %v2976, 0
      %v3009 = vperm.slane %v2977, 0
      %v3010 = vperm.slane %v2978, 0
      %v3011 = vperm.slane %v2979, 0
      %v3012 = vperm.slane %v2980, 0
      %v3013 = vperm.slane %v2981, 0
      %v3046 = vmul.f32 %v2693, %v2982
      %v3047 = vmul.f32 %v2694, %v2982
      %v3048 = vmul.f32 %v2695, %v2982
      %v3049 = vmul.f32 %v2696, %v2982
      %v3050 = vmul.f32 %v2697, %v2983
      %v3051 = vmul.f32 %v2698, %v2983
      %v3052 = vmul.f32 %v2699, %v2983
      %v3053 = vmul.f32 %v2700, %v2983
      %v3054 = vmul.f32 %v2701, %v2984
      %v3055 = vmul.f32 %v2702, %v2984
      %v3056 = vmul.f32 %v2703, %v2984
      %v3057 = vmul.f32 %v2704, %v2984
      %v3058 = vmul.f32 %v2705, %v2985
      %v3059 = vmul.f32 %v2706, %v2985
      %v3060 = vmul.f32 %v2707, %v2985
      %v3061 = vmul.f32 %v2708, %v2985
      %v3062 = vmul.f32 %v2709, %v2986
      %v3063 = vmul.f32 %v2710, %v2986
      %v3064 = vmul.f32 %v2711, %v2986
      %v3065 = vmul.f32 %v2712, %v2986
      %v3066 = vmul.f32 %v2713, %v2987
      %v3067 = vmul.f32 %v2714, %v2987
      %v3068 = vmul.f32 %v2715, %v2987
      %v3069 = vmul.f32 %v2716, %v2987
      %v3070 = vmul.f32 %v2717, %v2988
      %v3071 = vmul.f32 %v2718, %v2988
      %v3072 = vmul.f32 %v2719, %v2988
      %v3073 = vmul.f32 %v2720, %v2988
      %v3074 = vmul.f32 %v2721, %v2989
      %v3075 = vmul.f32 %v2722, %v2989
      %v3076 = vmul.f32 %v2723, %v2989
      %v3077 = vmul.f32 %v2724, %v2989
      %v3078 = vmul.f32 %v2725, %v2990
      %v3079 = vmul.f32 %v2726, %v2990
      %v3080 = vmul.f32 %v2727, %v2990
      %v3081 = vmul.f32 %v2728, %v2990
      %v3082 = vmul.f32 %v2729, %v2991
      %v3083 = vmul.f32 %v2730, %v2991
      %v3084 = vmul.f32 %v2731, %v2991
      %v3085 = vmul.f32 %v2732, %v2991
      %v3086 = vmul.f32 %v2733, %v2992
      %v3087 = vmul.f32 %v2734, %v2992
      %v3088 = vmul.f32 %v2735, %v2992
      %v3089 = vmul.f32 %v2736, %v2992
      %v3090 = vmul.f32 %v2737, %v2993
      %v3091 = vmul.f32 %v2738, %v2993
      %v3092 = vmul.f32 %v2739, %v2993
      %v3093 = vmul.f32 %v2740, %v2993
      %v3094 = vmul.f32 %v2741, %v2994
      %v3095 = vmul.f32 %v2742, %v2994
      %v3096 = vmul.f32 %v2743, %v2994
      %v3097 = vmul.f32 %v2744, %v2994
      %v3098 = vmul.f32 %v2745, %v2995
      %v3099 = vmul.f32 %v2746, %v2995
      %v3100 = vmul.f32 %v2747, %v2995
      %v3101 = vmul.f32 %v2748, %v2995
      %v3102 = vmul.f32 %v2749, %v2996
      %v3103 = vmul.f32 %v2750, %v2996
      %v3104 = vmul.f32 %v2751, %v2996
      %v3105 = vmul.f32 %v2752, %v2996
      %v3106 = vmul.f32 %v2753, %v2997
      %v3107 = vmul.f32 %v2754, %v2997
      %v3108 = vmul.f32 %v2755, %v2997
      %v3109 = vmul.f32 %v2756, %v2997
      %v3110 = vmul.f32 %v2757, %v2998
      %v3111 = vmul.f32 %v2758, %v2998
      %v3112 = vmul.f32 %v2759, %v2998
      %v3113 = vmul.f32 %v2760, %v2998
      %v3114 = vmul.f32 %v2761, %v2999
      %v3115 = vmul.f32 %v2762, %v2999
      %v3116 = vmul.f32 %v2763, %v2999
      %v3117 = vmul.f32 %v2764, %v2999
      %v3118 = vmul.f32 %v2765, %v3000
      %v3119 = vmul.f32 %v2766, %v3000
      %v3120 = vmul.f32 %v2767, %v3000
      %v3121 = vmul.f32 %v2768, %v3000
      %v3122 = vmul.f32 %v2769, %v3001
      %v3123 = vmul.f32 %v2770, %v3001
      %v3124 = vmul.f32 %v2771, %v3001
      %v3125 = vmul.f32 %v2772, %v3001
      %v3126 = vmul.f32 %v2773, %v3002
      %v3127 = vmul.f32 %v2774, %v3002
      %v3128 = vmul.f32 %v2775, %v3002
      %v3129 = vmul.f32 %v2776, %v3002
      %v3130 = vmul.f32 %v2777, %v3003
      %v3131 = vmul.f32 %v2778, %v3003
      %v3132 = vmul.f32 %v2779, %v3003
      %v3133 = vmul.f32 %v2780, %v3003
      %v3134 = vmul.f32 %v2781, %v3004
      %v3135 = vmul.f32 %v2782, %v3004
      %v3136 = vmul.f32 %v2783, %v3004
      %v3137 = vmul.f32 %v2784, %v3004
      %v3138 = vmul.f32 %v2785, %v3005
      %v3139 = vmul.f32 %v2786, %v3005
      %v3140 = vmul.f32 %v2787, %v3005
      %v3141 = vmul.f32 %v2788, %v3005
      %v3142 = vmul.f32 %v2789, %v3006
      %v3143 = vmul.f32 %v2790, %v3006
      %v3144 = vmul.f32 %v2791, %v3006
      %v3145 = vmul.f32 %v2792, %v3006
      %v3146 = vmul.f32 %v2793, %v3007
      %v3147 = vmul.f32 %v2794, %v3007
      %v3148 = vmul.f32 %v2795, %v3007
      %v3149 = vmul.f32 %v2796, %v3007
      %v3150 = vmul.f32 %v2797, %v3008
      %v3151 = vmul.f32 %v2798, %v3008
      %v3152 = vmul.f32 %v2799, %v3008
      %v3153 = vmul.f32 %v2800, %v3008
      %v3154 = vmul.f32 %v2801, %v3009
      %v3155 = vmul.f32 %v2802, %v3009
      %v3156 = vmul.f32 %v2803, %v3009
      %v3157 = vmul.f32 %v2804, %v3009
      %v3158 = vmul.f32 %v2805, %v3010
      %v3159 = vmul.f32 %v2806, %v3010
      %v3160 = vmul.f32 %v2807, %v3010
      %v3161 = vmul.f32 %v2808, %v3010
      %v3162 = vmul.f32 %v2809, %v3011
      %v3163 = vmul.f32 %v2810, %v3011
      %v3164 = vmul.f32 %v2811, %v3011
      %v3165 = vmul.f32 %v2812, %v3011
      %v3166 = vmul.f32 %v2813, %v3012
      %v3167 = vmul.f32 %v2814, %v3012
      %v3168 = vmul.f32 %v2815, %v3012
      %v3169 = vmul.f32 %v2816, %v3012
      %v3170 = vmul.f32 %v2817, %v3013
      %v3171 = vmul.f32 %v2818, %v3013
      %v3172 = vmul.f32 %v2819, %v3013
      %v3173 = vmul.f32 %v2820, %v3013
      %3174 = vrot.lane.b32.xlu0 %v2982, 120
      %v3175 = vpop.permute.xlu0 %3174
      %3176 = vrot.lane.b32.xlu0 %v2983, 120
      %v3177 = vpop.permute.xlu0 %3176
      %3178 = vrot.lane.b32.xlu0 %v2984, 120
      %v3179 = vpop.permute.xlu0 %3178
      %3180 = vrot.lane.b32.xlu0 %v2985, 120
      %v3181 = vpop.permute.xlu0 %3180
      %3182 = vrot.lane.b32.xlu0 %v2986, 120
      %v3183 = vpop.permute.xlu0 %3182
      %3184 = vrot.lane.b32.xlu0 %v2987, 120
      %v3185 = vpop.permute.xlu0 %3184
      %3186 = vrot.lane.b32.xlu0 %v2988, 120
      %v3187 = vpop.permute.xlu0 %3186
      %3188 = vrot.lane.b32.xlu0 %v2989, 120
      %v3189 = vpop.permute.xlu0 %3188
      %3190 = vrot.lane.b32.xlu0 %v2990, 120
      %v3191 = vpop.permute.xlu0 %3190
      %3192 = vrot.lane.b32.xlu0 %v2991, 120
      %v3193 = vpop.permute.xlu0 %3192
      %3194 = vrot.lane.b32.xlu0 %v2992, 120
      %v3195 = vpop.permute.xlu0 %3194
      %3196 = vrot.lane.b32.xlu0 %v2993, 120
      %v3197 = vpop.permute.xlu0 %3196
      %3198 = vrot.lane.b32.xlu0 %v2994, 120
      %v3199 = vpop.permute.xlu0 %3198
      %3200 = vrot.lane.b32.xlu0 %v2995, 120
      %v3201 = vpop.permute.xlu0 %3200
      %3202 = vrot.lane.b32.xlu0 %v2996, 120
      %v3203 = vpop.permute.xlu0 %3202
      %3204 = vrot.lane.b32.xlu0 %v2997, 120
      %v3205 = vpop.permute.xlu0 %3204
      %3206 = vrot.lane.b32.xlu0 %v2998, 120
      %v3207 = vpop.permute.xlu0 %3206
      %3208 = vrot.lane.b32.xlu0 %v2999, 120
      %v3209 = vpop.permute.xlu0 %3208
      %3210 = vrot.lane.b32.xlu0 %v3000, 120
      %v3211 = vpop.permute.xlu0 %3210
      %3212 = vrot.lane.b32.xlu0 %v3001, 120
      %v3213 = vpop.permute.xlu0 %3212
      %3214 = vrot.lane.b32.xlu0 %v3002, 120
      %v3215 = vpop.permute.xlu0 %3214
      %3216 = vrot.lane.b32.xlu0 %v3003, 120
      %v3217 = vpop.permute.xlu0 %3216
      %3218 = vrot.lane.b32.xlu0 %v3004, 120
      %v3219 = vpop.permute.xlu0 %3218
      %3220 = vrot.lane.b32.xlu0 %v3005, 120
      %v3221 = vpop.permute.xlu0 %3220
      %3222 = vrot.lane.b32.xlu0 %v3006, 120
      %v3223 = vpop.permute.xlu0 %3222
      %3224 = vrot.lane.b32.xlu0 %v3007, 120
      %v3225 = vpop.permute.xlu0 %3224
      %3226 = vrot.lane.b32.xlu0 %v3008, 120
      %v3227 = vpop.permute.xlu0 %3226
      %3228 = vrot.lane.b32.xlu0 %v3009, 120
      %v3229 = vpop.permute.xlu0 %3228
      %3230 = vrot.lane.b32.xlu0 %v3010, 120
      %v3231 = vpop.permute.xlu0 %3230
      %3232 = vrot.lane.b32.xlu0 %v3011, 120
      %v3233 = vpop.permute.xlu0 %3232
      %3234 = vrot.lane.b32.xlu0 %v3012, 120
      %v3235 = vpop.permute.xlu0 %3234
      %3236 = vrot.lane.b32.xlu0 %v3013, 120
      %v3237 = vpop.permute.xlu0 %3236
      %v3270 = vmul.f32 %v2822, %v3175
      %v3271 = vmul.f32 %v2823, %v3175
      %v3272 = vmul.f32 %v2824, %v3175
      %v3273 = vmul.f32 %v2825, %v3175
      %v3274 = vmul.f32 %v2826, %v3177
      %v3275 = vmul.f32 %v2827, %v3177
      %v3276 = vmul.f32 %v2828, %v3177
      %v3277 = vmul.f32 %v2829, %v3177
      %v3278 = vmul.f32 %v2830, %v3179
      %v3279 = vmul.f32 %v2831, %v3179
      %v3280 = vmul.f32 %v2832, %v3179
      %v3281 = vmul.f32 %v2833, %v3179
      %v3282 = vmul.f32 %v2834, %v3181
      %v3283 = vmul.f32 %v2835, %v3181
      %v3284 = vmul.f32 %v2836, %v3181
      %v3285 = vmul.f32 %v2837, %v3181
      %v3286 = vmul.f32 %v2838, %v3183
      %v3287 = vmul.f32 %v2839, %v3183
      %v3288 = vmul.f32 %v2840, %v3183
      %v3289 = vmul.f32 %v2841, %v3183
      %v3290 = vmul.f32 %v2842, %v3185
      %v3291 = vmul.f32 %v2843, %v3185
      %v3292 = vmul.f32 %v2844, %v3185
      %v3293 = vmul.f32 %v2845, %v3185
      %v3294 = vmul.f32 %v2846, %v3187
      %v3295 = vmul.f32 %v2847, %v3187
      %v3296 = vmul.f32 %v2848, %v3187
      %v3297 = vmul.f32 %v2849, %v3187
      %v3298 = vmul.f32 %v2850, %v3189
      %v3299 = vmul.f32 %v2851, %v3189
      %v3300 = vmul.f32 %v2852, %v3189
      %v3301 = vmul.f32 %v2853, %v3189
      %v3302 = vmul.f32 %v2854, %v3191
      %v3303 = vmul.f32 %v2855, %v3191
      %v3304 = vmul.f32 %v2856, %v3191
      %v3305 = vmul.f32 %v2857, %v3191
      %v3306 = vmul.f32 %v2858, %v3193
      %v3307 = vmul.f32 %v2859, %v3193
      %v3308 = vmul.f32 %v2860, %v3193
      %v3309 = vmul.f32 %v2861, %v3193
      %v3310 = vmul.f32 %v2862, %v3195
      %v3311 = vmul.f32 %v2863, %v3195
      %v3312 = vmul.f32 %v2864, %v3195
      %v3313 = vmul.f32 %v2865, %v3195
      %v3314 = vmul.f32 %v2866, %v3197
      %v3315 = vmul.f32 %v2867, %v3197
      %v3316 = vmul.f32 %v2868, %v3197
      %v3317 = vmul.f32 %v2869, %v3197
      %v3318 = vmul.f32 %v2870, %v3199
      %v3319 = vmul.f32 %v2871, %v3199
      %v3320 = vmul.f32 %v2872, %v3199
      %v3321 = vmul.f32 %v2873, %v3199
      %v3322 = vmul.f32 %v2874, %v3201
      %v3323 = vmul.f32 %v2875, %v3201
      %v3324 = vmul.f32 %v2876, %v3201
      %v3325 = vmul.f32 %v2877, %v3201
      %v3326 = vmul.f32 %v2878, %v3203
      %v3327 = vmul.f32 %v2879, %v3203
      %v3328 = vmul.f32 %v2880, %v3203
      %v3329 = vmul.f32 %v2881, %v3203
      %v3330 = vmul.f32 %v2882, %v3205
      %v3331 = vmul.f32 %v2883, %v3205
      %v3332 = vmul.f32 %v2884, %v3205
      %v3333 = vmul.f32 %v2885, %v3205
      %v3334 = vmul.f32 %v2886, %v3207
      %v3335 = vmul.f32 %v2887, %v3207
      %v3336 = vmul.f32 %v2888, %v3207
      %v3337 = vmul.f32 %v2889, %v3207
      %v3338 = vmul.f32 %v2890, %v3209
      %v3339 = vmul.f32 %v2891, %v3209
      %v3340 = vmul.f32 %v2892, %v3209
      %v3341 = vmul.f32 %v2893, %v3209
      %v3342 = vmul.f32 %v2894, %v3211
      %v3343 = vmul.f32 %v2895, %v3211
      %v3344 = vmul.f32 %v2896, %v3211
      %v3345 = vmul.f32 %v2897, %v3211
      %v3346 = vmul.f32 %v2898, %v3213
      %v3347 = vmul.f32 %v2899, %v3213
      %v3348 = vmul.f32 %v2900, %v3213
      %v3349 = vmul.f32 %v2901, %v3213
      %v3350 = vmul.f32 %v2902, %v3215
      %v3351 = vmul.f32 %v2903, %v3215
      %v3352 = vmul.f32 %v2904, %v3215
      %v3353 = vmul.f32 %v2905, %v3215
      %v3354 = vmul.f32 %v2906, %v3217
      %v3355 = vmul.f32 %v2907, %v3217
      %v3356 = vmul.f32 %v2908, %v3217
      %v3357 = vmul.f32 %v2909, %v3217
      %v3358 = vmul.f32 %v2910, %v3219
      %v3359 = vmul.f32 %v2911, %v3219
      %v3360 = vmul.f32 %v2912, %v3219
      %v3361 = vmul.f32 %v2913, %v3219
      %v3362 = vmul.f32 %v2914, %v3221
      %v3363 = vmul.f32 %v2915, %v3221
      %v3364 = vmul.f32 %v2916, %v3221
      %v3365 = vmul.f32 %v2917, %v3221
      %v3366 = vmul.f32 %v2918, %v3223
      %v3367 = vmul.f32 %v2919, %v3223
      %v3368 = vmul.f32 %v2920, %v3223
      %v3369 = vmul.f32 %v2921, %v3223
      %v3370 = vmul.f32 %v2922, %v3225
      %v3371 = vmul.f32 %v2923, %v3225
      %v3372 = vmul.f32 %v2924, %v3225
      %v3373 = vmul.f32 %v2925, %v3225
      %v3374 = vmul.f32 %v2926, %v3227
      %v3375 = vmul.f32 %v2927, %v3227
      %v3376 = vmul.f32 %v2928, %v3227
      %v3377 = vmul.f32 %v2929, %v3227
      %v3378 = vmul.f32 %v2930, %v3229
      %v3379 = vmul.f32 %v2931, %v3229
      %v3380 = vmul.f32 %v2932, %v3229
      %v3381 = vmul.f32 %v2933, %v3229
      %v3382 = vmul.f32 %v2934, %v3231
      %v3383 = vmul.f32 %v2935, %v3231
      %v3384 = vmul.f32 %v2936, %v3231
      %v3385 = vmul.f32 %v2937, %v3231
      %v3386 = vmul.f32 %v2938, %v3233
      %v3387 = vmul.f32 %v2939, %v3233
      %v3388 = vmul.f32 %v2940, %v3233
      %v3389 = vmul.f32 %v2941, %v3233
      %v3390 = vmul.f32 %v2942, %v3235
      %v3391 = vmul.f32 %v2943, %v3235
      %v3392 = vmul.f32 %v2944, %v3235
      %v3393 = vmul.f32 %v2945, %v3235
      %v3394 = vmul.f32 %v2946, %v3237
      %v3395 = vmul.f32 %v2947, %v3237
      %v3396 = vmul.f32 %v2948, %v3237
      %v3397 = vmul.f32 %v2949, %v3237
      %v3398 = vsub.f32 %v3046, %v3270
      %v3399 = vsub.f32 %v3047, %v3271
      %v3400 = vsub.f32 %v3048, %v3272
      %v3401 = vsub.f32 %v3049, %v3273
      %v3402 = vsub.f32 %v3050, %v3274
      %v3403 = vsub.f32 %v3051, %v3275
      %v3404 = vsub.f32 %v3052, %v3276
      %v3405 = vsub.f32 %v3053, %v3277
      %v3406 = vsub.f32 %v3054, %v3278
      %v3407 = vsub.f32 %v3055, %v3279
      %v3408 = vsub.f32 %v3056, %v3280
      %v3409 = vsub.f32 %v3057, %v3281
      %v3410 = vsub.f32 %v3058, %v3282
      %v3411 = vsub.f32 %v3059, %v3283
      %v3412 = vsub.f32 %v3060, %v3284
      %v3413 = vsub.f32 %v3061, %v3285
      %v3414 = vsub.f32 %v3062, %v3286
      %v3415 = vsub.f32 %v3063, %v3287
      %v3416 = vsub.f32 %v3064, %v3288
      %v3417 = vsub.f32 %v3065, %v3289
      %v3418 = vsub.f32 %v3066, %v3290
      %v3419 = vsub.f32 %v3067, %v3291
      %v3420 = vsub.f32 %v3068, %v3292
      %v3421 = vsub.f32 %v3069, %v3293
      %v3422 = vsub.f32 %v3070, %v3294
      %v3423 = vsub.f32 %v3071, %v3295
      %v3424 = vsub.f32 %v3072, %v3296
      %v3425 = vsub.f32 %v3073, %v3297
      %v3426 = vsub.f32 %v3074, %v3298
      %v3427 = vsub.f32 %v3075, %v3299
      %v3428 = vsub.f32 %v3076, %v3300
      %v3429 = vsub.f32 %v3077, %v3301
      %v3430 = vsub.f32 %v3078, %v3302
      %v3431 = vsub.f32 %v3079, %v3303
      %v3432 = vsub.f32 %v3080, %v3304
      %v3433 = vsub.f32 %v3081, %v3305
      %v3434 = vsub.f32 %v3082, %v3306
      %v3435 = vsub.f32 %v3083, %v3307
      %v3436 = vsub.f32 %v3084, %v3308
      %v3437 = vsub.f32 %v3085, %v3309
      %v3438 = vsub.f32 %v3086, %v3310
      %v3439 = vsub.f32 %v3087, %v3311
      %v3440 = vsub.f32 %v3088, %v3312
      %v3441 = vsub.f32 %v3089, %v3313
      %v3442 = vsub.f32 %v3090, %v3314
      %v3443 = vsub.f32 %v3091, %v3315
      %v3444 = vsub.f32 %v3092, %v3316
      %v3445 = vsub.f32 %v3093, %v3317
      %v3446 = vsub.f32 %v3094, %v3318
      %v3447 = vsub.f32 %v3095, %v3319
      %v3448 = vsub.f32 %v3096, %v3320
      %v3449 = vsub.f32 %v3097, %v3321
      %v3450 = vsub.f32 %v3098, %v3322
      %v3451 = vsub.f32 %v3099, %v3323
      %v3452 = vsub.f32 %v3100, %v3324
      %v3453 = vsub.f32 %v3101, %v3325
      %v3454 = vsub.f32 %v3102, %v3326
      %v3455 = vsub.f32 %v3103, %v3327
      %v3456 = vsub.f32 %v3104, %v3328
      %v3457 = vsub.f32 %v3105, %v3329
      %v3458 = vsub.f32 %v3106, %v3330
      %v3459 = vsub.f32 %v3107, %v3331
      %v3460 = vsub.f32 %v3108, %v3332
      %v3461 = vsub.f32 %v3109, %v3333
      %v3462 = vsub.f32 %v3110, %v3334
      %v3463 = vsub.f32 %v3111, %v3335
      %v3464 = vsub.f32 %v3112, %v3336
      %v3465 = vsub.f32 %v3113, %v3337
      %v3466 = vsub.f32 %v3114, %v3338
      %v3467 = vsub.f32 %v3115, %v3339
      %v3468 = vsub.f32 %v3116, %v3340
      %v3469 = vsub.f32 %v3117, %v3341
      %v3470 = vsub.f32 %v3118, %v3342
      %v3471 = vsub.f32 %v3119, %v3343
      %v3472 = vsub.f32 %v3120, %v3344
      %v3473 = vsub.f32 %v3121, %v3345
      %v3474 = vsub.f32 %v3122, %v3346
      %v3475 = vsub.f32 %v3123, %v3347
      %v3476 = vsub.f32 %v3124, %v3348
      %v3477 = vsub.f32 %v3125, %v3349
      %v3478 = vsub.f32 %v3126, %v3350
      %v3479 = vsub.f32 %v3127, %v3351
      %v3480 = vsub.f32 %v3128, %v3352
      %v3481 = vsub.f32 %v3129, %v3353
      %v3482 = vsub.f32 %v3130, %v3354
      %v3483 = vsub.f32 %v3131, %v3355
      %v3484 = vsub.f32 %v3132, %v3356
      %v3485 = vsub.f32 %v3133, %v3357
      %v3486 = vsub.f32 %v3134, %v3358
      %v3487 = vsub.f32 %v3135, %v3359
      %v3488 = vsub.f32 %v3136, %v3360
      %v3489 = vsub.f32 %v3137, %v3361
      %v3490 = vsub.f32 %v3138, %v3362
      %v3491 = vsub.f32 %v3139, %v3363
      %v3492 = vsub.f32 %v3140, %v3364
      %v3493 = vsub.f32 %v3141, %v3365
      %v3494 = vsub.f32 %v3142, %v3366
      %v3495 = vsub.f32 %v3143, %v3367
      %v3496 = vsub.f32 %v3144, %v3368
      %v3497 = vsub.f32 %v3145, %v3369
      %v3498 = vsub.f32 %v3146, %v3370
      %v3499 = vsub.f32 %v3147, %v3371
      %v3500 = vsub.f32 %v3148, %v3372
      %v3501 = vsub.f32 %v3149, %v3373
      %v3502 = vsub.f32 %v3150, %v3374
      %v3503 = vsub.f32 %v3151, %v3375
      %v3504 = vsub.f32 %v3152, %v3376
      %v3505 = vsub.f32 %v3153, %v3377
      %v3506 = vsub.f32 %v3154, %v3378
      %v3507 = vsub.f32 %v3155, %v3379
      %v3508 = vsub.f32 %v3156, %v3380
      %v3509 = vsub.f32 %v3157, %v3381
      %v3510 = vsub.f32 %v3158, %v3382
      %v3511 = vsub.f32 %v3159, %v3383
      %v3512 = vsub.f32 %v3160, %v3384
      %v3513 = vsub.f32 %v3161, %v3385
      %v3514 = vsub.f32 %v3162, %v3386
      %v3515 = vsub.f32 %v3163, %v3387
      %v3516 = vsub.f32 %v3164, %v3388
      %v3517 = vsub.f32 %v3165, %v3389
      %v3518 = vsub.f32 %v3166, %v3390
      %v3519 = vsub.f32 %v3167, %v3391
      %v3520 = vsub.f32 %v3168, %v3392
      %v3521 = vsub.f32 %v3169, %v3393
      %v3522 = vsub.f32 %v3170, %v3394
      %v3523 = vsub.f32 %v3171, %v3395
      %v3524 = vsub.f32 %v3172, %v3396
      %v3525 = vsub.f32 %v3173, %v3397
      %v3526 = vsel %vm568, %v3398, 0.0
      %v3527 = vsel %vm568, %v3402, 0.0
      %v3528 = vadd.f32 %v3526, %v3527
      %v3529 = vsel %vm568, %v3406, 0.0
      %v3530 = vadd.f32 %v3528, %v3529
      %v3531 = vsel %vm568, %v3410, 0.0
      %v3532 = vadd.f32 %v3530, %v3531
      %v3533 = vsel %vm568, %v3414, 0.0
      %v3534 = vadd.f32 %v3532, %v3533
      %v3535 = vsel %vm568, %v3418, 0.0
      %v3536 = vadd.f32 %v3534, %v3535
      %v3537 = vsel %vm568, %v3422, 0.0
      %v3538 = vadd.f32 %v3536, %v3537
      %v3539 = vsel %vm568, %v3426, 0.0
      %v3540 = vadd.f32 %v3538, %v3539
      %v3541 = vsel %vm568, %v3430, 0.0
      %v3542 = vadd.f32 %v3540, %v3541
      %v3543 = vsel %vm568, %v3434, 0.0
      %v3544 = vadd.f32 %v3542, %v3543
      %v3545 = vsel %vm568, %v3438, 0.0
      %v3546 = vadd.f32 %v3544, %v3545
      %v3547 = vsel %vm568, %v3442, 0.0
      %v3548 = vadd.f32 %v3546, %v3547
      %v3549 = vsel %vm568, %v3446, 0.0
      %v3550 = vadd.f32 %v3548, %v3549
      %v3551 = vsel %vm568, %v3450, 0.0
      %v3552 = vadd.f32 %v3550, %v3551
      %v3553 = vsel %vm568, %v3454, 0.0
      %v3554 = vadd.f32 %v3552, %v3553
      %v3555 = vsel %vm568, %v3458, 0.0
      %v3556 = vadd.f32 %v3554, %v3555
      %v3557 = vsel %vm568, %v3462, 0.0
      %v3558 = vadd.f32 %v3556, %v3557
      %v3559 = vsel %vm568, %v3466, 0.0
      %v3560 = vadd.f32 %v3558, %v3559
      %v3561 = vsel %vm568, %v3470, 0.0
      %v3562 = vadd.f32 %v3560, %v3561
      %v3563 = vsel %vm568, %v3474, 0.0
      %v3564 = vadd.f32 %v3562, %v3563
      %v3565 = vsel %vm568, %v3478, 0.0
      %v3566 = vadd.f32 %v3564, %v3565
      %v3567 = vsel %vm568, %v3482, 0.0
      %v3568 = vadd.f32 %v3566, %v3567
      %v3569 = vsel %vm568, %v3486, 0.0
      %v3570 = vadd.f32 %v3568, %v3569
      %v3571 = vsel %vm568, %v3490, 0.0
      %v3572 = vadd.f32 %v3570, %v3571
      %v3573 = vsel %vm568, %v3494, 0.0
      %v3574 = vadd.f32 %v3572, %v3573
      %v3575 = vsel %vm568, %v3498, 0.0
      %v3576 = vadd.f32 %v3574, %v3575
      %v3577 = vsel %vm568, %v3502, 0.0
      %v3578 = vadd.f32 %v3576, %v3577
      %v3579 = vsel %vm568, %v3506, 0.0
      %v3580 = vadd.f32 %v3578, %v3579
      %v3581 = vsel %vm568, %v3510, 0.0
      %v3582 = vadd.f32 %v3580, %v3581
      %v3583 = vsel %vm568, %v3514, 0.0
      %v3584 = vadd.f32 %v3582, %v3583
      %v3585 = vsel %vm568, %v3518, 0.0
      %v3586 = vadd.f32 %v3584, %v3585
      %v3587 = vsel %vm568, %v3522, 0.0
      %v3588 = vadd.f32 %v3586, %v3587
      %v3589 = vsel %vm568, %v3399, 0.0
      %v3590 = vsel %vm568, %v3403, 0.0
      %v3591 = vadd.f32 %v3589, %v3590
      %v3592 = vsel %vm568, %v3407, 0.0
      %v3593 = vadd.f32 %v3591, %v3592
      %v3594 = vsel %vm568, %v3411, 0.0
      %v3595 = vadd.f32 %v3593, %v3594
      %v3596 = vsel %vm568, %v3415, 0.0
      %v3597 = vadd.f32 %v3595, %v3596
      %v3598 = vsel %vm568, %v3419, 0.0
      %v3599 = vadd.f32 %v3597, %v3598
      %v3600 = vsel %vm568, %v3423, 0.0
      %v3601 = vadd.f32 %v3599, %v3600
      %v3602 = vsel %vm568, %v3427, 0.0
      %v3603 = vadd.f32 %v3601, %v3602
      %v3604 = vsel %vm568, %v3431, 0.0
      %v3605 = vadd.f32 %v3603, %v3604
      %v3606 = vsel %vm568, %v3435, 0.0
      %v3607 = vadd.f32 %v3605, %v3606
      %v3608 = vsel %vm568, %v3439, 0.0
      %v3609 = vadd.f32 %v3607, %v3608
      %v3610 = vsel %vm568, %v3443, 0.0
      %v3611 = vadd.f32 %v3609, %v3610
      %v3612 = vsel %vm568, %v3447, 0.0
      %v3613 = vadd.f32 %v3611, %v3612
      %v3614 = vsel %vm568, %v3451, 0.0
      %v3615 = vadd.f32 %v3613, %v3614
      %v3616 = vsel %vm568, %v3455, 0.0
      %v3617 = vadd.f32 %v3615, %v3616
      %v3618 = vsel %vm568, %v3459, 0.0
      %v3619 = vadd.f32 %v3617, %v3618
      %v3620 = vsel %vm568, %v3463, 0.0
      %v3621 = vadd.f32 %v3619, %v3620
      %v3622 = vsel %vm568, %v3467, 0.0
      %v3623 = vadd.f32 %v3621, %v3622
      %v3624 = vsel %vm568, %v3471, 0.0
      %v3625 = vadd.f32 %v3623, %v3624
      %v3626 = vsel %vm568, %v3475, 0.0
      %v3627 = vadd.f32 %v3625, %v3626
      %v3628 = vsel %vm568, %v3479, 0.0
      %v3629 = vadd.f32 %v3627, %v3628
      %v3630 = vsel %vm568, %v3483, 0.0
      %v3631 = vadd.f32 %v3629, %v3630
      %v3632 = vsel %vm568, %v3487, 0.0
      %v3633 = vadd.f32 %v3631, %v3632
      %v3634 = vsel %vm568, %v3491, 0.0
      %v3635 = vadd.f32 %v3633, %v3634
      %v3636 = vsel %vm568, %v3495, 0.0
      %v3637 = vadd.f32 %v3635, %v3636
      %v3638 = vsel %vm568, %v3499, 0.0
      %v3639 = vadd.f32 %v3637, %v3638
      %v3640 = vsel %vm568, %v3503, 0.0
      %v3641 = vadd.f32 %v3639, %v3640
      %v3642 = vsel %vm568, %v3507, 0.0
      %v3643 = vadd.f32 %v3641, %v3642
      %v3644 = vsel %vm568, %v3511, 0.0
      %v3645 = vadd.f32 %v3643, %v3644
      %v3646 = vsel %vm568, %v3515, 0.0
      %v3647 = vadd.f32 %v3645, %v3646
      %v3648 = vsel %vm568, %v3519, 0.0
      %v3649 = vadd.f32 %v3647, %v3648
      %v3650 = vsel %vm568, %v3523, 0.0
      %v3651 = vadd.f32 %v3649, %v3650
      %v3652 = vsel %vm568, %v3400, 0.0
      %v3653 = vsel %vm568, %v3404, 0.0
      %v3654 = vadd.f32 %v3652, %v3653
      %v3655 = vsel %vm568, %v3408, 0.0
      %v3656 = vadd.f32 %v3654, %v3655
      %v3657 = vsel %vm568, %v3412, 0.0
      %v3658 = vadd.f32 %v3656, %v3657
      %v3659 = vsel %vm568, %v3416, 0.0
      %v3660 = vadd.f32 %v3658, %v3659
      %v3661 = vsel %vm568, %v3420, 0.0
      %v3662 = vadd.f32 %v3660, %v3661
      %v3663 = vsel %vm568, %v3424, 0.0
      %v3664 = vadd.f32 %v3662, %v3663
      %v3665 = vsel %vm568, %v3428, 0.0
      %v3666 = vadd.f32 %v3664, %v3665
      %v3667 = vsel %vm568, %v3432, 0.0
      %v3668 = vadd.f32 %v3666, %v3667
      %v3669 = vsel %vm568, %v3436, 0.0
      %v3670 = vadd.f32 %v3668, %v3669
      %v3671 = vsel %vm568, %v3440, 0.0
      %v3672 = vadd.f32 %v3670, %v3671
      %v3673 = vsel %vm568, %v3444, 0.0
      %v3674 = vadd.f32 %v3672, %v3673
      %v3675 = vsel %vm568, %v3448, 0.0
      %v3676 = vadd.f32 %v3674, %v3675
      %v3677 = vsel %vm568, %v3452, 0.0
      %v3678 = vadd.f32 %v3676, %v3677
      %v3679 = vsel %vm568, %v3456, 0.0
      %v3680 = vadd.f32 %v3678, %v3679
      %v3681 = vsel %vm568, %v3460, 0.0
      %v3682 = vadd.f32 %v3680, %v3681
      %v3683 = vsel %vm568, %v3464, 0.0
      %v3684 = vadd.f32 %v3682, %v3683
      %v3685 = vsel %vm568, %v3468, 0.0
      %v3686 = vadd.f32 %v3684, %v3685
      %v3687 = vsel %vm568, %v3472, 0.0
      %v3688 = vadd.f32 %v3686, %v3687
      %v3689 = vsel %vm568, %v3476, 0.0
      %v3690 = vadd.f32 %v3688, %v3689
      %v3691 = vsel %vm568, %v3480, 0.0
      %v3692 = vadd.f32 %v3690, %v3691
      %v3693 = vsel %vm568, %v3484, 0.0
      %v3694 = vadd.f32 %v3692, %v3693
      %v3695 = vsel %vm568, %v3488, 0.0
      %v3696 = vadd.f32 %v3694, %v3695
      %v3697 = vsel %vm568, %v3492, 0.0
      %v3698 = vadd.f32 %v3696, %v3697
      %v3699 = vsel %vm568, %v3496, 0.0
      %v3700 = vadd.f32 %v3698, %v3699
      %v3701 = vsel %vm568, %v3500, 0.0
      %v3702 = vadd.f32 %v3700, %v3701
      %v3703 = vsel %vm568, %v3504, 0.0
      %v3704 = vadd.f32 %v3702, %v3703
      %v3705 = vsel %vm568, %v3508, 0.0
      %v3706 = vadd.f32 %v3704, %v3705
      %v3707 = vsel %vm568, %v3512, 0.0
      %v3708 = vadd.f32 %v3706, %v3707
      %v3709 = vsel %vm568, %v3516, 0.0
      %v3710 = vadd.f32 %v3708, %v3709
      %v3711 = vsel %vm568, %v3520, 0.0
      %v3712 = vadd.f32 %v3710, %v3711
      %v3713 = vsel %vm568, %v3524, 0.0
      %v3714 = vadd.f32 %v3712, %v3713
      %v3715 = vsel %vm568, %v3401, 0.0
      %v3716 = vsel %vm568, %v3405, 0.0
      %v3717 = vadd.f32 %v3715, %v3716
      %v3718 = vsel %vm568, %v3409, 0.0
      %v3719 = vadd.f32 %v3717, %v3718
      %v3720 = vsel %vm568, %v3413, 0.0
      %v3721 = vadd.f32 %v3719, %v3720
      %v3722 = vsel %vm568, %v3417, 0.0
      %v3723 = vadd.f32 %v3721, %v3722
      %v3724 = vsel %vm568, %v3421, 0.0
      %v3725 = vadd.f32 %v3723, %v3724
      %v3726 = vsel %vm568, %v3425, 0.0
      %v3727 = vadd.f32 %v3725, %v3726
      %v3728 = vsel %vm568, %v3429, 0.0
      %v3729 = vadd.f32 %v3727, %v3728
      %v3730 = vsel %vm568, %v3433, 0.0
      %v3731 = vadd.f32 %v3729, %v3730
      %v3732 = vsel %vm568, %v3437, 0.0
      %v3733 = vadd.f32 %v3731, %v3732
      %v3734 = vsel %vm568, %v3441, 0.0
      %v3735 = vadd.f32 %v3733, %v3734
      %v3736 = vsel %vm568, %v3445, 0.0
      %v3737 = vadd.f32 %v3735, %v3736
      %v3738 = vsel %vm568, %v3449, 0.0
      %v3739 = vadd.f32 %v3737, %v3738
      %v3740 = vsel %vm568, %v3453, 0.0
      %v3741 = vadd.f32 %v3739, %v3740
      %v3742 = vsel %vm568, %v3457, 0.0
      %v3743 = vadd.f32 %v3741, %v3742
      %v3744 = vsel %vm568, %v3461, 0.0
      %v3745 = vadd.f32 %v3743, %v3744
      %v3746 = vsel %vm568, %v3465, 0.0
      %v3747 = vadd.f32 %v3745, %v3746
      %v3748 = vsel %vm568, %v3469, 0.0
      %v3749 = vadd.f32 %v3747, %v3748
      %v3750 = vsel %vm568, %v3473, 0.0
      %v3751 = vadd.f32 %v3749, %v3750
      %v3752 = vsel %vm568, %v3477, 0.0
      %v3753 = vadd.f32 %v3751, %v3752
      %v3754 = vsel %vm568, %v3481, 0.0
      %v3755 = vadd.f32 %v3753, %v3754
      %v3756 = vsel %vm568, %v3485, 0.0
      %v3757 = vadd.f32 %v3755, %v3756
      %v3758 = vsel %vm568, %v3489, 0.0
      %v3759 = vadd.f32 %v3757, %v3758
      %v3760 = vsel %vm568, %v3493, 0.0
      %v3761 = vadd.f32 %v3759, %v3760
      %v3762 = vsel %vm568, %v3497, 0.0
      %v3763 = vadd.f32 %v3761, %v3762
      %v3764 = vsel %vm568, %v3501, 0.0
      %v3765 = vadd.f32 %v3763, %v3764
      %v3766 = vsel %vm568, %v3505, 0.0
      %v3767 = vadd.f32 %v3765, %v3766
      %v3768 = vsel %vm568, %v3509, 0.0
      %v3769 = vadd.f32 %v3767, %v3768
      %v3770 = vsel %vm568, %v3513, 0.0
      %v3771 = vadd.f32 %v3769, %v3770
      %v3772 = vsel %vm568, %v3517, 0.0
      %v3773 = vadd.f32 %v3771, %v3772
      %v3774 = vsel %vm568, %v3521, 0.0
      %v3775 = vadd.f32 %v3773, %v3774
      %v3776 = vsel %vm568, %v3525, 0.0
      %v3777 = vadd.f32 %v3775, %v3776
      %v3778 = vmul.f32 %v2822, %v2982
      %v3779 = vmul.f32 %v2823, %v2982
      %v3780 = vmul.f32 %v2824, %v2982
      %v3781 = vmul.f32 %v2825, %v2982
      %v3782 = vmul.f32 %v2826, %v2983
      %v3783 = vmul.f32 %v2827, %v2983
      %v3784 = vmul.f32 %v2828, %v2983
      %v3785 = vmul.f32 %v2829, %v2983
      %v3786 = vmul.f32 %v2830, %v2984
      %v3787 = vmul.f32 %v2831, %v2984
      %v3788 = vmul.f32 %v2832, %v2984
      %v3789 = vmul.f32 %v2833, %v2984
      %v3790 = vmul.f32 %v2834, %v2985
      %v3791 = vmul.f32 %v2835, %v2985
      %v3792 = vmul.f32 %v2836, %v2985
      %v3793 = vmul.f32 %v2837, %v2985
      %v3794 = vmul.f32 %v2838, %v2986
      %v3795 = vmul.f32 %v2839, %v2986
      %v3796 = vmul.f32 %v2840, %v2986
      %v3797 = vmul.f32 %v2841, %v2986
      %v3798 = vmul.f32 %v2842, %v2987
      %v3799 = vmul.f32 %v2843, %v2987
      %v3800 = vmul.f32 %v2844, %v2987
      %v3801 = vmul.f32 %v2845, %v2987
      %v3802 = vmul.f32 %v2846, %v2988
      %v3803 = vmul.f32 %v2847, %v2988
      %v3804 = vmul.f32 %v2848, %v2988
      %v3805 = vmul.f32 %v2849, %v2988
      %v3806 = vmul.f32 %v2850, %v2989
      %v3807 = vmul.f32 %v2851, %v2989
      %v3808 = vmul.f32 %v2852, %v2989
      %v3809 = vmul.f32 %v2853, %v2989
      %v3810 = vmul.f32 %v2854, %v2990
      %v3811 = vmul.f32 %v2855, %v2990
      %v3812 = vmul.f32 %v2856, %v2990
      %v3813 = vmul.f32 %v2857, %v2990
      %v3814 = vmul.f32 %v2858, %v2991
      %v3815 = vmul.f32 %v2859, %v2991
      %v3816 = vmul.f32 %v2860, %v2991
      %v3817 = vmul.f32 %v2861, %v2991
      %v3818 = vmul.f32 %v2862, %v2992
      %v3819 = vmul.f32 %v2863, %v2992
      %v3820 = vmul.f32 %v2864, %v2992
      %v3821 = vmul.f32 %v2865, %v2992
      %v3822 = vmul.f32 %v2866, %v2993
      %v3823 = vmul.f32 %v2867, %v2993
      %v3824 = vmul.f32 %v2868, %v2993
      %v3825 = vmul.f32 %v2869, %v2993
      %v3826 = vmul.f32 %v2870, %v2994
      %v3827 = vmul.f32 %v2871, %v2994
      %v3828 = vmul.f32 %v2872, %v2994
      %v3829 = vmul.f32 %v2873, %v2994
      %v3830 = vmul.f32 %v2874, %v2995
      %v3831 = vmul.f32 %v2875, %v2995
      %v3832 = vmul.f32 %v2876, %v2995
      %v3833 = vmul.f32 %v2877, %v2995
      %v3834 = vmul.f32 %v2878, %v2996
      %v3835 = vmul.f32 %v2879, %v2996
      %v3836 = vmul.f32 %v2880, %v2996
      %v3837 = vmul.f32 %v2881, %v2996
      %v3838 = vmul.f32 %v2882, %v2997
      %v3839 = vmul.f32 %v2883, %v2997
      %v3840 = vmul.f32 %v2884, %v2997
      %v3841 = vmul.f32 %v2885, %v2997
      %v3842 = vmul.f32 %v2886, %v2998
      %v3843 = vmul.f32 %v2887, %v2998
      %v3844 = vmul.f32 %v2888, %v2998
      %v3845 = vmul.f32 %v2889, %v2998
      %v3846 = vmul.f32 %v2890, %v2999
      %v3847 = vmul.f32 %v2891, %v2999
      %v3848 = vmul.f32 %v2892, %v2999
      %v3849 = vmul.f32 %v2893, %v2999
      %v3850 = vmul.f32 %v2894, %v3000
      %v3851 = vmul.f32 %v2895, %v3000
      %v3852 = vmul.f32 %v2896, %v3000
      %v3853 = vmul.f32 %v2897, %v3000
      %v3854 = vmul.f32 %v2898, %v3001
      %v3855 = vmul.f32 %v2899, %v3001
      %v3856 = vmul.f32 %v2900, %v3001
      %v3857 = vmul.f32 %v2901, %v3001
      %v3858 = vmul.f32 %v2902, %v3002
      %v3859 = vmul.f32 %v2903, %v3002
      %v3860 = vmul.f32 %v2904, %v3002
      %v3861 = vmul.f32 %v2905, %v3002
      %v3862 = vmul.f32 %v2906, %v3003
      %v3863 = vmul.f32 %v2907, %v3003
      %v3864 = vmul.f32 %v2908, %v3003
      %v3865 = vmul.f32 %v2909, %v3003
      %v3866 = vmul.f32 %v2910, %v3004
      %v3867 = vmul.f32 %v2911, %v3004
      %v3868 = vmul.f32 %v2912, %v3004
      %v3869 = vmul.f32 %v2913, %v3004
      %v3870 = vmul.f32 %v2914, %v3005
      %v3871 = vmul.f32 %v2915, %v3005
      %v3872 = vmul.f32 %v2916, %v3005
      %v3873 = vmul.f32 %v2917, %v3005
      %v3874 = vmul.f32 %v2918, %v3006
      %v3875 = vmul.f32 %v2919, %v3006
      %v3876 = vmul.f32 %v2920, %v3006
      %v3877 = vmul.f32 %v2921, %v3006
      %v3878 = vmul.f32 %v2922, %v3007
      %v3879 = vmul.f32 %v2923, %v3007
      %v3880 = vmul.f32 %v2924, %v3007
      %v3881 = vmul.f32 %v2925, %v3007
      %v3882 = vmul.f32 %v2926, %v3008
      %v3883 = vmul.f32 %v2927, %v3008
      %v3884 = vmul.f32 %v2928, %v3008
      %v3885 = vmul.f32 %v2929, %v3008
      %v3886 = vmul.f32 %v2930, %v3009
      %v3887 = vmul.f32 %v2931, %v3009
      %v3888 = vmul.f32 %v2932, %v3009
      %v3889 = vmul.f32 %v2933, %v3009
      %v3890 = vmul.f32 %v2934, %v3010
      %v3891 = vmul.f32 %v2935, %v3010
      %v3892 = vmul.f32 %v2936, %v3010
      %v3893 = vmul.f32 %v2937, %v3010
      %v3894 = vmul.f32 %v2938, %v3011
      %v3895 = vmul.f32 %v2939, %v3011
      %v3896 = vmul.f32 %v2940, %v3011
      %v3897 = vmul.f32 %v2941, %v3011
      %v3898 = vmul.f32 %v2942, %v3012
      %v3899 = vmul.f32 %v2943, %v3012
      %v3900 = vmul.f32 %v2944, %v3012
      %v3901 = vmul.f32 %v2945, %v3012
      %v3902 = vmul.f32 %v2946, %v3013
      %v3903 = vmul.f32 %v2947, %v3013
      %v3904 = vmul.f32 %v2948, %v3013
      %v3905 = vmul.f32 %v2949, %v3013
      %v3906 = vmul.f32 %v2693, %v3175
      %v3907 = vmul.f32 %v2694, %v3175
      %v3908 = vmul.f32 %v2695, %v3175
      %v3909 = vmul.f32 %v2696, %v3175
      %v3910 = vmul.f32 %v2697, %v3177
      %v3911 = vmul.f32 %v2698, %v3177
      %v3912 = vmul.f32 %v2699, %v3177
      %v3913 = vmul.f32 %v2700, %v3177
      %v3914 = vmul.f32 %v2701, %v3179
      %v3915 = vmul.f32 %v2702, %v3179
      %v3916 = vmul.f32 %v2703, %v3179
      %v3917 = vmul.f32 %v2704, %v3179
      %v3918 = vmul.f32 %v2705, %v3181
      %v3919 = vmul.f32 %v2706, %v3181
      %v3920 = vmul.f32 %v2707, %v3181
      %v3921 = vmul.f32 %v2708, %v3181
      %v3922 = vmul.f32 %v2709, %v3183
      %v3923 = vmul.f32 %v2710, %v3183
      %v3924 = vmul.f32 %v2711, %v3183
      %v3925 = vmul.f32 %v2712, %v3183
      %v3926 = vmul.f32 %v2713, %v3185
      %v3927 = vmul.f32 %v2714, %v3185
      %v3928 = vmul.f32 %v2715, %v3185
      %v3929 = vmul.f32 %v2716, %v3185
      %v3930 = vmul.f32 %v2717, %v3187
      %v3931 = vmul.f32 %v2718, %v3187
      %v3932 = vmul.f32 %v2719, %v3187
      %v3933 = vmul.f32 %v2720, %v3187
      %v3934 = vmul.f32 %v2721, %v3189
      %v3935 = vmul.f32 %v2722, %v3189
      %v3936 = vmul.f32 %v2723, %v3189
      %v3937 = vmul.f32 %v2724, %v3189
      %v3938 = vmul.f32 %v2725, %v3191
      %v3939 = vmul.f32 %v2726, %v3191
      %v3940 = vmul.f32 %v2727, %v3191
      %v3941 = vmul.f32 %v2728, %v3191
      %v3942 = vmul.f32 %v2729, %v3193
      %v3943 = vmul.f32 %v2730, %v3193
      %v3944 = vmul.f32 %v2731, %v3193
      %v3945 = vmul.f32 %v2732, %v3193
      %v3946 = vmul.f32 %v2733, %v3195
      %v3947 = vmul.f32 %v2734, %v3195
      %v3948 = vmul.f32 %v2735, %v3195
      %v3949 = vmul.f32 %v2736, %v3195
      %v3950 = vmul.f32 %v2737, %v3197
      %v3951 = vmul.f32 %v2738, %v3197
      %v3952 = vmul.f32 %v2739, %v3197
      %v3953 = vmul.f32 %v2740, %v3197
      %v3954 = vmul.f32 %v2741, %v3199
      %v3955 = vmul.f32 %v2742, %v3199
      %v3956 = vmul.f32 %v2743, %v3199
      %v3957 = vmul.f32 %v2744, %v3199
      %v3958 = vmul.f32 %v2745, %v3201
      %v3959 = vmul.f32 %v2746, %v3201
      %v3960 = vmul.f32 %v2747, %v3201
      %v3961 = vmul.f32 %v2748, %v3201
      %v3962 = vmul.f32 %v2749, %v3203
      %v3963 = vmul.f32 %v2750, %v3203
      %v3964 = vmul.f32 %v2751, %v3203
      %v3965 = vmul.f32 %v2752, %v3203
      %v3966 = vmul.f32 %v2753, %v3205
      %v3967 = vmul.f32 %v2754, %v3205
      %v3968 = vmul.f32 %v2755, %v3205
      %v3969 = vmul.f32 %v2756, %v3205
      %v3970 = vmul.f32 %v2757, %v3207
      %v3971 = vmul.f32 %v2758, %v3207
      %v3972 = vmul.f32 %v2759, %v3207
      %v3973 = vmul.f32 %v2760, %v3207
      %v3974 = vmul.f32 %v2761, %v3209
      %v3975 = vmul.f32 %v2762, %v3209
      %v3976 = vmul.f32 %v2763, %v3209
      %v3977 = vmul.f32 %v2764, %v3209
      %v3978 = vmul.f32 %v2765, %v3211
      %v3979 = vmul.f32 %v2766, %v3211
      %v3980 = vmul.f32 %v2767, %v3211
      %v3981 = vmul.f32 %v2768, %v3211
      %v3982 = vmul.f32 %v2769, %v3213
      %v3983 = vmul.f32 %v2770, %v3213
      %v3984 = vmul.f32 %v2771, %v3213
      %v3985 = vmul.f32 %v2772, %v3213
      %v3986 = vmul.f32 %v2773, %v3215
      %v3987 = vmul.f32 %v2774, %v3215
      %v3988 = vmul.f32 %v2775, %v3215
      %v3989 = vmul.f32 %v2776, %v3215
      %v3990 = vmul.f32 %v2777, %v3217
      %v3991 = vmul.f32 %v2778, %v3217
      %v3992 = vmul.f32 %v2779, %v3217
      %v3993 = vmul.f32 %v2780, %v3217
      %v3994 = vmul.f32 %v2781, %v3219
      %v3995 = vmul.f32 %v2782, %v3219
      %v3996 = vmul.f32 %v2783, %v3219
      %v3997 = vmul.f32 %v2784, %v3219
      %v3998 = vmul.f32 %v2785, %v3221
      %v3999 = vmul.f32 %v2786, %v3221
      %v4000 = vmul.f32 %v2787, %v3221
      %v4001 = vmul.f32 %v2788, %v3221
      %v4002 = vmul.f32 %v2789, %v3223
      %v4003 = vmul.f32 %v2790, %v3223
      %v4004 = vmul.f32 %v2791, %v3223
      %v4005 = vmul.f32 %v2792, %v3223
      %v4006 = vmul.f32 %v2793, %v3225
      %v4007 = vmul.f32 %v2794, %v3225
      %v4008 = vmul.f32 %v2795, %v3225
      %v4009 = vmul.f32 %v2796, %v3225
      %v4010 = vmul.f32 %v2797, %v3227
      %v4011 = vmul.f32 %v2798, %v3227
      %v4012 = vmul.f32 %v2799, %v3227
      %v4013 = vmul.f32 %v2800, %v3227
      %v4014 = vmul.f32 %v2801, %v3229
      %v4015 = vmul.f32 %v2802, %v3229
      %v4016 = vmul.f32 %v2803, %v3229
      %v4017 = vmul.f32 %v2804, %v3229
      %v4018 = vmul.f32 %v2805, %v3231
      %v4019 = vmul.f32 %v2806, %v3231
      %v4020 = vmul.f32 %v2807, %v3231
      %v4021 = vmul.f32 %v2808, %v3231
      %v4022 = vmul.f32 %v2809, %v3233
      %v4023 = vmul.f32 %v2810, %v3233
      %v4024 = vmul.f32 %v2811, %v3233
      %v4025 = vmul.f32 %v2812, %v3233
      %v4026 = vmul.f32 %v2813, %v3235
      %v4027 = vmul.f32 %v2814, %v3235
      %v4028 = vmul.f32 %v2815, %v3235
      %v4029 = vmul.f32 %v2816, %v3235
      %v4030 = vmul.f32 %v2817, %v3237
      %v4031 = vmul.f32 %v2818, %v3237
      %v4032 = vmul.f32 %v2819, %v3237
      %v4033 = vmul.f32 %v2820, %v3237
      %v4034 = vadd.f32 %v3778, %v3906
      %v4035 = vadd.f32 %v3779, %v3907
      %v4036 = vadd.f32 %v3780, %v3908
      %v4037 = vadd.f32 %v3781, %v3909
      %v4038 = vadd.f32 %v3782, %v3910
      %v4039 = vadd.f32 %v3783, %v3911
      %v4040 = vadd.f32 %v3784, %v3912
      %v4041 = vadd.f32 %v3785, %v3913
      %v4042 = vadd.f32 %v3786, %v3914
      %v4043 = vadd.f32 %v3787, %v3915
      %v4044 = vadd.f32 %v3788, %v3916
      %v4045 = vadd.f32 %v3789, %v3917
      %v4046 = vadd.f32 %v3790, %v3918
      %v4047 = vadd.f32 %v3791, %v3919
      %v4048 = vadd.f32 %v3792, %v3920
      %v4049 = vadd.f32 %v3793, %v3921
      %v4050 = vadd.f32 %v3794, %v3922
      %v4051 = vadd.f32 %v3795, %v3923
      %v4052 = vadd.f32 %v3796, %v3924
      %v4053 = vadd.f32 %v3797, %v3925
      %v4054 = vadd.f32 %v3798, %v3926
      %v4055 = vadd.f32 %v3799, %v3927
      %v4056 = vadd.f32 %v3800, %v3928
      %v4057 = vadd.f32 %v3801, %v3929
      %v4058 = vadd.f32 %v3802, %v3930
      %v4059 = vadd.f32 %v3803, %v3931
      %v4060 = vadd.f32 %v3804, %v3932
      %v4061 = vadd.f32 %v3805, %v3933
      %v4062 = vadd.f32 %v3806, %v3934
      %v4063 = vadd.f32 %v3807, %v3935
      %v4064 = vadd.f32 %v3808, %v3936
      %v4065 = vadd.f32 %v3809, %v3937
      %v4066 = vadd.f32 %v3810, %v3938
      %v4067 = vadd.f32 %v3811, %v3939
      %v4068 = vadd.f32 %v3812, %v3940
      %v4069 = vadd.f32 %v3813, %v3941
      %v4070 = vadd.f32 %v3814, %v3942
      %v4071 = vadd.f32 %v3815, %v3943
      %v4072 = vadd.f32 %v3816, %v3944
      %v4073 = vadd.f32 %v3817, %v3945
      %v4074 = vadd.f32 %v3818, %v3946
      %v4075 = vadd.f32 %v3819, %v3947
      %v4076 = vadd.f32 %v3820, %v3948
      %v4077 = vadd.f32 %v3821, %v3949
      %v4078 = vadd.f32 %v3822, %v3950
      %v4079 = vadd.f32 %v3823, %v3951
      %v4080 = vadd.f32 %v3824, %v3952
      %v4081 = vadd.f32 %v3825, %v3953
      %v4082 = vadd.f32 %v3826, %v3954
      %v4083 = vadd.f32 %v3827, %v3955
      %v4084 = vadd.f32 %v3828, %v3956
      %v4085 = vadd.f32 %v3829, %v3957
      %v4086 = vadd.f32 %v3830, %v3958
      %v4087 = vadd.f32 %v3831, %v3959
      %v4088 = vadd.f32 %v3832, %v3960
      %v4089 = vadd.f32 %v3833, %v3961
      %v4090 = vadd.f32 %v3834, %v3962
      %v4091 = vadd.f32 %v3835, %v3963
      %v4092 = vadd.f32 %v3836, %v3964
      %v4093 = vadd.f32 %v3837, %v3965
      %v4094 = vadd.f32 %v3838, %v3966
      %v4095 = vadd.f32 %v3839, %v3967
      %v4096 = vadd.f32 %v3840, %v3968
      %v4097 = vadd.f32 %v3841, %v3969
      %v4098 = vadd.f32 %v3842, %v3970
      %v4099 = vadd.f32 %v3843, %v3971
      %v4100 = vadd.f32 %v3844, %v3972
      %v4101 = vadd.f32 %v3845, %v3973
      %v4102 = vadd.f32 %v3846, %v3974
      %v4103 = vadd.f32 %v3847, %v3975
      %v4104 = vadd.f32 %v3848, %v3976
      %v4105 = vadd.f32 %v3849, %v3977
      %v4106 = vadd.f32 %v3850, %v3978
      %v4107 = vadd.f32 %v3851, %v3979
      %v4108 = vadd.f32 %v3852, %v3980
      %v4109 = vadd.f32 %v3853, %v3981
      %v4110 = vadd.f32 %v3854, %v3982
      %v4111 = vadd.f32 %v3855, %v3983
      %v4112 = vadd.f32 %v3856, %v3984
      %v4113 = vadd.f32 %v3857, %v3985
      %v4114 = vadd.f32 %v3858, %v3986
      %v4115 = vadd.f32 %v3859, %v3987
      %v4116 = vadd.f32 %v3860, %v3988
      %v4117 = vadd.f32 %v3861, %v3989
      %v4118 = vadd.f32 %v3862, %v3990
      %v4119 = vadd.f32 %v3863, %v3991
      %v4120 = vadd.f32 %v3864, %v3992
      %v4121 = vadd.f32 %v3865, %v3993
      %v4122 = vadd.f32 %v3866, %v3994
      %v4123 = vadd.f32 %v3867, %v3995
      %v4124 = vadd.f32 %v3868, %v3996
      %v4125 = vadd.f32 %v3869, %v3997
      %v4126 = vadd.f32 %v3870, %v3998
      %v4127 = vadd.f32 %v3871, %v3999
      %v4128 = vadd.f32 %v3872, %v4000
      %v4129 = vadd.f32 %v3873, %v4001
      %v4130 = vadd.f32 %v3874, %v4002
      %v4131 = vadd.f32 %v3875, %v4003
      %v4132 = vadd.f32 %v3876, %v4004
      %v4133 = vadd.f32 %v3877, %v4005
      %v4134 = vadd.f32 %v3878, %v4006
      %v4135 = vadd.f32 %v3879, %v4007
      %v4136 = vadd.f32 %v3880, %v4008
      %v4137 = vadd.f32 %v3881, %v4009
      %v4138 = vadd.f32 %v3882, %v4010
      %v4139 = vadd.f32 %v3883, %v4011
      %v4140 = vadd.f32 %v3884, %v4012
      %v4141 = vadd.f32 %v3885, %v4013
      %v4142 = vadd.f32 %v3886, %v4014
      %v4143 = vadd.f32 %v3887, %v4015
      %v4144 = vadd.f32 %v3888, %v4016
      %v4145 = vadd.f32 %v3889, %v4017
      %v4146 = vadd.f32 %v3890, %v4018
      %v4147 = vadd.f32 %v3891, %v4019
      %v4148 = vadd.f32 %v3892, %v4020
      %v4149 = vadd.f32 %v3893, %v4021
      %v4150 = vadd.f32 %v3894, %v4022
      %v4151 = vadd.f32 %v3895, %v4023
      %v4152 = vadd.f32 %v3896, %v4024
      %v4153 = vadd.f32 %v3897, %v4025
      %v4154 = vadd.f32 %v3898, %v4026
      %v4155 = vadd.f32 %v3899, %v4027
      %v4156 = vadd.f32 %v3900, %v4028
      %v4157 = vadd.f32 %v3901, %v4029
      %v4158 = vadd.f32 %v3902, %v4030
      %v4159 = vadd.f32 %v3903, %v4031
      %v4160 = vadd.f32 %v3904, %v4032
      %v4161 = vadd.f32 %v3905, %v4033
      %v4162 = vsel %vm568, %v4034, 0.0
      %v4163 = vsel %vm568, %v4038, 0.0
      %v4164 = vadd.f32 %v4162, %v4163
      %v4165 = vsel %vm568, %v4042, 0.0
      %v4166 = vadd.f32 %v4164, %v4165
      %v4167 = vsel %vm568, %v4046, 0.0
      %v4168 = vadd.f32 %v4166, %v4167
      %v4169 = vsel %vm568, %v4050, 0.0
      %v4170 = vadd.f32 %v4168, %v4169
      %v4171 = vsel %vm568, %v4054, 0.0
      %v4172 = vadd.f32 %v4170, %v4171
      %v4173 = vsel %vm568, %v4058, 0.0
      %v4174 = vadd.f32 %v4172, %v4173
      %v4175 = vsel %vm568, %v4062, 0.0
      %v4176 = vadd.f32 %v4174, %v4175
      %v4177 = vsel %vm568, %v4066, 0.0
      %v4178 = vadd.f32 %v4176, %v4177
      %v4179 = vsel %vm568, %v4070, 0.0
      %v4180 = vadd.f32 %v4178, %v4179
      %v4181 = vsel %vm568, %v4074, 0.0
      %v4182 = vadd.f32 %v4180, %v4181
      %v4183 = vsel %vm568, %v4078, 0.0
      %v4184 = vadd.f32 %v4182, %v4183
      %v4185 = vsel %vm568, %v4082, 0.0
      %v4186 = vadd.f32 %v4184, %v4185
      %v4187 = vsel %vm568, %v4086, 0.0
      %v4188 = vadd.f32 %v4186, %v4187
      %v4189 = vsel %vm568, %v4090, 0.0
      %v4190 = vadd.f32 %v4188, %v4189
      %v4191 = vsel %vm568, %v4094, 0.0
      %v4192 = vadd.f32 %v4190, %v4191
      %v4193 = vsel %vm568, %v4098, 0.0
      %v4194 = vadd.f32 %v4192, %v4193
      %v4195 = vsel %vm568, %v4102, 0.0
      %v4196 = vadd.f32 %v4194, %v4195
      %v4197 = vsel %vm568, %v4106, 0.0
      %v4198 = vadd.f32 %v4196, %v4197
      %v4199 = vsel %vm568, %v4110, 0.0
      %v4200 = vadd.f32 %v4198, %v4199
      %v4201 = vsel %vm568, %v4114, 0.0
      %v4202 = vadd.f32 %v4200, %v4201
      %v4203 = vsel %vm568, %v4118, 0.0
      %v4204 = vadd.f32 %v4202, %v4203
      %v4205 = vsel %vm568, %v4122, 0.0
      %v4206 = vadd.f32 %v4204, %v4205
      %v4207 = vsel %vm568, %v4126, 0.0
      %v4208 = vadd.f32 %v4206, %v4207
      %v4209 = vsel %vm568, %v4130, 0.0
      %v4210 = vadd.f32 %v4208, %v4209
      %v4211 = vsel %vm568, %v4134, 0.0
      %v4212 = vadd.f32 %v4210, %v4211
      %v4213 = vsel %vm568, %v4138, 0.0
      %v4214 = vadd.f32 %v4212, %v4213
      %v4215 = vsel %vm568, %v4142, 0.0
      %v4216 = vadd.f32 %v4214, %v4215
      %v4217 = vsel %vm568, %v4146, 0.0
      %v4218 = vadd.f32 %v4216, %v4217
      %v4219 = vsel %vm568, %v4150, 0.0
      %v4220 = vadd.f32 %v4218, %v4219
      %v4221 = vsel %vm568, %v4154, 0.0
      %v4222 = vadd.f32 %v4220, %v4221
      %v4223 = vsel %vm568, %v4158, 0.0
      %v4224 = vadd.f32 %v4222, %v4223
      %v4225 = vsel %vm568, %v4035, 0.0
      %v4226 = vsel %vm568, %v4039, 0.0
      %v4227 = vadd.f32 %v4225, %v4226
      %v4228 = vsel %vm568, %v4043, 0.0
      %v4229 = vadd.f32 %v4227, %v4228
      %v4230 = vsel %vm568, %v4047, 0.0
      %v4231 = vadd.f32 %v4229, %v4230
      %v4232 = vsel %vm568, %v4051, 0.0
      %v4233 = vadd.f32 %v4231, %v4232
      %v4234 = vsel %vm568, %v4055, 0.0
      %v4235 = vadd.f32 %v4233, %v4234
      %v4236 = vsel %vm568, %v4059, 0.0
      %v4237 = vadd.f32 %v4235, %v4236
      %v4238 = vsel %vm568, %v4063, 0.0
      %v4239 = vadd.f32 %v4237, %v4238
      %v4240 = vsel %vm568, %v4067, 0.0
      %v4241 = vadd.f32 %v4239, %v4240
      %v4242 = vsel %vm568, %v4071, 0.0
      %v4243 = vadd.f32 %v4241, %v4242
      %v4244 = vsel %vm568, %v4075, 0.0
      %v4245 = vadd.f32 %v4243, %v4244
      %v4246 = vsel %vm568, %v4079, 0.0
      %v4247 = vadd.f32 %v4245, %v4246
      %v4248 = vsel %vm568, %v4083, 0.0
      %v4249 = vadd.f32 %v4247, %v4248
      %v4250 = vsel %vm568, %v4087, 0.0
      %v4251 = vadd.f32 %v4249, %v4250
      %v4252 = vsel %vm568, %v4091, 0.0
      %v4253 = vadd.f32 %v4251, %v4252
      %v4254 = vsel %vm568, %v4095, 0.0
      %v4255 = vadd.f32 %v4253, %v4254
      %v4256 = vsel %vm568, %v4099, 0.0
      %v4257 = vadd.f32 %v4255, %v4256
      %v4258 = vsel %vm568, %v4103, 0.0
      %v4259 = vadd.f32 %v4257, %v4258
      %v4260 = vsel %vm568, %v4107, 0.0
      %v4261 = vadd.f32 %v4259, %v4260
      %v4262 = vsel %vm568, %v4111, 0.0
      %v4263 = vadd.f32 %v4261, %v4262
      %v4264 = vsel %vm568, %v4115, 0.0
      %v4265 = vadd.f32 %v4263, %v4264
      %v4266 = vsel %vm568, %v4119, 0.0
      %v4267 = vadd.f32 %v4265, %v4266
      %v4268 = vsel %vm568, %v4123, 0.0
      %v4269 = vadd.f32 %v4267, %v4268
      %v4270 = vsel %vm568, %v4127, 0.0
      %v4271 = vadd.f32 %v4269, %v4270
      %v4272 = vsel %vm568, %v4131, 0.0
      %v4273 = vadd.f32 %v4271, %v4272
      %v4274 = vsel %vm568, %v4135, 0.0
      %v4275 = vadd.f32 %v4273, %v4274
      %v4276 = vsel %vm568, %v4139, 0.0
      %v4277 = vadd.f32 %v4275, %v4276
      %v4278 = vsel %vm568, %v4143, 0.0
      %v4279 = vadd.f32 %v4277, %v4278
      %v4280 = vsel %vm568, %v4147, 0.0
      %v4281 = vadd.f32 %v4279, %v4280
      %v4282 = vsel %vm568, %v4151, 0.0
      %v4283 = vadd.f32 %v4281, %v4282
      %v4284 = vsel %vm568, %v4155, 0.0
      %v4285 = vadd.f32 %v4283, %v4284
      %v4286 = vsel %vm568, %v4159, 0.0
      %v4287 = vadd.f32 %v4285, %v4286
      %v4288 = vsel %vm568, %v4036, 0.0
      %v4289 = vsel %vm568, %v4040, 0.0
      %v4290 = vadd.f32 %v4288, %v4289
      %v4291 = vsel %vm568, %v4044, 0.0
      %v4292 = vadd.f32 %v4290, %v4291
      %v4293 = vsel %vm568, %v4048, 0.0
      %v4294 = vadd.f32 %v4292, %v4293
      %v4295 = vsel %vm568, %v4052, 0.0
      %v4296 = vadd.f32 %v4294, %v4295
      %v4297 = vsel %vm568, %v4056, 0.0
      %v4298 = vadd.f32 %v4296, %v4297
      %v4299 = vsel %vm568, %v4060, 0.0
      %v4300 = vadd.f32 %v4298, %v4299
      %v4301 = vsel %vm568, %v4064, 0.0
      %v4302 = vadd.f32 %v4300, %v4301
      %v4303 = vsel %vm568, %v4068, 0.0
      %v4304 = vadd.f32 %v4302, %v4303
      %v4305 = vsel %vm568, %v4072, 0.0
      %v4306 = vadd.f32 %v4304, %v4305
      %v4307 = vsel %vm568, %v4076, 0.0
      %v4308 = vadd.f32 %v4306, %v4307
      %v4309 = vsel %vm568, %v4080, 0.0
      %v4310 = vadd.f32 %v4308, %v4309
      %v4311 = vsel %vm568, %v4084, 0.0
      %v4312 = vadd.f32 %v4310, %v4311
      %v4313 = vsel %vm568, %v4088, 0.0
      %v4314 = vadd.f32 %v4312, %v4313
      %v4315 = vsel %vm568, %v4092, 0.0
      %v4316 = vadd.f32 %v4314, %v4315
      %v4317 = vsel %vm568, %v4096, 0.0
      %v4318 = vadd.f32 %v4316, %v4317
      %v4319 = vsel %vm568, %v4100, 0.0
      %v4320 = vadd.f32 %v4318, %v4319
      %v4321 = vsel %vm568, %v4104, 0.0
      %v4322 = vadd.f32 %v4320, %v4321
      %v4323 = vsel %vm568, %v4108, 0.0
      %v4324 = vadd.f32 %v4322, %v4323
      %v4325 = vsel %vm568, %v4112, 0.0
      %v4326 = vadd.f32 %v4324, %v4325
      %v4327 = vsel %vm568, %v4116, 0.0
      %v4328 = vadd.f32 %v4326, %v4327
      %v4329 = vsel %vm568, %v4120, 0.0
      %v4330 = vadd.f32 %v4328, %v4329
      %v4331 = vsel %vm568, %v4124, 0.0
      %v4332 = vadd.f32 %v4330, %v4331
      %v4333 = vsel %vm568, %v4128, 0.0
      %v4334 = vadd.f32 %v4332, %v4333
      %v4335 = vsel %vm568, %v4132, 0.0
      %v4336 = vadd.f32 %v4334, %v4335
      %v4337 = vsel %vm568, %v4136, 0.0
      %v4338 = vadd.f32 %v4336, %v4337
      %v4339 = vsel %vm568, %v4140, 0.0
      %v4340 = vadd.f32 %v4338, %v4339
      %v4341 = vsel %vm568, %v4144, 0.0
      %v4342 = vadd.f32 %v4340, %v4341
      %v4343 = vsel %vm568, %v4148, 0.0
      %v4344 = vadd.f32 %v4342, %v4343
      %v4345 = vsel %vm568, %v4152, 0.0
      %v4346 = vadd.f32 %v4344, %v4345
      %v4347 = vsel %vm568, %v4156, 0.0
      %v4348 = vadd.f32 %v4346, %v4347
      %v4349 = vsel %vm568, %v4160, 0.0
      %v4350 = vadd.f32 %v4348, %v4349
      %v4351 = vsel %vm568, %v4037, 0.0
      %v4352 = vsel %vm568, %v4041, 0.0
      %v4353 = vadd.f32 %v4351, %v4352
      %v4354 = vsel %vm568, %v4045, 0.0
      %v4355 = vadd.f32 %v4353, %v4354
      %v4356 = vsel %vm568, %v4049, 0.0
      %v4357 = vadd.f32 %v4355, %v4356
      %v4358 = vsel %vm568, %v4053, 0.0
      %v4359 = vadd.f32 %v4357, %v4358
      %v4360 = vsel %vm568, %v4057, 0.0
      %v4361 = vadd.f32 %v4359, %v4360
      %v4362 = vsel %vm568, %v4061, 0.0
      %v4363 = vadd.f32 %v4361, %v4362
      %v4364 = vsel %vm568, %v4065, 0.0
      %v4365 = vadd.f32 %v4363, %v4364
      %v4366 = vsel %vm568, %v4069, 0.0
      %v4367 = vadd.f32 %v4365, %v4366
      %v4368 = vsel %vm568, %v4073, 0.0
      %v4369 = vadd.f32 %v4367, %v4368
      %v4370 = vsel %vm568, %v4077, 0.0
      %v4371 = vadd.f32 %v4369, %v4370
      %v4372 = vsel %vm568, %v4081, 0.0
      %v4373 = vadd.f32 %v4371, %v4372
      %v4374 = vsel %vm568, %v4085, 0.0
      %v4375 = vadd.f32 %v4373, %v4374
      %v4376 = vsel %vm568, %v4089, 0.0
      %v4377 = vadd.f32 %v4375, %v4376
      %v4378 = vsel %vm568, %v4093, 0.0
      %v4379 = vadd.f32 %v4377, %v4378
      %v4380 = vsel %vm568, %v4097, 0.0
      %v4381 = vadd.f32 %v4379, %v4380
      %v4382 = vsel %vm568, %v4101, 0.0
      %v4383 = vadd.f32 %v4381, %v4382
      %v4384 = vsel %vm568, %v4105, 0.0
      %v4385 = vadd.f32 %v4383, %v4384
      %v4386 = vsel %vm568, %v4109, 0.0
      %v4387 = vadd.f32 %v4385, %v4386
      %v4388 = vsel %vm568, %v4113, 0.0
      %v4389 = vadd.f32 %v4387, %v4388
      %v4390 = vsel %vm568, %v4117, 0.0
      %v4391 = vadd.f32 %v4389, %v4390
      %v4392 = vsel %vm568, %v4121, 0.0
      %v4393 = vadd.f32 %v4391, %v4392
      %v4394 = vsel %vm568, %v4125, 0.0
      %v4395 = vadd.f32 %v4393, %v4394
      %v4396 = vsel %vm568, %v4129, 0.0
      %v4397 = vadd.f32 %v4395, %v4396
      %v4398 = vsel %vm568, %v4133, 0.0
      %v4399 = vadd.f32 %v4397, %v4398
      %v4400 = vsel %vm568, %v4137, 0.0
      %v4401 = vadd.f32 %v4399, %v4400
      %v4402 = vsel %vm568, %v4141, 0.0
      %v4403 = vadd.f32 %v4401, %v4402
      %v4404 = vsel %vm568, %v4145, 0.0
      %v4405 = vadd.f32 %v4403, %v4404
      %v4406 = vsel %vm568, %v4149, 0.0
      %v4407 = vadd.f32 %v4405, %v4406
      %v4408 = vsel %vm568, %v4153, 0.0
      %v4409 = vadd.f32 %v4407, %v4408
      %v4410 = vsel %vm568, %v4157, 0.0
      %v4411 = vadd.f32 %v4409, %v4410
      %v4412 = vsel %vm568, %v4161, 0.0
      %v4413 = vadd.f32 %v4411, %v4412
      %4418 = vrot.lane.b32.xlu0 %v4224, 8
      %v4419 = vpop.permute.xlu0 %4418
      %4420 = vrot.lane.b32.xlu0 %v4287, 8
      %v4421 = vpop.permute.xlu0 %4420
      %4422 = vrot.lane.b32.xlu0 %v4350, 8
      %v4423 = vpop.permute.xlu0 %4422
      %4424 = vrot.lane.b32.xlu0 %v4413, 8
      %v4425 = vpop.permute.xlu0 %4424
      %v4430 = vsel %vm568, %v3588, %v4419
      %v4431 = vsel %vm568, %v3651, %v4421
      %v4432 = vsel %vm568, %v3714, %v4423
      %v4433 = vsel %vm568, %v3777, %v4425
      %v4434 = vpack.c.bf16 %v4431, %v4430
      %v4435 = vpack.c.bf16 %v4433, %v4432
      %s4436 = scalar_lea.vmem %s9, 16
      %v4437 = vld [vmem:[%s4436] sm:$0xf]
      %v4438 = vld [vmem:[%s4436 + $0x4] sm:$0xf]
      %v4439 = vld [vmem:[%s4436 + $0x8] sm:$0xf]
      %v4440 = vld [vmem:[%s4436 + $0xc] sm:$0xf]
      %s4441 = scalar_lea.vmem %s10, 32
      %v4442 = vld [vmem:[%s4441] sm:$0xff]
      %v4443 = vld [vmem:[%s4441 + $0x8] sm:$0xff]
      %v4444 = vld [vmem:[%s4441 + $0x10] sm:$0xff]
      %v4445 = vld [vmem:[%s4441 + $0x18] sm:$0xff]
      %4447 = vset.pattern.permute.xlu0 0
      %4448 = vperm.xlu0 %4447, %v4442
      %v4449 = vpop.permute.xlu0 %4448
      %4452 = vset.pattern.permute.xlu0 0
      %4453 = vperm.xlu0 %4452, %v4443
      %v4454 = vpop.permute.xlu0 %4453
      %4457 = vset.pattern.permute.xlu0 0
      %4458 = vperm.xlu0 %4457, %v4444
      %v4459 = vpop.permute.xlu0 %4458
      %4462 = vset.pattern.permute.xlu0 0
      %4463 = vperm.xlu0 %4462, %v4445
      %v4464 = vpop.permute.xlu0 %4463
      %v4470 = vunpack.c.l.b16 %v4437
      %v4471 = vunpack.c.l.b16 %v4438
      %v4472 = vunpack.c.l.b16 %v4439
      %v4473 = vunpack.c.l.b16 %v4440
      %v4474 = vpack.c.b16 %v4471, %v4470
      %v4475 = vpack.c.b16 %v4473, %v4472
      %v4477 = vsel %vm2572, %v4474, 0
      %v4480 = vsel %vm2572, %v4475, 0
      %4482 = vmatpush.bf16.msra.mxu0 0
      %4483 = vmatpush.bf16.msra.mxu0 0
      %4484 = vmatpush.bf16.msra.mxu0 0
      %4485 = vmatpush.bf16.msra.mxu0 0
      %4486 = vmatpush.bf16.msra.mxu0 0
      %4487 = vmatpush.bf16.msra.mxu0 0
      %4488 = vmatpush.bf16.msra.mxu0 %v2666
      %4489 = vmatpush.bf16.msra.mxu0 %v2665
      %4490 = vmatmul.bf16.gmra.mxu0 %v4477
      %v4491 = vpop.f32.mrf.mxu0
      %v4492 = vadd.f32 %v4449, %v4491
      %v4493 = vpop.f32.mrf.mxu0
      %v4494 = vadd.f32 %v4454, %v4493
      %4495 = vmatmul.bf16.gmra.mxu0 %v4480
      %v4496 = vpop.f32.mrf.mxu0
      %v4497 = vadd.f32 %v4459, %v4496
      %v4498 = vpop.f32.mrf.mxu0
      %v4499 = vadd.f32 %v4464, %v4498
      %4500 = vdwg.mxu0
      %v4502 = vsel %vm766, %v4434, 0
      %v4505 = vsel %vm766, %v4435, 0
      %4507 = vmatpush.bf16.msra.mxu0 0
      %4508 = vmatpush.bf16.msra.mxu0 0
      %4509 = vmatpush.bf16.msra.mxu0 0
      %4510 = vmatpush.bf16.msra.mxu0 0
      %4511 = vmatpush.bf16.msra.mxu0 0
      %4512 = vmatpush.bf16.msra.mxu0 0
      %4513 = vmatpush.bf16.msra.mxu0 0
      %4514 = vmatpush.bf16.msra.mxu0 %v2602
      %4515 = vmatmul.bf16.gmra.mxu0 %v4502
      %v4516 = vpop.f32.mrf.mxu0
      %v4517 = vadd.f32 %v4492, %v4516
      %v4518 = vpop.f32.mrf.mxu0
      %v4519 = vadd.f32 %v4494, %v4518
      %4520 = vmatmul.bf16.gmra.mxu0 %v4505
      %v4521 = vpop.f32.mrf.mxu0
      %v4522 = vadd.f32 %v4497, %v4521
      %v4523 = vpop.f32.mrf.mxu0
      %v4524 = vadd.f32 %v4499, %v4523
      %4525 = vdwg.mxu0
      %v4526 = vld [vmem:[%s11] sm:$0xf]
      %v4527 = vld [vmem:[%s11 + $0x4] sm:$0xf]
      %v4528 = vld [vmem:[%s11 + $0x8] sm:$0xf]
      %v4529 = vld [vmem:[%s11 + $0xc] sm:$0xf]
      %v4530 = vld [vmem:[%s11 + $0x10] sm:$0xf]
      %v4531 = vld [vmem:[%s11 + $0x14] sm:$0xf]
      %v4532 = vld [vmem:[%s11 + $0x18] sm:$0xf]
      %v4533 = vld [vmem:[%s11 + $0x1c] sm:$0xf]
      %v4534 = vpack.c.bf16 %v4519, %v4517
      %v4535 = vpack.c.bf16 %v4524, %v4522
      %v4536 = vld [vmem:[%s12] sm:$0xff]
      %v4537 = vld [vmem:[%s12 + $0x8] sm:$0xff]
      %v4538 = vld [vmem:[%s12 + $0x10] sm:$0xff]
      %v4539 = vld [vmem:[%s12 + $0x18] sm:$0xff]
      %v4540 = vld [vmem:[%s12 + $0x20] sm:$0xff]
      %v4541 = vld [vmem:[%s12 + $0x28] sm:$0xff]
      %v4542 = vld [vmem:[%s12 + $0x30] sm:$0xff]
      %v4543 = vld [vmem:[%s12 + $0x38] sm:$0xff]
      %4545 = vset.pattern.permute.xlu0 0
      %4546 = vperm.xlu0 %4545, %v4536
      %v4547 = vpop.permute.xlu0 %4546
      %4550 = vset.pattern.permute.xlu0 0
      %4551 = vperm.xlu0 %4550, %v4537
      %v4552 = vpop.permute.xlu0 %4551
      %4555 = vset.pattern.permute.xlu0 0
      %4556 = vperm.xlu0 %4555, %v4538
      %v4557 = vpop.permute.xlu0 %4556
      %4560 = vset.pattern.permute.xlu0 0
      %4561 = vperm.xlu0 %4560, %v4539
      %v4562 = vpop.permute.xlu0 %4561
      %4565 = vset.pattern.permute.xlu0 0
      %4566 = vperm.xlu0 %4565, %v4540
      %v4567 = vpop.permute.xlu0 %4566
      %4570 = vset.pattern.permute.xlu0 0
      %4571 = vperm.xlu0 %4570, %v4541
      %v4572 = vpop.permute.xlu0 %4571
      %4575 = vset.pattern.permute.xlu0 0
      %4576 = vperm.xlu0 %4575, %v4542
      %v4577 = vpop.permute.xlu0 %4576
      %4580 = vset.pattern.permute.xlu0 0
      %4581 = vperm.xlu0 %4580, %v4543
      %v4582 = vpop.permute.xlu0 %4581
      %v4592 = vunpack.c.l.b16 %v4526
      %v4593 = vunpack.c.l.b16 %v4527
      %v4594 = vunpack.c.l.b16 %v4528
      %v4595 = vunpack.c.l.b16 %v4529
      %v4596 = vunpack.c.l.b16 %v4530
      %v4597 = vunpack.c.l.b16 %v4531
      %v4598 = vunpack.c.l.b16 %v4532
      %v4599 = vunpack.c.l.b16 %v4533
      %v4600 = vpack.c.b16 %v4593, %v4592
      %v4601 = vpack.c.b16 %v4595, %v4594
      %v4602 = vpack.c.b16 %v4597, %v4596
      %v4603 = vpack.c.b16 %v4599, %v4598
      %v4605 = vsel %vm2572, %v4600, 0
      %v4608 = vsel %vm2572, %v4601, 0
      %v4611 = vsel %vm2572, %v4602, 0
      %v4614 = vsel %vm2572, %v4603, 0
      %4616 = vmatpush.bf16.msra.mxu0 0
      %4617 = vmatpush.bf16.msra.mxu0 0
      %4618 = vmatpush.bf16.msra.mxu0 0
      %4619 = vmatpush.bf16.msra.mxu0 0
      %4620 = vmatpush.bf16.msra.mxu0 0
      %4621 = vmatpush.bf16.msra.mxu0 0
      %4622 = vmatpush.bf16.msra.mxu0 %v4535
      %4623 = vmatpush.bf16.msra.mxu0 %v4534
      %4624 = vmatmul.bf16.gmra.mxu0 %v4605
      %v4625 = vpop.f32.mrf.mxu0
      %v4626 = vadd.f32 %v4547, %v4625
      %v4627 = vpop.f32.mrf.mxu0
      %v4628 = vadd.f32 %v4552, %v4627
      %4629 = vmatmul.bf16.gmra.mxu0 %v4608
      %v4630 = vpop.f32.mrf.mxu0
      %v4631 = vadd.f32 %v4557, %v4630
      %v4632 = vpop.f32.mrf.mxu0
      %v4633 = vadd.f32 %v4562, %v4632
      %4634 = vmatmul.bf16.gmra.mxu0 %v4611
      %v4635 = vpop.f32.mrf.mxu0
      %v4636 = vadd.f32 %v4567, %v4635
      %v4637 = vpop.f32.mrf.mxu0
      %v4638 = vadd.f32 %v4572, %v4637
      %4639 = vmatmul.bf16.gmra.mxu0 %v4614
      %v4640 = vpop.f32.mrf.mxu0
      %v4641 = vadd.f32 %v4577, %v4640
      %v4642 = vpop.f32.mrf.mxu0
      %v4643 = vadd.f32 %v4582, %v4642
      %4644 = vdwg.mxu0
      %v4645 = vmul.f32 %v4626, %v4626
      %v4646 = vmul.f32 %v4628, %v4628
      %v4647 = vmul.f32 %v4631, %v4631
      %v4648 = vmul.f32 %v4633, %v4633
      %v4649 = vmul.f32 %v4636, %v4636
      %v4650 = vmul.f32 %v4638, %v4638
      %v4651 = vmul.f32 %v4641, %v4641
      %v4652 = vmul.f32 %v4643, %v4643
      %v4653 = vmul.f32 %v4626, %v4645
      %v4654 = vmul.f32 %v4628, %v4646
      %v4655 = vmul.f32 %v4631, %v4647
      %v4656 = vmul.f32 %v4633, %v4648
      %v4657 = vmul.f32 %v4636, %v4649
      %v4658 = vmul.f32 %v4638, %v4650
      %v4659 = vmul.f32 %v4641, %v4651
      %v4660 = vmul.f32 %v4643, %v4652
      %v4661 = vmul.f32 %v4653, 0.044715
      %v4662 = vmul.f32 %v4654, 0.044715
      %v4663 = vmul.f32 %v4655, 0.044715
      %v4664 = vmul.f32 %v4656, 0.044715
      %v4665 = vmul.f32 %v4657, 0.044715
      %v4666 = vmul.f32 %v4658, 0.044715
      %v4667 = vmul.f32 %v4659, 0.044715
      %v4668 = vmul.f32 %v4660, 0.044715
      %v4669 = vadd.f32 %v4626, %v4661
      %v4670 = vadd.f32 %v4628, %v4662
      %v4671 = vadd.f32 %v4631, %v4663
      %v4672 = vadd.f32 %v4633, %v4664
      %v4673 = vadd.f32 %v4636, %v4665
      %v4674 = vadd.f32 %v4638, %v4666
      %v4675 = vadd.f32 %v4641, %v4667
      %v4676 = vadd.f32 %v4643, %v4668
      %v4677 = vmul.f32 %v4669, 0.7978846
      %v4678 = vmul.f32 %v4670, 0.7978846
      %v4679 = vmul.f32 %v4671, 0.7978846
      %v4680 = vmul.f32 %v4672, 0.7978846
      %v4681 = vmul.f32 %v4673, 0.7978846
      %v4682 = vmul.f32 %v4674, 0.7978846
      %v4683 = vmul.f32 %v4675, 0.7978846
      %v4684 = vmul.f32 %v4676, 0.7978846
      %v4685 = vtanh.pop %v4677
      %v4686 = vtanh.pop %v4678
      %v4687 = vtanh.pop %v4679
      %v4688 = vtanh.pop %v4680
      %v4689 = vtanh.pop %v4681
      %v4690 = vtanh.pop %v4682
      %v4691 = vtanh.pop %v4683
      %v4692 = vtanh.pop %v4684
      %v4693 = vadd.f32 %v4685, 1.0
      %v4694 = vadd.f32 %v4686, 1.0
      %v4695 = vadd.f32 %v4687, 1.0
      %v4696 = vadd.f32 %v4688, 1.0
      %v4697 = vadd.f32 %v4689, 1.0
      %v4698 = vadd.f32 %v4690, 1.0
      %v4699 = vadd.f32 %v4691, 1.0
      %v4700 = vadd.f32 %v4692, 1.0
      %v4701 = vmul.f32 %v4693, 0.5
      %v4702 = vmul.f32 %v4694, 0.5
      %v4703 = vmul.f32 %v4695, 0.5
      %v4704 = vmul.f32 %v4696, 0.5
      %v4705 = vmul.f32 %v4697, 0.5
      %v4706 = vmul.f32 %v4698, 0.5
      %v4707 = vmul.f32 %v4699, 0.5
      %v4708 = vmul.f32 %v4700, 0.5
      %v4709 = vmul.f32 %v4626, %v4701
      %v4710 = vmul.f32 %v4628, %v4702
      %v4711 = vmul.f32 %v4631, %v4703
      %v4712 = vmul.f32 %v4633, %v4704
      %v4713 = vmul.f32 %v4636, %v4705
      %v4714 = vmul.f32 %v4638, %v4706
      %v4715 = vmul.f32 %v4641, %v4707
      %v4716 = vmul.f32 %v4643, %v4708
      %v4717 = vld [vmem:[%s13] sm:$0xf]
      %v4718 = vpack.c.bf16 %v4710, %v4709
      %v4719 = vpack.c.bf16 %v4712, %v4711
      %v4720 = vpack.c.bf16 %v4714, %v4713
      %v4721 = vpack.c.bf16 %v4716, %v4715
      %v4722 = vld [vmem:[%s14] sm:$0xff]
      %4724 = vset.pattern.permute.xlu0 0
      %4725 = vperm.xlu0 %4724, %v4722
      %v4726 = vpop.permute.xlu0 %4725
      %v4729 = vsel %vm728, %v4717, 0
      %4731 = vmatpush.bf16.msra.mxu0 0
      %4732 = vmatpush.bf16.msra.mxu0 0
      %4733 = vmatpush.bf16.msra.mxu0 0
      %4734 = vmatpush.bf16.msra.mxu0 0
      %4735 = vmatpush.bf16.msra.mxu0 %v4721
      %4736 = vmatpush.bf16.msra.mxu0 %v4720
      %4737 = vmatpush.bf16.msra.mxu0 %v4719
      %4738 = vmatpush.bf16.msra.mxu0 %v4718
      %4739 = vmatmul.bf16.gmra.mxu0 %v4729
      %v4740 = vpop.f32.mrf.mxu0
      %v4741 = vadd.f32 %v4726, %v4740
      %v4742 = vpop.f32.mrf.mxu0
      %4743 = vdwg.mxu0
      %4744 = vst.msk [vmem:[%s489] sm:$0xff] %vm766, %v4741
      %p4745 = scmp.lt.s32.totalorder %s26, 1
      %s4746 = scalar_select %p4745, %s26, 1
      %s4747 = smul.addr %s4746, 8
      %s4748 = scalar_lea.vmem %s15, %s4747
      // Predicated region
      $region81: #{fno_projected_forward.1} parent=79 // pred_check
        %p4749 = pneg %p364
      $region82: #{fno_projected_forward.1} parent=79 // pred_check_branch
        %4751 = sbr.rel (%p4749) target = $region84
      $region83: #{fno_projected_forward.1} parent=79 // pred_region
        _
      $region84: #{fno_projected_forward.1} parent=79 // pred_fallthru
        _
    $region80: #{fno_projected_forward.1} parent=5 // pred_fallthru
      _
    %p4752 = scmp.le.s32.totalorder 2, %s21
    // Predicated region
    $region85: #{fno_projected_forward.1} parent=5 // pred_check
      %p4753 = pneg %p4752
    $region86: #{fno_projected_forward.1} parent=5 // pred_check_branch
      %4755 = sbr.rel (%p4753) target = $region88
    $region87: #{fno_projected_forward.1} parent=5 // pred_region
      %s4756 = ssub.s32 %s21, 2
      // Predicated region
      $region89: #{fno_projected_forward.1} parent=87 // pred_check
        %p4757 = pneg %p370
      $region90: #{fno_projected_forward.1} parent=87 // pred_check_branch
        %4759 = sbr.rel (%p4757) target = $region92
      $region91: #{fno_projected_forward.1} parent=87 // pred_region
        %p4760 = scmp.lt.s32.totalorder %s27, 1
        %s4761 = scalar_select %p4760, %s27, 1
        %s4762 = smul.addr %s4761, 8
        %s4763 = scalar_lea.vmem %s15, %s4762
      $region92: #{fno_projected_forward.1} parent=87 // pred_fallthru
        _
    $region88: #{fno_projected_forward.1} parent=5 // pred_fallthru
      _
  $region6: #{fno_projected_forward.1} parent=0 // loop_footer
    %s25 = sadd.s32 1, %s21
  $region7: #{fno_projected_forward.1} parent=0 // loop_footer_branch
    %20 = sbr.rel target = $region3
  $region8: #{fno_projected_forward.1} parent=0 // loop_exit
    _

</llo_original>
